<compile_context>
chip_gen: v5e
topology: v5e:2x2
jax: 0.10.0
libtpu: 0.0.40
codegen_flags: <defaults>
</compile_context>

<pallas_src>
import functools
import math

import jax
import jax.numpy as jnp
from jax import lax
from jax.experimental import pallas as pl
from jax.experimental.pallas import tpu as pltpu


def _layer_norm_f32(z, gamma, beta, eps=1e-5):
    # Single-pass variance (E[z^2] - mu^2): one pair of cross-lane reductions
    # instead of two mean passes (XLU has only 2 units on v6e/v7x).
    mu = jnp.mean(z, axis=-1, keepdims=True)
    ms = jnp.mean(z * z, axis=-1, keepdims=True)
    var = jnp.maximum(ms - mu * mu, 0.0)
    return (z - mu) * lax.rsqrt(var + eps) * gamma + beta


def _make_encoder_kernel(n_heads: int, d_head: int, d_model: int):
    D, H, dh = d_model, n_heads, d_head

    def kernel(x_ref,
               wqkv_ref, bqkv_ref, wo_ref, bo_ref,
               w1_ref, b1_ref, w2_ref, b2_ref,
               g1_ref, be1_ref, g2_ref, be2_ref,
               o_ref):
        # Batch dim is squeezed by the BlockSpec -> x_ref is a plain (S, D) tile.
        x = x_ref[...]                                   # f32
        x_bf = x.astype(jnp.bfloat16)

        # ---- fused QKV projection: single MXU pass over x -------------------
        # The softmax scale is pre-folded into the Q columns of wqkv / bqkv.
        qkv = jnp.dot(x_bf, wqkv_ref[...],
                      preferred_element_type=jnp.float32) + bqkv_ref[...]

        # ---- multi-head attention, unrolled over heads (H static & small) ---
        # Everything stays 2D: no reshape / transpose / concatenate in-kernel.
        # The output projection is fused into the loop as an accumulation so the
        # only lane-narrow tensor is the per-head (S, dh) PV intermediate.
        # TODO(synk): for many-heads / small-d_head configs consider a
        # head-batched einsum or a grid axis over heads instead of the unroll.
        attn_acc = None
        for h in range(H):
            lo = h * dh
            q_h = qkv[:, lo:lo + dh].astype(jnp.bfloat16)            # (S, dh)
            k_h = qkv[:, D + lo:D + lo + dh].astype(jnp.bfloat16)    # (S, dh)
            v_h = qkv[:, 2 * D + lo:2 * D + lo + dh].astype(jnp.bfloat16)

            # q @ k^T via dot_general contracting on the last dim of both
            # operands (MXU trans_b path; no explicit XLU transpose).
            s = jnp.einsum('qd,kd->qk', q_h, k_h,
                           preferred_element_type=jnp.float32)       # (S, S) f32
            s = s - jnp.max(s, axis=-1, keepdims=True)
            p = jnp.exp(s)
            p = p * pl.reciprocal(jnp.sum(p, axis=-1, keepdims=True), approx=True)

            ctx = jnp.dot(p.astype(jnp.bfloat16), v_h,
                          preferred_element_type=jnp.float32)        # (S, dh)
            part = jnp.dot(ctx.astype(jnp.bfloat16), wo_ref[lo:lo + dh, :],
                           preferred_element_type=jnp.float32)       # (S, D)
            attn_acc = part if attn_acc is None else attn_acc + part

        attn_out = attn_acc + bo_ref[...]

        # ---- residual + LayerNorm 1 (f32) ------------------------------------
        x1 = _layer_norm_f32(x + attn_out, g1_ref[...], be1_ref[...])

        # ---- position-wise feed-forward --------------------------------------
        h1 = jnp.dot(x1.astype(jnp.bfloat16), w1_ref[...],
                     preferred_element_type=jnp.float32) + b1_ref[...]
        h1 = jnp.maximum(h1, 0.0)
        ffn = jnp.dot(h1.astype(jnp.bfloat16), w2_ref[...],
                      preferred_element_type=jnp.float32) + b2_ref[...]

        # ---- residual + LayerNorm 2 (f32) ------------------------------------
        out = _layer_norm_f32(x1 + ffn, g2_ref[...], be2_ref[...])
        o_ref[...] = out.astype(o_ref.dtype)

    return kernel


def pack_params(params, n_heads: int):
    """One-time host-side weight packing (call at init, NOT per forward):
      * fused QKV weight with the 1/sqrt(d_head) softmax scale folded into Q,
      * all matmul weights cast to bf16 (halves DMA bytes / resident VMEM),
      * biases and LayerNorm params kept f32.
    """
    d_model = params["wq"].shape[0]
    scale = 1.0 / math.sqrt(d_model // n_heads)
    wqkv = jnp.concatenate([params["wq"] * scale, params["wk"], params["wv"]],
                           axis=1).astype(jnp.bfloat16)               # (D, 3D)
    bqkv = jnp.concatenate([params["bq"] * scale, params["bk"], params["bv"]],
                           axis=1).astype(jnp.float32)                # (1, 3D)
    return {
        "wqkv": wqkv, "bqkv": bqkv,
        "wo": params["wo"].astype(jnp.bfloat16),
        "bo": params["bo"].astype(jnp.float32),
        "w1": params["w1"].astype(jnp.bfloat16),
        "b1": params["b1"].astype(jnp.float32),
        "w2": params["w2"].astype(jnp.bfloat16),
        "b2": params["b2"].astype(jnp.float32),
        "g1": params["g1"].astype(jnp.float32),
        "be1": params["be1"].astype(jnp.float32),
        "g2": params["g2"].astype(jnp.float32),
        "be2": params["be2"].astype(jnp.float32),
    }


@functools.partial(jax.jit, static_argnames=("n_heads",))
def encoder_layer_pallas(x, packed, n_heads: int):
    """x: (B, S, D) float32; packed: output of pack_params()."""
    B, S, D = x.shape
    assert D % n_heads == 0
    d_head = D // n_heads
    d_ff = packed["w1"].shape[1]

    kernel = _make_encoder_kernel(n_heads, d_head, D)

    # Grid-invariant weights: constant index_map + single buffer (Buffered(1));
    # double-buffering them would only waste VMEM.
    def w_spec(shape):
        return pl.BlockSpec(shape, lambda b: (0, 0),
                            pipeline_mode=pl.Buffered(1))

    weight_args = [
        (packed["wqkv"], (D, 3 * D)), (packed["bqkv"], (1, 3 * D)),
        (packed["wo"], (D, D)), (packed["bo"], (1, D)),
        (packed["w1"], (D, d_ff)), (packed["b1"], (1, d_ff)),
        (packed["w2"], (d_ff, D)), (packed["b2"], (1, D)),
        (packed["g1"], (1, D)), (packed["be1"], (1, D)),
        (packed["g2"], (1, D)), (packed["be2"], (1, D)),
    ]

    # None block dim == pl.Squeezed(): kernel sees a 2D (S, D) tile per batch step.
    x_spec = pl.BlockSpec((None, S, D), lambda b: (b, 0, 0))
    out_spec = pl.BlockSpec((None, S, D), lambda b: (b, 0, 0))
    in_specs = [x_spec] + [w_spec(shape) for _, shape in weight_args]

    # Explicit scoped-VMEM budget: resident weights + f32 activations, with
    # margin.  The default scoped limit (16/32 MiB), not physical VMEM, is the
    # real ceiling for a whole-weights-resident design.
    weight_bytes = sum(int(a.size) * a.dtype.itemsize for a, _ in weight_args)
    act_bytes = 4 * (4 * S * D        # x in / out (double-buffered)
                     + 3 * S * D      # qkv
                     + 2 * S * S      # scores + probs (one head live at a time)
                     + S * d_ff       # ffn hidden
                     + 4 * S * D)     # attn / x1 / ffn / out temporaries
    vmem_limit = int(min(100 * 2**20,
                         max(16 * 2**20, 2 * (weight_bytes + act_bytes))))

    args = [x] + [a for a, _ in weight_args]
    return pl.pallas_call(
        kernel,
        out_shape=jax.ShapeDtypeStruct((B, S, D), x.dtype),
        grid_spec=pltpu.PrefetchScalarGridSpec(
            num_scalar_prefetch=0,
            grid=(B,),
            in_specs=in_specs,
            out_specs=out_spec,
        ),
        compiler_params=pltpu.CompilerParams(
            dimension_semantics=("parallel",),
            vmem_limit_bytes=vmem_limit),
    )(*args)


def init_params(key, d_model, d_ff):
    """Deterministic synthetic parameter init (shapes follow the PyTorch module)."""
    keys = jax.random.split(key, 12)
    s = 0.02
    return {
        "wq": s * jax.random.normal(keys[0], (d_model, d_model), jnp.float32),
        "bq": s * jax.random.normal(keys[1], (1, d_model), jnp.float32),
        "wk": s * jax.random.normal(keys[2], (d_model, d_model), jnp.float32),
        "bk": s * jax.random.normal(keys[3], (1, d_model), jnp.float32),
        "wv": s * jax.random.normal(keys[4], (d_model, d_model), jnp.float32),
        "bv": s * jax.random.normal(keys[5], (1, d_model), jnp.float32),
        "wo": s * jax.random.normal(keys[6], (d_model, d_model), jnp.float32),
        "bo": s * jax.random.normal(keys[7], (1, d_model), jnp.float32),
        "w1": s * jax.random.normal(keys[8], (d_model, d_ff), jnp.float32),
        "b1": s * jax.random.normal(keys[9], (1, d_ff), jnp.float32),
        "w2": s * jax.random.normal(keys[10], (d_ff, d_model), jnp.float32),
        "b2": s * jax.random.normal(keys[11], (1, d_model), jnp.float32),
        "g1": jnp.ones((1, d_model), jnp.float32),
        "be1": jnp.zeros((1, d_model), jnp.float32),
        "g2": jnp.ones((1, d_model), jnp.float32),
        "be2": jnp.zeros((1, d_model), jnp.float32),
    }


def encoder_layer_ref(x, p, n_heads):
    """Pure-JAX f32 reference (mirrors PyTorch EncoderLayer in eval mode)."""
    B, S, D = x.shape
    dh = D // n_heads

    q = x @ p["wq"] + p["bq"]
    k = x @ p["wk"] + p["bk"]
    v = x @ p["wv"] + p["bv"]

    def split(t):  # (B,S,D) -> (B,H,S,dh)
        return t.reshape(B, S, n_heads, dh).transpose(0, 2, 1, 3)

    qh, kh, vh = split(q), split(k), split(v)
    scores = jnp.einsum("bhsd,bhtd->bhst", qh, kh) / math.sqrt(dh)
    probs = jax.nn.softmax(scores, axis=-1)
    ctx = jnp.einsum("bhst,bhtd->bhsd", probs, vh)
    ctx = ctx.transpose(0, 2, 1, 3).reshape(B, S, D)
    attn = ctx @ p["wo"] + p["bo"]

    def ln(z, g, b):
        mu = jnp.mean(z, axis=-1, keepdims=True)
        var = jnp.mean((z - mu) ** 2, axis=-1, keepdims=True)
        return (z - mu) / jnp.sqrt(var + 1e-5) * g + b

    x1 = ln(x + attn, p["g1"], p["be1"])
    ffn = jnp.maximum(x1 @ p["w1"] + p["b1"], 0.0) @ p["w2"] + p["b2"]
    return ln(x1 + ffn, p["g2"], p["be2"])


if __name__ == "__main__":
    # Lane-aligned config with d_head = 128 (per review): D, d_ff multiples of
    # 128 keep every matmul N dim, every head slice and every store lane-dense.
    B, S, D, H, D_FF = 2, 128, 256, 2, 512

    key = jax.random.PRNGKey(0)
    kx, kp = jax.random.split(key)
    x = jax.random.normal(kx, (B, S, D), jnp.float32)
    params = init_params(kp, D, D_FF)

    # One-time weight packing (hoisted out of the forward pass).
    packed = pack_params(params, n_heads=H)

    out = encoder_layer_pallas(x, packed, n_heads=H)
    out = jax.block_until_ready(out)

    ref = encoder_layer_ref(x, params, H)
    assert out.shape == (B, S, D)
    err = float(jnp.max(jnp.abs(out - ref)))
    # bf16 MXU inputs (f32 accumulation) + approx reciprocal vs pure-f32 ref.
    assert err < 5e-2, err

    print("KERNEL_OK")
</pallas_src>

<mosaic_0001>
module attributes {stable_mosaic.version = 11 : i64} {
  func.func @kernel(%arg0: i32, %arg1: memref<1x128x256xf32, #tpu.memory_space<vmem>>, %arg2: memref<256x768xbf16, #tpu.memory_space<vmem>>, %arg3: memref<1x768xf32, #tpu.memory_space<vmem>>, %arg4: memref<256x256xbf16, #tpu.memory_space<vmem>>, %arg5: memref<1x256xf32, #tpu.memory_space<vmem>>, %arg6: memref<256x512xbf16, #tpu.memory_space<vmem>>, %arg7: memref<1x512xf32, #tpu.memory_space<vmem>>, %arg8: memref<512x256xbf16, #tpu.memory_space<vmem>>, %arg9: memref<1x256xf32, #tpu.memory_space<vmem>>, %arg10: memref<1x256xf32, #tpu.memory_space<vmem>>, %arg11: memref<1x256xf32, #tpu.memory_space<vmem>>, %arg12: memref<1x256xf32, #tpu.memory_space<vmem>>, %arg13: memref<1x256xf32, #tpu.memory_space<vmem>>, %arg14: memref<1x128x256xf32, #tpu.memory_space<vmem>>) attributes {dimension_semantics = [#tpu.dimension_semantics<parallel>], iteration_bounds = array<i64: 2>, scalar_prefetch = 0 : i64, scratch_operands = 0 : i64, tpu.core_type = #tpu.core_type<tc>, window_params = [{transform_indices = @transform_0, window_bounds = array<i64: 1, 128, 256>}, {pipeline_mode = #tpu.pipeline_mode<synchronous>, transform_indices = @transform_1, window_bounds = array<i64: 256, 768>}, {pipeline_mode = #tpu.pipeline_mode<synchronous>, transform_indices = @transform_2, window_bounds = array<i64: 1, 768>}, {pipeline_mode = #tpu.pipeline_mode<synchronous>, transform_indices = @transform_3, window_bounds = array<i64: 256, 256>}, {pipeline_mode = #tpu.pipeline_mode<synchronous>, transform_indices = @transform_4, window_bounds = array<i64: 1, 256>}, {pipeline_mode = #tpu.pipeline_mode<synchronous>, transform_indices = @transform_5, window_bounds = array<i64: 256, 512>}, {pipeline_mode = #tpu.pipeline_mode<synchronous>, transform_indices = @transform_6, window_bounds = array<i64: 1, 512>}, {pipeline_mode = #tpu.pipeline_mode<synchronous>, transform_indices = @transform_7, window_bounds = array<i64: 512, 256>}, {pipeline_mode = #tpu.pipeline_mode<synchronous>, transform_indices = @transform_8, window_bounds = array<i64: 1, 256>}, {pipeline_mode = #tpu.pipeline_mode<synchronous>, transform_indices = @transform_9, window_bounds = array<i64: 1, 256>}, {pipeline_mode = #tpu.pipeline_mode<synchronous>, transform_indices = @transform_10, window_bounds = array<i64: 1, 256>}, {pipeline_mode = #tpu.pipeline_mode<synchronous>, transform_indices = @transform_11, window_bounds = array<i64: 1, 256>}, {pipeline_mode = #tpu.pipeline_mode<synchronous>, transform_indices = @transform_12, window_bounds = array<i64: 1, 256>}, {transform_indices = @transform_13, window_bounds = array<i64: 1, 128, 256>}]} {
    %c0 = arith.constant 0 : index
    %c0_0 = arith.constant 0 : index
    %c0_1 = arith.constant 0 : index
    %0 = vector.load %arg1[%c0, %c0_0, %c0_1] : memref<1x128x256xf32, #tpu.memory_space<vmem>>, vector<1x128x256xf32>
    %1 = vector.shape_cast %0 : vector<1x128x256xf32> to vector<128x256xf32>
    %2 = arith.truncf %1 : vector<128x256xf32> to vector<128x256xbf16>
    %c0_2 = arith.constant 0 : index
    %c0_3 = arith.constant 0 : index
    %3 = vector.load %arg2[%c0_2, %c0_3] : memref<256x768xbf16, #tpu.memory_space<vmem>>, vector<256x768xbf16>
    %cst = arith.constant dense<0.000000e+00> : vector<128x768xf32>
    %4 = tpu.matmul %2, %3, %cst {dimension_numbers = #tpu.dot_dimension_numbers<[1], [0], [0], [1], [0, 0, 1, 1], [], []>} : vector<128x256xbf16>, vector<256x768xbf16>, vector<128x768xf32> -> vector<128x768xf32>
    %c0_4 = arith.constant 0 : index
    %c0_5 = arith.constant 0 : index
    %5 = vector.load %arg3[%c0_4, %c0_5] : memref<1x768xf32, #tpu.memory_space<vmem>>, vector<1x768xf32>
    %6 = vector.broadcast %5 : vector<1x768xf32> to vector<128x768xf32>
    %7 = arith.addf %4, %6 : vector<128x768xf32>
    %8 = vector.extract_strided_slice %7 {offsets = [0, 0], sizes = [128, 128], strides = [1, 1]} : vector<128x768xf32> to vector<128x128xf32>
    %9 = arith.truncf %8 : vector<128x128xf32> to vector<128x128xbf16>
    %10 = vector.extract_strided_slice %7 {offsets = [0, 256], sizes = [128, 128], strides = [1, 1]} : vector<128x768xf32> to vector<128x128xf32>
    %11 = arith.truncf %10 : vector<128x128xf32> to vector<128x128xbf16>
    %12 = vector.extract_strided_slice %7 {offsets = [0, 512], sizes = [128, 128], strides = [1, 1]} : vector<128x768xf32> to vector<128x128xf32>
    %13 = arith.truncf %12 : vector<128x128xf32> to vector<128x128xbf16>
    "tpu.trace_start"() <{level = 10 : i32, message = "qd,kd->qk"}> : () -> ()
    %cst_6 = arith.constant dense<0.000000e+00> : vector<128x128xf32>
    %14 = tpu.matmul %9, %11, %cst_6 {dimension_numbers = #tpu.dot_dimension_numbers<[1], [1], [0], [0], [0, 0, 1, 0], [], []>} : vector<128x128xbf16>, vector<128x128xbf16>, vector<128x128xf32> -> vector<128x128xf32>
    "tpu.trace_stop"() : () -> ()
    %cst_7 = arith.constant dense<0xFF800000> : vector<128xf32>
    %15 = vector.multi_reduction <maximumf>, %14, %cst_7 [1] : vector<128x128xf32> to vector<128xf32>
    %16 = vector.shape_cast %15 : vector<128xf32> to vector<128x1xf32>
    %17 = vector.broadcast %16 : vector<128x1xf32> to vector<128x128xf32>
    %18 = arith.subf %14, %17 : vector<128x128xf32>
    %19 = math.exp %18 : vector<128x128xf32>
    %cst_8 = arith.constant dense<0.000000e+00> : vector<128xf32>
    %20 = vector.multi_reduction <add>, %19, %cst_8 [1] : vector<128x128xf32> to vector<128xf32>
    %21 = vector.shape_cast %20 : vector<128xf32> to vector<128x1xf32>
    %22 = tpu.reciprocal %21 {approx = true} : vector<128x1xf32> -> vector<128x1xf32>
    %23 = vector.broadcast %22 : vector<128x1xf32> to vector<128x128xf32>
    %24 = arith.mulf %19, %23 : vector<128x128xf32>
    %25 = arith.truncf %24 : vector<128x128xf32> to vector<128x128xbf16>
    %cst_9 = arith.constant dense<0.000000e+00> : vector<128x128xf32>
    %26 = tpu.matmul %25, %13, %cst_9 {dimension_numbers = #tpu.dot_dimension_numbers<[1], [0], [0], [1], [0, 0, 1, 1], [], []>} : vector<128x128xbf16>, vector<128x128xbf16>, vector<128x128xf32> -> vector<128x128xf32>
    %27 = arith.truncf %26 : vector<128x128xf32> to vector<128x128xbf16>
    %c0_10 = arith.constant 0 : index
    %c0_11 = arith.constant 0 : index
    %28 = vector.load %arg4[%c0_10, %c0_11] : memref<256x256xbf16, #tpu.memory_space<vmem>>, vector<128x256xbf16>
    %cst_12 = arith.constant dense<0.000000e+00> : vector<128x256xf32>
    %29 = tpu.matmul %27, %28, %cst_12 {dimension_numbers = #tpu.dot_dimension_numbers<[1], [0], [0], [1], [0, 0, 1, 1], [], []>} : vector<128x128xbf16>, vector<128x256xbf16>, vector<128x256xf32> -> vector<128x256xf32>
    %30 = vector.extract_strided_slice %7 {offsets = [0, 128], sizes = [128, 128], strides = [1, 1]} : vector<128x768xf32> to vector<128x128xf32>
    %31 = arith.truncf %30 : vector<128x128xf32> to vector<128x128xbf16>
    %32 = vector.extract_strided_slice %7 {offsets = [0, 384], sizes = [128, 128], strides = [1, 1]} : vector<128x768xf32> to vector<128x128xf32>
    %33 = arith.truncf %32 : vector<128x128xf32> to vector<128x128xbf16>
    %34 = vector.extract_strided_slice %7 {offsets = [0, 640], sizes = [128, 128], strides = [1, 1]} : vector<128x768xf32> to vector<128x128xf32>
    %35 = arith.truncf %34 : vector<128x128xf32> to vector<128x128xbf16>
    "tpu.trace_start"() <{level = 10 : i32, message = "qd,kd->qk"}> : () -> ()
    %cst_13 = arith.constant dense<0.000000e+00> : vector<128x128xf32>
    %36 = tpu.matmul %31, %33, %cst_13 {dimension_numbers = #tpu.dot_dimension_numbers<[1], [1], [0], [0], [0, 0, 1, 0], [], []>} : vector<128x128xbf16>, vector<128x128xbf16>, vector<128x128xf32> -> vector<128x128xf32>
    "tpu.trace_stop"() : () -> ()
    %cst_14 = arith.constant dense<0xFF800000> : vector<128xf32>
    %37 = vector.multi_reduction <maximumf>, %36, %cst_14 [1] : vector<128x128xf32> to vector<128xf32>
    %38 = vector.shape_cast %37 : vector<128xf32> to vector<128x1xf32>
    %39 = vector.broadcast %38 : vector<128x1xf32> to vector<128x128xf32>
    %40 = arith.subf %36, %39 : vector<128x128xf32>
    %41 = math.exp %40 : vector<128x128xf32>
    %cst_15 = arith.constant dense<0.000000e+00> : vector<128xf32>
    %42 = vector.multi_reduction <add>, %41, %cst_15 [1] : vector<128x128xf32> to vector<128xf32>
    %43 = vector.shape_cast %42 : vector<128xf32> to vector<128x1xf32>
    %44 = tpu.reciprocal %43 {approx = true} : vector<128x1xf32> -> vector<128x1xf32>
    %45 = vector.broadcast %44 : vector<128x1xf32> to vector<128x128xf32>
    %46 = arith.mulf %41, %45 : vector<128x128xf32>
    %47 = arith.truncf %46 : vector<128x128xf32> to vector<128x128xbf16>
    %cst_16 = arith.constant dense<0.000000e+00> : vector<128x128xf32>
    %48 = tpu.matmul %47, %35, %cst_16 {dimension_numbers = #tpu.dot_dimension_numbers<[1], [0], [0], [1], [0, 0, 1, 1], [], []>} : vector<128x128xbf16>, vector<128x128xbf16>, vector<128x128xf32> -> vector<128x128xf32>
    %49 = arith.truncf %48 : vector<128x128xf32> to vector<128x128xbf16>
    %c128 = arith.constant 128 : index
    %c0_17 = arith.constant 0 : index
    %50 = vector.load %arg4[%c128, %c0_17] : memref<256x256xbf16, #tpu.memory_space<vmem>>, vector<128x256xbf16>
    %cst_18 = arith.constant dense<0.000000e+00> : vector<128x256xf32>
    %51 = tpu.matmul %49, %50, %cst_18 {dimension_numbers = #tpu.dot_dimension_numbers<[1], [0], [0], [1], [0, 0, 1, 1], [], []>} : vector<128x128xbf16>, vector<128x256xbf16>, vector<128x256xf32> -> vector<128x256xf32>
    %52 = arith.addf %29, %51 : vector<128x256xf32>
    %c0_19 = arith.constant 0 : index
    %c0_20 = arith.constant 0 : index
    %53 = vector.load %arg5[%c0_19, %c0_20] : memref<1x256xf32, #tpu.memory_space<vmem>>, vector<1x256xf32>
    %54 = vector.broadcast %53 : vector<1x256xf32> to vector<128x256xf32>
    %55 = arith.addf %52, %54 : vector<128x256xf32>
    %56 = arith.addf %1, %55 : vector<128x256xf32>
    %c0_21 = arith.constant 0 : index
    %c0_22 = arith.constant 0 : index
    %57 = vector.load %arg10[%c0_21, %c0_22] : memref<1x256xf32, #tpu.memory_space<vmem>>, vector<1x256xf32>
    %c0_23 = arith.constant 0 : index
    %c0_24 = arith.constant 0 : index
    %58 = vector.load %arg11[%c0_23, %c0_24] : memref<1x256xf32, #tpu.memory_space<vmem>>, vector<1x256xf32>
    %cst_25 = arith.constant dense<0.000000e+00> : vector<128xf32>
    %59 = vector.multi_reduction <add>, %56, %cst_25 [1] : vector<128x256xf32> to vector<128xf32>
    %60 = vector.shape_cast %59 : vector<128xf32> to vector<128x1xf32>
    %cst_26 = arith.constant 2.560000e+02 : f32
    %61 = vector.broadcast %cst_26 : f32 to vector<128x1xf32>
    %62 = arith.divf %60, %61 : vector<128x1xf32>
    %63 = arith.mulf %56, %56 : vector<128x256xf32>
    %cst_27 = arith.constant dense<0.000000e+00> : vector<128xf32>
    %64 = vector.multi_reduction <add>, %63, %cst_27 [1] : vector<128x256xf32> to vector<128xf32>
    %65 = vector.shape_cast %64 : vector<128xf32> to vector<128x1xf32>
    %cst_28 = arith.constant 2.560000e+02 : f32
    %66 = vector.broadcast %cst_28 : f32 to vector<128x1xf32>
    %67 = arith.divf %65, %66 : vector<128x1xf32>
    %68 = arith.mulf %62, %62 : vector<128x1xf32>
    %69 = arith.subf %67, %68 : vector<128x1xf32>
    %cst_29 = arith.constant 0.000000e+00 : f32
    %70 = vector.broadcast %cst_29 : f32 to vector<128x1xf32>
    %71 = arith.maximumf %69, %70 : vector<128x1xf32>
    %72 = vector.broadcast %62 : vector<128x1xf32> to vector<128x256xf32>
    %73 = arith.subf %56, %72 : vector<128x256xf32>
    %cst_30 = arith.constant 9.99999974E-6 : f32
    %74 = vector.broadcast %cst_30 : f32 to vector<128x1xf32>
    %75 = arith.addf %71, %74 : vector<128x1xf32>
    %76 = math.rsqrt %75 : vector<128x1xf32>
    %77 = vector.broadcast %76 : vector<128x1xf32> to vector<128x256xf32>
    %78 = arith.mulf %73, %77 : vector<128x256xf32>
    %79 = vector.broadcast %57 : vector<1x256xf32> to vector<128x256xf32>
    %80 = arith.mulf %78, %79 : vector<128x256xf32>
    %81 = vector.broadcast %58 : vector<1x256xf32> to vector<128x256xf32>
    %82 = arith.addf %80, %81 : vector<128x256xf32>
    %83 = arith.truncf %82 : vector<128x256xf32> to vector<128x256xbf16>
    %c0_31 = arith.constant 0 : index
    %c0_32 = arith.constant 0 : index
    %84 = vector.load %arg6[%c0_31, %c0_32] : memref<256x512xbf16, #tpu.memory_space<vmem>>, vector<256x512xbf16>
    %cst_33 = arith.constant dense<0.000000e+00> : vector<128x512xf32>
    %85 = tpu.matmul %83, %84, %cst_33 {dimension_numbers = #tpu.dot_dimension_numbers<[1], [0], [0], [1], [0, 0, 1, 1], [], []>} : vector<128x256xbf16>, vector<256x512xbf16>, vector<128x512xf32> -> vector<128x512xf32>
    %c0_34 = arith.constant 0 : index
    %c0_35 = arith.constant 0 : index
    %86 = vector.load %arg7[%c0_34, %c0_35] : memref<1x512xf32, #tpu.memory_space<vmem>>, vector<1x512xf32>
    %87 = vector.broadcast %86 : vector<1x512xf32> to vector<128x512xf32>
    %88 = arith.addf %85, %87 : vector<128x512xf32>
    %cst_36 = arith.constant 0.000000e+00 : f32
    %89 = vector.broadcast %cst_36 : f32 to vector<128x512xf32>
    %90 = arith.maximumf %88, %89 : vector<128x512xf32>
    %91 = arith.truncf %90 : vector<128x512xf32> to vector<128x512xbf16>
    %c0_37 = arith.constant 0 : index
    %c0_38 = arith.constant 0 : index
    %92 = vector.load %arg8[%c0_37, %c0_38] : memref<512x256xbf16, #tpu.memory_space<vmem>>, vector<512x256xbf16>
    %cst_39 = arith.constant dense<0.000000e+00> : vector<128x256xf32>
    %93 = tpu.matmul %91, %92, %cst_39 {dimension_numbers = #tpu.dot_dimension_numbers<[1], [0], [0], [1], [0, 0, 1, 1], [], []>} : vector<128x512xbf16>, vector<512x256xbf16>, vector<128x256xf32> -> vector<128x256xf32>
    %c0_40 = arith.constant 0 : index
    %c0_41 = arith.constant 0 : index
    %94 = vector.load %arg9[%c0_40, %c0_41] : memref<1x256xf32, #tpu.memory_space<vmem>>, vector<1x256xf32>
    %95 = vector.broadcast %94 : vector<1x256xf32> to vector<128x256xf32>
    %96 = arith.addf %93, %95 : vector<128x256xf32>
    %97 = arith.addf %82, %96 : vector<128x256xf32>
    %c0_42 = arith.constant 0 : index
    %c0_43 = arith.constant 0 : index
    %98 = vector.load %arg12[%c0_42, %c0_43] : memref<1x256xf32, #tpu.memory_space<vmem>>, vector<1x256xf32>
    %c0_44 = arith.constant 0 : index
    %c0_45 = arith.constant 0 : index
    %99 = vector.load %arg13[%c0_44, %c0_45] : memref<1x256xf32, #tpu.memory_space<vmem>>, vector<1x256xf32>
    %cst_46 = arith.constant dense<0.000000e+00> : vector<128xf32>
    %100 = vector.multi_reduction <add>, %97, %cst_46 [1] : vector<128x256xf32> to vector<128xf32>
    %101 = vector.shape_cast %100 : vector<128xf32> to vector<128x1xf32>
    %cst_47 = arith.constant 2.560000e+02 : f32
    %102 = vector.broadcast %cst_47 : f32 to vector<128x1xf32>
    %103 = arith.divf %101, %102 : vector<128x1xf32>
    %104 = arith.mulf %97, %97 : vector<128x256xf32>
    %cst_48 = arith.constant dense<0.000000e+00> : vector<128xf32>
    %105 = vector.multi_reduction <add>, %104, %cst_48 [1] : vector<128x256xf32> to vector<128xf32>
    %106 = vector.shape_cast %105 : vector<128xf32> to vector<128x1xf32>
    %cst_49 = arith.constant 2.560000e+02 : f32
    %107 = vector.broadcast %cst_49 : f32 to vector<128x1xf32>
    %108 = arith.divf %106, %107 : vector<128x1xf32>
    %109 = arith.mulf %103, %103 : vector<128x1xf32>
    %110 = arith.subf %108, %109 : vector<128x1xf32>
    %cst_50 = arith.constant 0.000000e+00 : f32
    %111 = vector.broadcast %cst_50 : f32 to vector<128x1xf32>
    %112 = arith.maximumf %110, %111 : vector<128x1xf32>
    %113 = vector.broadcast %103 : vector<128x1xf32> to vector<128x256xf32>
    %114 = arith.subf %97, %113 : vector<128x256xf32>
    %cst_51 = arith.constant 9.99999974E-6 : f32
    %115 = vector.broadcast %cst_51 : f32 to vector<128x1xf32>
    %116 = arith.addf %112, %115 : vector<128x1xf32>
    %117 = math.rsqrt %116 : vector<128x1xf32>
    %118 = vector.broadcast %117 : vector<128x1xf32> to vector<128x256xf32>
    %119 = arith.mulf %114, %118 : vector<128x256xf32>
    %120 = vector.broadcast %98 : vector<1x256xf32> to vector<128x256xf32>
    %121 = arith.mulf %119, %120 : vector<128x256xf32>
    %122 = vector.broadcast %99 : vector<1x256xf32> to vector<128x256xf32>
    %123 = arith.addf %121, %122 : vector<128x256xf32>
    %c0_52 = arith.constant 0 : index
    %c0_53 = arith.constant 0 : index
    %c0_54 = arith.constant 0 : index
    %124 = vector.load %arg14[%c0_52, %c0_53, %c0_54] : memref<1x128x256xf32, #tpu.memory_space<vmem>>, vector<1x128x256xf32>
    %125 = vector.shape_cast %124 : vector<1x128x256xf32> to vector<128x256xf32>
    %126 = vector.shape_cast %123 : vector<128x256xf32> to vector<1x128x256xf32>
    tpu.vector_store %arg14[%c0_52, %c0_53, %c0_54], %126 {strides = array<i32>} : memref<1x128x256xf32, #tpu.memory_space<vmem>>, vector<1x128x256xf32>,
    return
  }
  func.func @transform_0(%arg0: i32) -> (i32, i32, i32) {
    %c0_i32 = arith.constant 0 : i32
    %c0_i32_0 = arith.constant 0 : i32
    %c0_i32_1 = arith.constant 0 : i32
    return %arg0, %c0_i32, %c0_i32_0 : i32, i32, i32
  }
  func.func @transform_1(%arg0: i32) -> (i32, i32) {
    %c0_i32 = arith.constant 0 : i32
    %c0_i32_0 = arith.constant 0 : i32
    %c0_i32_1 = arith.constant 0 : i32
    return %c0_i32, %c0_i32_0 : i32, i32
  }
  func.func @transform_2(%arg0: i32) -> (i32, i32) {
    %c0_i32 = arith.constant 0 : i32
    %c0_i32_0 = arith.constant 0 : i32
    %c0_i32_1 = arith.constant 0 : i32
    return %c0_i32, %c0_i32_0 : i32, i32
  }
  func.func @transform_3(%arg0: i32) -> (i32, i32) {
    %c0_i32 = arith.constant 0 : i32
    %c0_i32_0 = arith.constant 0 : i32
    %c0_i32_1 = arith.constant 0 : i32
    return %c0_i32, %c0_i32_0 : i32, i32
  }
  func.func @transform_4(%arg0: i32) -> (i32, i32) {
    %c0_i32 = arith.constant 0 : i32
    %c0_i32_0 = arith.constant 0 : i32
    %c0_i32_1 = arith.constant 0 : i32
    return %c0_i32, %c0_i32_0 : i32, i32
  }
  func.func @transform_5(%arg0: i32) -> (i32, i32) {
    %c0_i32 = arith.constant 0 : i32
    %c0_i32_0 = arith.constant 0 : i32
    %c0_i32_1 = arith.constant 0 : i32
    return %c0_i32, %c0_i32_0 : i32, i32
  }
  func.func @transform_6(%arg0: i32) -> (i32, i32) {
    %c0_i32 = arith.constant 0 : i32
    %c0_i32_0 = arith.constant 0 : i32
    %c0_i32_1 = arith.constant 0 : i32
    return %c0_i32, %c0_i32_0 : i32, i32
  }
  func.func @transform_7(%arg0: i32) -> (i32, i32) {
    %c0_i32 = arith.constant 0 : i32
    %c0_i32_0 = arith.constant 0 : i32
    %c0_i32_1 = arith.constant 0 : i32
    return %c0_i32, %c0_i32_0 : i32, i32
  }
  func.func @transform_8(%arg0: i32) -> (i32, i32) {
    %c0_i32 = arith.constant 0 : i32
    %c0_i32_0 = arith.constant 0 : i32
    %c0_i32_1 = arith.constant 0 : i32
    return %c0_i32, %c0_i32_0 : i32, i32
  }
  func.func @transform_9(%arg0: i32) -> (i32, i32) {
    %c0_i32 = arith.constant 0 : i32
    %c0_i32_0 = arith.constant 0 : i32
    %c0_i32_1 = arith.constant 0 : i32
    return %c0_i32, %c0_i32_0 : i32, i32
  }
  func.func @transform_10(%arg0: i32) -> (i32, i32) {
    %c0_i32 = arith.constant 0 : i32
    %c0_i32_0 = arith.constant 0 : i32
    %c0_i32_1 = arith.constant 0 : i32
    return %c0_i32, %c0_i32_0 : i32, i32
  }
  func.func @transform_11(%arg0: i32) -> (i32, i32) {
    %c0_i32 = arith.constant 0 : i32
    %c0_i32_0 = arith.constant 0 : i32
    %c0_i32_1 = arith.constant 0 : i32
    return %c0_i32, %c0_i32_0 : i32, i32
  }
  func.func @transform_12(%arg0: i32) -> (i32, i32) {
    %c0_i32 = arith.constant 0 : i32
    %c0_i32_0 = arith.constant 0 : i32
    %c0_i32_1 = arith.constant 0 : i32
    return %c0_i32, %c0_i32_0 : i32, i32
  }
  func.func @transform_13(%arg0: i32) -> (i32, i32, i32) {
    %c0_i32 = arith.constant 0 : i32
    %c0_i32_0 = arith.constant 0 : i32
    %c0_i32_1 = arith.constant 0 : i32
    return %arg0, %c0_i32, %c0_i32_0 : i32, i32, i32
  }
}

</mosaic_0001>

<llo_original>
// kernel: encoder_layer_pallas.1
$region0: #{encoder_layer_pallas.1}
  #allocation0 [shape = 'u32[]', space=smem, size = 0x4, offset = 0x4, fixed_abs, tag = 'smem constant byte address 0x4 - core index']
  #allocation1 [shape = 'u32[72,128]{1,0:T(1,128)}', space=vmem, size = 0x9000, scoped, tag = 'internal scratch']
  %s0 = inlined_call_operand.hbm [shape: f32[2,128,256], index: 0, kind: input, shape index: {}]
  %s1 = inlined_call_operand.hbm [shape: bf16[256,768], index: 1, kind: input, shape index: {}]
  %s2 = inlined_call_operand.hbm [shape: f32[1,768], index: 2, kind: input, shape index: {}]
  %s3 = inlined_call_operand.hbm [shape: bf16[256,256], index: 3, kind: input, shape index: {}]
  %s4 = inlined_call_operand.vmem [shape: f32[1,256], index: 4, kind: input, shape index: {}]
  %s5 = inlined_call_operand.hbm [shape: bf16[256,512], index: 5, kind: input, shape index: {}]
  %s6 = inlined_call_operand.hbm [shape: f32[1,512], index: 6, kind: input, shape index: {}]
  %s7 = inlined_call_operand.hbm [shape: bf16[512,256], index: 7, kind: input, shape index: {}]
  %s8 = inlined_call_operand.hbm [shape: f32[1,256], index: 8, kind: input, shape index: {}]
  %s9 = inlined_call_operand.vmem [shape: f32[1,256], index: 9, kind: input, shape index: {}]
  %s10 = inlined_call_operand.hbm [shape: f32[1,256], index: 10, kind: input, shape index: {}]
  %s11 = inlined_call_operand.vmem [shape: f32[1,256], index: 11, kind: input, shape index: {}]
  %s12 = inlined_call_operand.hbm [shape: f32[1,256], index: 12, kind: input, shape index: {}]
  %s13 = inlined_call_operand.hbm [shape: f32[2,128,256], index: 13, kind: output, shape index: {}]
  %s14 = sld [smem:[#allocation0]]
  $region125: #{encoder_layer_pallas.1} parent=0
    _
  %s16 = ssub.s32 1, %s14
  %s17 = scalar_select 0, %s16, %s14
  $region1: #{encoder_layer_pallas.1} parent=0
    #allocation2 [shape = 'u8[262144]{0}', space=vmem, size = 0x40000, scoped, tag = 'input window, operand 0']
    #allocation3 [shape = 's32[2]{0}', space=sflag, size = 0x8, scoped, tag = 'scoped memory for encoder_layer_pallas.1']
    #allocation4 [shape = 's32[2]{0}', space=sflag, size = 0x8, scoped, tag = 'scoped memory for encoder_layer_pallas.1']
    #allocation5 [shape = 'u8[393216]{0}', space=vmem, size = 0x60000, scoped, tag = 'input window, operand 1, single buffered']
    #allocation6 [shape = 's32[1]{0}', space=sflag, size = 0x4, scoped, tag = 'scoped memory for encoder_layer_pallas.1']
    #allocation7 [shape = 'u8[3072]{0}', space=vmem, size = 0xc00, scoped, tag = 'input window, operand 2, single buffered']
    #allocation8 [shape = 'u8[131072]{0}', space=vmem, size = 0x20000, scoped, tag = 'input window, operand 3, single buffered']
    #allocation9 [shape = 's32[1]{0}', space=sflag, size = 0x4, scoped, tag = 'scoped memory for encoder_layer_pallas.1']
    #allocation10 [shape = 'u8[262144]{0}', space=vmem, size = 0x40000, scoped, tag = 'input window, operand 5, single buffered']
    #allocation11 [shape = 'u8[2048]{0}', space=vmem, size = 0x800, scoped, tag = 'input window, operand 6, single buffered']
    #allocation12 [shape = 's32[1]{0}', space=sflag, size = 0x4, scoped, tag = 'scoped memory for encoder_layer_pallas.1']
    #allocation13 [shape = 'u8[262144]{0}', space=vmem, size = 0x40000, scoped, tag = 'input window, operand 7, single buffered']
    #allocation14 [shape = 'u8[1024]{0}', space=vmem, size = 0x400, scoped, tag = 'input window, operand 8, single buffered']
    #allocation15 [shape = 's32[1]{0}', space=sflag, size = 0x4, scoped, tag = 'scoped memory for encoder_layer_pallas.1']
    #allocation16 [shape = 'u8[1024]{0}', space=vmem, size = 0x400, scoped, tag = 'input window, operand 10, single buffered']
    #allocation17 [shape = 'u8[1024]{0}', space=vmem, size = 0x400, scoped, tag = 'input window, operand 12, single buffered']
    #allocation18 [shape = 's32[1]{0}', space=sflag, size = 0x4, scoped, tag = 'scoped memory for encoder_layer_pallas.1']
    #allocation19 [shape = 'u8[262144]{0}', space=vmem, size = 0x40000, scoped, tag = 'output window, operand 0']
    %18 = vsyncpa [#allocation3], 0
    %s19 = scalar_lea.sflag [#allocation3], 1
    %20 = vsyncpa %s19, 0
    %21 = vsyncpa [#allocation6], 0
    %22 = vsyncpa [#allocation9], 0
    %23 = vsyncpa [#allocation12], 0
    %24 = vsyncpa [#allocation15], 0
    %25 = vsyncpa [#allocation18], 0
    %26 = vsyncpa [#allocation4], 0
    %s27 = scalar_lea.sflag [#allocation4], 1
    %28 = vsyncpa %s27, 0
    loop: start=0, step=1, limit=4
    $region2: #{encoder_layer_pallas.1} parent=1 // loop_pre_header
      _
    $region3: #{encoder_layer_pallas.1} parent=1 // loop_header
      %s30 = sphi 0, %s34
      %p31 = scmp.ge.s32.totalorder %s30, 4
      %s40 = sphi 0, %s42
      %s43 = sphi 0, %s40
      %s44 = sphi 0, %s43
      %s60 = sphi 0, %s44
      %s64 = sphi 0, %s64
      %s66 = sphi 0, %s64
      %s67 = sphi 0, %s66
      %s81 = sphi 0, %s67
      %s85 = sphi 0, %s85
      %s87 = sphi 0, %s85
      %s88 = sphi 0, %s87
      %s102 = sphi 0, %s88
      %s106 = sphi 0, %s106
      %s108 = sphi 0, %s106
      %s109 = sphi 0, %s108
      %s123 = sphi 0, %s109
      %s127 = sphi 0, %s127
      %s129 = sphi 0, %s127
      %s130 = sphi 0, %s129
      %s144 = sphi 0, %s130
      %s148 = sphi 0, %s148
      %s150 = sphi 0, %s148
      %s151 = sphi 0, %s150
      %s165 = sphi 0, %s151
      %s169 = sphi 0, %s169
      %s171 = sphi 0, %s169
      %s172 = sphi 0, %s171
      %s186 = sphi 0, %s172
      %s190 = sphi 0, %s190
      %s192 = sphi 0, %s190
      %s193 = sphi 0, %s192
      %s207 = sphi 0, %s193
      %s211 = sphi 0, %s211
      %s213 = sphi 0, %s211
      %s214 = sphi 0, %s213
      %s228 = sphi 0, %s214
      %s232 = sphi 0, %s232
      %s234 = sphi 0, %s232
      %s235 = sphi 0, %s234
      %s249 = sphi 0, %s235
      %s253 = sphi 0, %s253
      %s255 = sphi 0, %s253
      %s256 = sphi 0, %s255
      %s270 = sphi 0, %s256
      %s274 = sphi 0, %s274
      %s276 = sphi 0, %s274
      %s277 = sphi 0, %s276
      %s291 = sphi 0, %s277
      %s295 = sphi 0, %s295
      %s297 = sphi 0, %s295
      %s298 = sphi 0, %s297
      %s312 = sphi 0, %s298
      %s318 = sphi 0, %s320
      %s321 = sphi 0, %s318
      %s322 = sphi 0, %s321
      %s338 = sphi 0, %s322
    $region4: #{encoder_layer_pallas.1} parent=1 // loop_header_branch
      %33 = sbr.rel (%p31) target = $region8
    $region5: #{encoder_layer_pallas.1} parent=1 // loop_body
      %s35 = ssub.s32 %s30, 1
      %s36 = ssub.s32 %s30, 2
      %s37 = sadd.s32 %s30, 1
      %s38 = ssub.s32 %s30, %s37
      %p39 = scmp.eq.s32.totalorder %s38, 0
      %s41 = sadd.s32 %s40, 1
      %s42 = scalar_select %p39, %s40, %s41
      %p45 = pneg %p39
      %p46 = scmp.eq.s32.totalorder %s30, 1
      %p47 = por %p45, %p46
      %p48 = scmp.ne.s32.totalorder %s40, %s43
      %p49 = scmp.eq.s32.totalorder %s30, 0
      %p50 = por %p48, %p49
      %p51 = scmp.ne.s32.totalorder %s40, %s43
      %p52 = scmp.eq.s32.totalorder %s35, 1
      %p53 = por %p51, %p52
      %p54 = scmp.ne.s32.totalorder %s43, %s44
      %p55 = scmp.eq.s32.totalorder %s35, 0
      %p56 = por %p54, %p55
      %p57 = scmp.ne.s32.totalorder %s43, %s44
      %p58 = scmp.eq.s32.totalorder %s36, 1
      %p59 = por %p57, %p58
      %p61 = scmp.ne.s32.totalorder %s44, %s60
      %p62 = scmp.eq.s32.totalorder %s36, 0
      %p63 = por %p61, %p62
      %s65 = sadd.s32 %s64, 1
      %p68 = scmp.eq.s32.totalorder %s30, 1
      %p69 = scmp.ne.s32.totalorder %s64, %s66
      %p70 = scmp.eq.s32.totalorder %s30, 0
      %p71 = por %p69, %p70
      %p72 = scmp.ne.s32.totalorder %s64, %s66
      %p73 = scmp.eq.s32.totalorder %s35, 1
      %p74 = por %p72, %p73
      %p75 = scmp.ne.s32.totalorder %s66, %s67
      %p76 = scmp.eq.s32.totalorder %s35, 0
      %p77 = por %p75, %p76
      %p78 = scmp.ne.s32.totalorder %s66, %s67
      %p79 = scmp.eq.s32.totalorder %s36, 1
      %p80 = por %p78, %p79
      %p82 = scmp.ne.s32.totalorder %s67, %s81
      %p83 = scmp.eq.s32.totalorder %s36, 0
      %p84 = por %p82, %p83
      %s86 = sadd.s32 %s85, 1
      %p89 = scmp.eq.s32.totalorder %s30, 1
      %p90 = scmp.ne.s32.totalorder %s85, %s87
      %p91 = scmp.eq.s32.totalorder %s30, 0
      %p92 = por %p90, %p91
      %p93 = scmp.ne.s32.totalorder %s85, %s87
      %p94 = scmp.eq.s32.totalorder %s35, 1
      %p95 = por %p93, %p94
      %p96 = scmp.ne.s32.totalorder %s87, %s88
      %p97 = scmp.eq.s32.totalorder %s35, 0
      %p98 = por %p96, %p97
      %p99 = scmp.ne.s32.totalorder %s87, %s88
      %p100 = scmp.eq.s32.totalorder %s36, 1
      %p101 = por %p99, %p100
      %p103 = scmp.ne.s32.totalorder %s88, %s102
      %p104 = scmp.eq.s32.totalorder %s36, 0
      %p105 = por %p103, %p104
      %s107 = sadd.s32 %s106, 1
      %p110 = scmp.eq.s32.totalorder %s30, 1
      %p111 = scmp.ne.s32.totalorder %s106, %s108
      %p112 = scmp.eq.s32.totalorder %s30, 0
      %p113 = por %p111, %p112
      %p114 = scmp.ne.s32.totalorder %s106, %s108
      %p115 = scmp.eq.s32.totalorder %s35, 1
      %p116 = por %p114, %p115
      %p117 = scmp.ne.s32.totalorder %s108, %s109
      %p118 = scmp.eq.s32.totalorder %s35, 0
      %p119 = por %p117, %p118
      %p120 = scmp.ne.s32.totalorder %s108, %s109
      %p121 = scmp.eq.s32.totalorder %s36, 1
      %p122 = por %p120, %p121
      %p124 = scmp.ne.s32.totalorder %s109, %s123
      %p125 = scmp.eq.s32.totalorder %s36, 0
      %p126 = por %p124, %p125
      %s128 = sadd.s32 %s127, 1
      %p131 = scmp.eq.s32.totalorder %s30, 1
      %p132 = scmp.ne.s32.totalorder %s127, %s129
      %p133 = scmp.eq.s32.totalorder %s30, 0
      %p134 = por %p132, %p133
      %p135 = scmp.ne.s32.totalorder %s127, %s129
      %p136 = scmp.eq.s32.totalorder %s35, 1
      %p137 = por %p135, %p136
      %p138 = scmp.ne.s32.totalorder %s129, %s130
      %p139 = scmp.eq.s32.totalorder %s35, 0
      %p140 = por %p138, %p139
      %p141 = scmp.ne.s32.totalorder %s129, %s130
      %p142 = scmp.eq.s32.totalorder %s36, 1
      %p143 = por %p141, %p142
      %p145 = scmp.ne.s32.totalorder %s130, %s144
      %p146 = scmp.eq.s32.totalorder %s36, 0
      %p147 = por %p145, %p146
      %s149 = sadd.s32 %s148, 1
      %p152 = scmp.eq.s32.totalorder %s30, 1
      %p153 = scmp.ne.s32.totalorder %s148, %s150
      %p154 = scmp.eq.s32.totalorder %s30, 0
      %p155 = por %p153, %p154
      %p156 = scmp.ne.s32.totalorder %s148, %s150
      %p157 = scmp.eq.s32.totalorder %s35, 1
      %p158 = por %p156, %p157
      %p159 = scmp.ne.s32.totalorder %s150, %s151
      %p160 = scmp.eq.s32.totalorder %s35, 0
      %p161 = por %p159, %p160
      %p162 = scmp.ne.s32.totalorder %s150, %s151
      %p163 = scmp.eq.s32.totalorder %s36, 1
      %p164 = por %p162, %p163
      %p166 = scmp.ne.s32.totalorder %s151, %s165
      %p167 = scmp.eq.s32.totalorder %s36, 0
      %p168 = por %p166, %p167
      %s170 = sadd.s32 %s169, 1
      %p173 = scmp.eq.s32.totalorder %s30, 1
      %p174 = scmp.ne.s32.totalorder %s169, %s171
      %p175 = scmp.eq.s32.totalorder %s30, 0
      %p176 = por %p174, %p175
      %p177 = scmp.ne.s32.totalorder %s169, %s171
      %p178 = scmp.eq.s32.totalorder %s35, 1
      %p179 = por %p177, %p178
      %p180 = scmp.ne.s32.totalorder %s171, %s172
      %p181 = scmp.eq.s32.totalorder %s35, 0
      %p182 = por %p180, %p181
      %p183 = scmp.ne.s32.totalorder %s171, %s172
      %p184 = scmp.eq.s32.totalorder %s36, 1
      %p185 = por %p183, %p184
      %p187 = scmp.ne.s32.totalorder %s172, %s186
      %p188 = scmp.eq.s32.totalorder %s36, 0
      %p189 = por %p187, %p188
      %s191 = sadd.s32 %s190, 1
      %p194 = scmp.eq.s32.totalorder %s30, 1
      %p195 = scmp.ne.s32.totalorder %s190, %s192
      %p196 = scmp.eq.s32.totalorder %s30, 0
      %p197 = por %p195, %p196
      %p198 = scmp.ne.s32.totalorder %s190, %s192
      %p199 = scmp.eq.s32.totalorder %s35, 1
      %p200 = por %p198, %p199
      %p201 = scmp.ne.s32.totalorder %s192, %s193
      %p202 = scmp.eq.s32.totalorder %s35, 0
      %p203 = por %p201, %p202
      %p204 = scmp.ne.s32.totalorder %s192, %s193
      %p205 = scmp.eq.s32.totalorder %s36, 1
      %p206 = por %p204, %p205
      %p208 = scmp.ne.s32.totalorder %s193, %s207
      %p209 = scmp.eq.s32.totalorder %s36, 0
      %p210 = por %p208, %p209
      %s212 = sadd.s32 %s211, 1
      %p215 = scmp.eq.s32.totalorder %s30, 1
      %p216 = scmp.ne.s32.totalorder %s211, %s213
      %p217 = scmp.eq.s32.totalorder %s30, 0
      %p218 = por %p216, %p217
      %p219 = scmp.ne.s32.totalorder %s211, %s213
      %p220 = scmp.eq.s32.totalorder %s35, 1
      %p221 = por %p219, %p220
      %p222 = scmp.ne.s32.totalorder %s213, %s214
      %p223 = scmp.eq.s32.totalorder %s35, 0
      %p224 = por %p222, %p223
      %p225 = scmp.ne.s32.totalorder %s213, %s214
      %p226 = scmp.eq.s32.totalorder %s36, 1
      %p227 = por %p225, %p226
      %p229 = scmp.ne.s32.totalorder %s214, %s228
      %p230 = scmp.eq.s32.totalorder %s36, 0
      %p231 = por %p229, %p230
      %s233 = sadd.s32 %s232, 1
      %p236 = scmp.eq.s32.totalorder %s30, 1
      %p237 = scmp.ne.s32.totalorder %s232, %s234
      %p238 = scmp.eq.s32.totalorder %s30, 0
      %p239 = por %p237, %p238
      %p240 = scmp.ne.s32.totalorder %s232, %s234
      %p241 = scmp.eq.s32.totalorder %s35, 1
      %p242 = por %p240, %p241
      %p243 = scmp.ne.s32.totalorder %s234, %s235
      %p244 = scmp.eq.s32.totalorder %s35, 0
      %p245 = por %p243, %p244
      %p246 = scmp.ne.s32.totalorder %s234, %s235
      %p247 = scmp.eq.s32.totalorder %s36, 1
      %p248 = por %p246, %p247
      %p250 = scmp.ne.s32.totalorder %s235, %s249
      %p251 = scmp.eq.s32.totalorder %s36, 0
      %p252 = por %p250, %p251
      %s254 = sadd.s32 %s253, 1
      %p257 = scmp.eq.s32.totalorder %s30, 1
      %p258 = scmp.ne.s32.totalorder %s253, %s255
      %p259 = scmp.eq.s32.totalorder %s30, 0
      %p260 = por %p258, %p259
      %p261 = scmp.ne.s32.totalorder %s253, %s255
      %p262 = scmp.eq.s32.totalorder %s35, 1
      %p263 = por %p261, %p262
      %p264 = scmp.ne.s32.totalorder %s255, %s256
      %p265 = scmp.eq.s32.totalorder %s35, 0
      %p266 = por %p264, %p265
      %p267 = scmp.ne.s32.totalorder %s255, %s256
      %p268 = scmp.eq.s32.totalorder %s36, 1
      %p269 = por %p267, %p268
      %p271 = scmp.ne.s32.totalorder %s256, %s270
      %p272 = scmp.eq.s32.totalorder %s36, 0
      %p273 = por %p271, %p272
      %s275 = sadd.s32 %s274, 1
      %p278 = scmp.eq.s32.totalorder %s30, 1
      %p279 = scmp.ne.s32.totalorder %s274, %s276
      %p280 = scmp.eq.s32.totalorder %s30, 0
      %p281 = por %p279, %p280
      %p282 = scmp.ne.s32.totalorder %s274, %s276
      %p283 = scmp.eq.s32.totalorder %s35, 1
      %p284 = por %p282, %p283
      %p285 = scmp.ne.s32.totalorder %s276, %s277
      %p286 = scmp.eq.s32.totalorder %s35, 0
      %p287 = por %p285, %p286
      %p288 = scmp.ne.s32.totalorder %s276, %s277
      %p289 = scmp.eq.s32.totalorder %s36, 1
      %p290 = por %p288, %p289
      %p292 = scmp.ne.s32.totalorder %s277, %s291
      %p293 = scmp.eq.s32.totalorder %s36, 0
      %p294 = por %p292, %p293
      %s296 = sadd.s32 %s295, 1
      %p299 = scmp.eq.s32.totalorder %s30, 1
      %p300 = scmp.ne.s32.totalorder %s295, %s297
      %p301 = scmp.eq.s32.totalorder %s30, 0
      %p302 = por %p300, %p301
      %p303 = scmp.ne.s32.totalorder %s295, %s297
      %p304 = scmp.eq.s32.totalorder %s35, 1
      %p305 = por %p303, %p304
      %p306 = scmp.ne.s32.totalorder %s297, %s298
      %p307 = scmp.eq.s32.totalorder %s35, 0
      %p308 = por %p306, %p307
      %p309 = scmp.ne.s32.totalorder %s297, %s298
      %p310 = scmp.eq.s32.totalorder %s36, 1
      %p311 = por %p309, %p310
      %p313 = scmp.ne.s32.totalorder %s298, %s312
      %p314 = scmp.eq.s32.totalorder %s36, 0
      %p315 = por %p313, %p314
      %s316 = ssub.s32 %s30, %s37
      %p317 = scmp.eq.s32.totalorder %s316, 0
      %s319 = sadd.s32 %s318, 1
      %s320 = scalar_select %p317, %s318, %s319
      %p323 = pneg %p317
      %p324 = scmp.eq.s32.totalorder %s30, 1
      %p325 = por %p323, %p324
      %p326 = scmp.ne.s32.totalorder %s318, %s321
      %p327 = scmp.eq.s32.totalorder %s30, 0
      %p328 = por %p326, %p327
      %p329 = scmp.ne.s32.totalorder %s318, %s321
      %p330 = scmp.eq.s32.totalorder %s35, 1
      %p331 = por %p329, %p330
      %p332 = scmp.ne.s32.totalorder %s321, %s322
      %p333 = scmp.eq.s32.totalorder %s35, 0
      %p334 = por %p332, %p333
      %p335 = scmp.ne.s32.totalorder %s321, %s322
      %p336 = scmp.eq.s32.totalorder %s36, 1
      %p337 = por %p335, %p336
      %p339 = scmp.ne.s32.totalorder %s322, %s338
      %p340 = scmp.eq.s32.totalorder %s36, 0
      %p341 = por %p339, %p340
      %p342 = scmp.le.s32.totalorder 1, %s30
      %p343 = scmp.lt.s32.totalorder %s30, 3
      %p344 = pnand %p342, %p343
      %p345 = pneg %p344
      // Predicated region
      $region9: #{encoder_layer_pallas.1} parent=5 // pred_check
        _
      $region10: #{encoder_layer_pallas.1} parent=5 // pred_check_branch
        %347 = sbr.rel (%p344) target = $region12
      $region11: #{encoder_layer_pallas.1} parent=5 // pred_region
        %s348 = ssub.s32 %s30, 1
        // Predicated region
        $region13: #{encoder_layer_pallas.1} parent=11 // pred_check
          %p349 = pneg %p77
        $region14: #{encoder_layer_pallas.1} parent=11 // pred_check_branch
          %351 = sbr.rel (%p349) target = $region16
        $region15: #{encoder_layer_pallas.1} parent=11 // pred_region
          %353 = vsyncadd [#allocation6], 0
          %s354 = sshll.u32 %s1, 4
          %s355 = int_to_ptr.hbm [resolvable:$true] %s354
          %s356 = sshll.u32 [#allocation5], 4
          %s357 = int_to_ptr.vmem [resolvable:$true] %s356
          %362 = dma.hbm_to_vmem [thread:$0]  %s355, 12288, %s357, [#allocation6], 384, 384, 24
        $region16: #{encoder_layer_pallas.1} parent=11 // pred_fallthru
          _
        // Predicated region
        $region17: #{encoder_layer_pallas.1} parent=11 // pred_check
          %p363 = pneg %p98
        $region18: #{encoder_layer_pallas.1} parent=11 // pred_check_branch
          %365 = sbr.rel (%p363) target = $region20
        $region19: #{encoder_layer_pallas.1} parent=11 // pred_region
          %367 = vsyncadd [#allocation6], 0
          %s369 = sshll.u32 %s2, 4
          %s370 = int_to_ptr.hbm [resolvable:$true] %s369
          %s371 = sshll.u32 [#allocation7], 4
          %s372 = int_to_ptr.vmem [resolvable:$true] %s371
          %374 = dma.hbm_to_vmem [thread:$0]  %s370, 96, %s372, [#allocation6]
        $region20: #{encoder_layer_pallas.1} parent=11 // pred_fallthru
          _
        // Predicated region
        $region21: #{encoder_layer_pallas.1} parent=11 // pred_check
          %p375 = pneg %p119
        $region22: #{encoder_layer_pallas.1} parent=11 // pred_check_branch
          %377 = sbr.rel (%p375) target = $region24
        $region23: #{encoder_layer_pallas.1} parent=11 // pred_region
          %379 = vsyncadd [#allocation9], 0
          %s380 = sshll.u32 %s3, 4
          %s381 = int_to_ptr.hbm [resolvable:$true] %s380
          %s382 = sshll.u32 [#allocation8], 4
          %s383 = int_to_ptr.vmem [resolvable:$true] %s382
          %388 = dma.hbm_to_vmem [thread:$0]  %s381, 4096, %s383, [#allocation9], 128, 128, 8
        $region24: #{encoder_layer_pallas.1} parent=11 // pred_fallthru
          _
        // Predicated region
        $region25: #{encoder_layer_pallas.1} parent=11 // pred_check
          %p389 = pneg %p140
        $region26: #{encoder_layer_pallas.1} parent=11 // pred_check_branch
          %391 = sbr.rel (%p389) target = $region28
        $region27: #{encoder_layer_pallas.1} parent=11 // pred_region
          _
        $region28: #{encoder_layer_pallas.1} parent=11 // pred_fallthru
          _
        // Predicated region
        $region29: #{encoder_layer_pallas.1} parent=11 // pred_check
          %p392 = pneg %p161
        $region30: #{encoder_layer_pallas.1} parent=11 // pred_check_branch
          %394 = sbr.rel (%p392) target = $region32
        $region31: #{encoder_layer_pallas.1} parent=11 // pred_region
          %396 = vsyncadd [#allocation9], 0
          %s397 = sshll.u32 %s5, 4
          %s398 = int_to_ptr.hbm [resolvable:$true] %s397
          %s399 = sshll.u32 [#allocation10], 4
          %s400 = int_to_ptr.vmem [resolvable:$true] %s399
          %405 = dma.hbm_to_vmem [thread:$0]  %s398, 8192, %s400, [#allocation9], 256, 256, 16
        $region32: #{encoder_layer_pallas.1} parent=11 // pred_fallthru
          _
        // Predicated region
        $region33: #{encoder_layer_pallas.1} parent=11 // pred_check
          %p406 = pneg %p182
        $region34: #{encoder_layer_pallas.1} parent=11 // pred_check_branch
          %408 = sbr.rel (%p406) target = $region36
        $region35: #{encoder_layer_pallas.1} parent=11 // pred_region
          %410 = vsyncadd [#allocation12], 0
          %s412 = sshll.u32 %s6, 4
          %s413 = int_to_ptr.hbm [resolvable:$true] %s412
          %s414 = sshll.u32 [#allocation11], 4
          %s415 = int_to_ptr.vmem [resolvable:$true] %s414
          %417 = dma.hbm_to_vmem [thread:$0]  %s413, 64, %s415, [#allocation12]
        $region36: #{encoder_layer_pallas.1} parent=11 // pred_fallthru
          _
        // Predicated region
        $region37: #{encoder_layer_pallas.1} parent=11 // pred_check
          %p418 = pneg %p203
        $region38: #{encoder_layer_pallas.1} parent=11 // pred_check_branch
          %420 = sbr.rel (%p418) target = $region40
        $region39: #{encoder_layer_pallas.1} parent=11 // pred_region
          %422 = vsyncadd [#allocation12], 0
          %s423 = sshll.u32 %s7, 4
          %s424 = int_to_ptr.hbm [resolvable:$true] %s423
          %s425 = sshll.u32 [#allocation13], 4
          %s426 = int_to_ptr.vmem [resolvable:$true] %s425
          %431 = dma.hbm_to_vmem [thread:$0]  %s424, 8192, %s426, [#allocation12], 128, 128, 8
        $region40: #{encoder_layer_pallas.1} parent=11 // pred_fallthru
          _
        // Predicated region
        $region41: #{encoder_layer_pallas.1} parent=11 // pred_check
          %p432 = pneg %p224
        $region42: #{encoder_layer_pallas.1} parent=11 // pred_check_branch
          %434 = sbr.rel (%p432) target = $region44
        $region43: #{encoder_layer_pallas.1} parent=11 // pred_region
          %436 = vsyncadd [#allocation15], 0
          %s438 = sshll.u32 %s8, 4
          %s439 = int_to_ptr.hbm [resolvable:$true] %s438
          %s440 = sshll.u32 [#allocation14], 4
          %s441 = int_to_ptr.vmem [resolvable:$true] %s440
          %443 = dma.hbm_to_vmem [thread:$0]  %s439, 32, %s441, [#allocation15]
        $region44: #{encoder_layer_pallas.1} parent=11 // pred_fallthru
          _
        // Predicated region
        $region45: #{encoder_layer_pallas.1} parent=11 // pred_check
          %p444 = pneg %p245
        $region46: #{encoder_layer_pallas.1} parent=11 // pred_check_branch
          %446 = sbr.rel (%p444) target = $region48
        $region47: #{encoder_layer_pallas.1} parent=11 // pred_region
          _
        $region48: #{encoder_layer_pallas.1} parent=11 // pred_fallthru
          _
        // Predicated region
        $region49: #{encoder_layer_pallas.1} parent=11 // pred_check
          %p447 = pneg %p266
        $region50: #{encoder_layer_pallas.1} parent=11 // pred_check_branch
          %449 = sbr.rel (%p447) target = $region52
        $region51: #{encoder_layer_pallas.1} parent=11 // pred_region
          %451 = vsyncadd [#allocation15], 0
          %s453 = sshll.u32 %s10, 4
          %s454 = int_to_ptr.hbm [resolvable:$true] %s453
          %s455 = sshll.u32 [#allocation16], 4
          %s456 = int_to_ptr.vmem [resolvable:$true] %s455
          %458 = dma.hbm_to_vmem [thread:$0]  %s454, 32, %s456, [#allocation15]
        $region52: #{encoder_layer_pallas.1} parent=11 // pred_fallthru
          _
        // Predicated region
        $region53: #{encoder_layer_pallas.1} parent=11 // pred_check
          %p459 = pneg %p287
        $region54: #{encoder_layer_pallas.1} parent=11 // pred_check_branch
          %461 = sbr.rel (%p459) target = $region56
        $region55: #{encoder_layer_pallas.1} parent=11 // pred_region
          _
        $region56: #{encoder_layer_pallas.1} parent=11 // pred_fallthru
          _
        // Predicated region
        $region57: #{encoder_layer_pallas.1} parent=11 // pred_check
          %p462 = pneg %p308
        $region58: #{encoder_layer_pallas.1} parent=11 // pred_check_branch
          %464 = sbr.rel (%p462) target = $region60
        $region59: #{encoder_layer_pallas.1} parent=11 // pred_region
          %466 = vsyncadd [#allocation18], 0
          %s468 = sshll.u32 %s12, 4
          %s469 = int_to_ptr.hbm [resolvable:$true] %s468
          %s470 = sshll.u32 [#allocation17], 4
          %s471 = int_to_ptr.vmem [resolvable:$true] %s470
          %473 = dma.hbm_to_vmem [thread:$0]  %s469, 32, %s471, [#allocation18]
        $region60: #{encoder_layer_pallas.1} parent=11 // pred_fallthru
          _
      $region12: #{encoder_layer_pallas.1} parent=5 // pred_fallthru
        _
      %p474 = scmp.lt.s32.totalorder %s30, 2
      // Predicated region
      $region61: #{encoder_layer_pallas.1} parent=5 // pred_check
        %p475 = pneg %p474
      $region62: #{encoder_layer_pallas.1} parent=5 // pred_check_branch
        %477 = sbr.rel (%p475) target = $region64
      $region63: #{encoder_layer_pallas.1} parent=5 // pred_region
        // Predicated region
        $region65: #{encoder_layer_pallas.1} parent=63 // pred_check
          %p478 = pneg %p50
        $region66: #{encoder_layer_pallas.1} parent=63 // pred_check_branch
          %480 = sbr.rel (%p478) target = $region68
        $region67: #{encoder_layer_pallas.1} parent=63 // pred_region
          %s481 = sand.u32 %s40, 1
          %s482 = scalar_lea.sflag [#allocation3], %s481
          %s483 = sand.u32 %s40, 1
          %s484 = smul.addr %s483, 256
          %s485 = scalar_lea.vmem [#allocation2], %s484
          %487 = vsyncadd %s482, 0
          %s488 = smul.addr %s30, 32
          %s489 = smul.addr %s488, 8
          %s490 = scalar_lea.hbm %s0, %s489
          %s491 = sshll.u32 %s490, 4
          %s492 = int_to_ptr.hbm [resolvable:$true] %s491
          %s493 = sshll.u32 %s485, 4
          %s494 = int_to_ptr.vmem [resolvable:$true] %s493
          %499 = dma.hbm_to_vmem [thread:$0]  %s492, 4096, %s494, %s482, 256, 256, 16
        $region68: #{encoder_layer_pallas.1} parent=63 // pred_fallthru
          _
      $region64: #{encoder_layer_pallas.1} parent=5 // pred_fallthru
        _
      %p500 = scmp.le.s32.totalorder 1, %s30
      %p501 = scmp.lt.s32.totalorder %s30, 3
      %p502 = pnand %p500, %p501
      %p503 = pneg %p502
      // Predicated region
      $region69: #{encoder_layer_pallas.1} parent=5 // pred_check
        _
      $region70: #{encoder_layer_pallas.1} parent=5 // pred_check_branch
        %505 = sbr.rel (%p502) target = $region72
      $region71: #{encoder_layer_pallas.1} parent=5 // pred_region
        %s506 = ssub.s32 %s30, 1
        %s507 = sand.u32 %s43, 1
        %s508 = scalar_lea.sflag [#allocation3], %s507
        %s509 = sand.u32 %s43, 1
        %s510 = smul.addr %s509, 256
        %s511 = scalar_lea.vmem [#allocation2], %s510
        // Predicated region
        $region73: #{encoder_layer_pallas.1} parent=71 // pred_check
          %p512 = pneg %p56
        $region74: #{encoder_layer_pallas.1} parent=71 // pred_check_branch
          %514 = sbr.rel (%p512) target = $region76
        $region75: #{encoder_layer_pallas.1} parent=71 // pred_region
          %516 = dma.done %s508, 4096
        $region76: #{encoder_layer_pallas.1} parent=71 // pred_fallthru
          _
        // Predicated region
        $region77: #{encoder_layer_pallas.1} parent=71 // pred_check
          %p517 = pneg %p77
        $region78: #{encoder_layer_pallas.1} parent=71 // pred_check_branch
          %519 = sbr.rel (%p517) target = $region80
        $region79: #{encoder_layer_pallas.1} parent=71 // pred_region
          %521 = dma.done [#allocation6], 12288
        $region80: #{encoder_layer_pallas.1} parent=71 // pred_fallthru
          _
        // Predicated region
        $region81: #{encoder_layer_pallas.1} parent=71 // pred_check
          %p522 = pneg %p98
        $region82: #{encoder_layer_pallas.1} parent=71 // pred_check_branch
          %524 = sbr.rel (%p522) target = $region84
        $region83: #{encoder_layer_pallas.1} parent=71 // pred_region
          %526 = dma.done [#allocation6], 96
        $region84: #{encoder_layer_pallas.1} parent=71 // pred_fallthru
          _
        // Predicated region
        $region85: #{encoder_layer_pallas.1} parent=71 // pred_check
          %p527 = pneg %p119
        $region86: #{encoder_layer_pallas.1} parent=71 // pred_check_branch
          %529 = sbr.rel (%p527) target = $region88
        $region87: #{encoder_layer_pallas.1} parent=71 // pred_region
          %531 = dma.done [#allocation9], 4096
        $region88: #{encoder_layer_pallas.1} parent=71 // pred_fallthru
          _
        // Predicated region
        $region89: #{encoder_layer_pallas.1} parent=71 // pred_check
          %p532 = pneg %p161
        $region90: #{encoder_layer_pallas.1} parent=71 // pred_check_branch
          %534 = sbr.rel (%p532) target = $region92
        $region91: #{encoder_layer_pallas.1} parent=71 // pred_region
          %536 = dma.done [#allocation9], 8192
        $region92: #{encoder_layer_pallas.1} parent=71 // pred_fallthru
          _
        // Predicated region
        $region93: #{encoder_layer_pallas.1} parent=71 // pred_check
          %p537 = pneg %p182
        $region94: #{encoder_layer_pallas.1} parent=71 // pred_check_branch
          %539 = sbr.rel (%p537) target = $region96
        $region95: #{encoder_layer_pallas.1} parent=71 // pred_region
          %541 = dma.done [#allocation12], 64
        $region96: #{encoder_layer_pallas.1} parent=71 // pred_fallthru
          _
        // Predicated region
        $region97: #{encoder_layer_pallas.1} parent=71 // pred_check
          %p542 = pneg %p203
        $region98: #{encoder_layer_pallas.1} parent=71 // pred_check_branch
          %544 = sbr.rel (%p542) target = $region100
        $region99: #{encoder_layer_pallas.1} parent=71 // pred_region
          %546 = dma.done [#allocation12], 8192
        $region100: #{encoder_layer_pallas.1} parent=71 // pred_fallthru
          _
        // Predicated region
        $region101: #{encoder_layer_pallas.1} parent=71 // pred_check
          %p547 = pneg %p224
        $region102: #{encoder_layer_pallas.1} parent=71 // pred_check_branch
          %549 = sbr.rel (%p547) target = $region104
        $region103: #{encoder_layer_pallas.1} parent=71 // pred_region
          %551 = dma.done [#allocation15], 32
        $region104: #{encoder_layer_pallas.1} parent=71 // pred_fallthru
          _
        // Predicated region
        $region105: #{encoder_layer_pallas.1} parent=71 // pred_check
          %p552 = pneg %p266
        $region106: #{encoder_layer_pallas.1} parent=71 // pred_check_branch
          %554 = sbr.rel (%p552) target = $region108
        $region107: #{encoder_layer_pallas.1} parent=71 // pred_region
          %556 = dma.done [#allocation15], 32
        $region108: #{encoder_layer_pallas.1} parent=71 // pred_fallthru
          _
        // Predicated region
        $region109: #{encoder_layer_pallas.1} parent=71 // pred_check
          %p557 = pneg %p308
        $region110: #{encoder_layer_pallas.1} parent=71 // pred_check_branch
          %559 = sbr.rel (%p557) target = $region112
        $region111: #{encoder_layer_pallas.1} parent=71 // pred_region
          %561 = dma.done [#allocation18], 32
        $region112: #{encoder_layer_pallas.1} parent=71 // pred_fallthru
          _
        %s562 = sand.u32 %s43, 1
        %s563 = scalar_lea.sflag [#allocation3], %s562
        %s564 = sand.u32 %s43, 1
        %s565 = smul.addr %s564, 256
        %s566 = scalar_lea.vmem [#allocation2], %s565
        %p567 = pneg %p56
        %p568 = pneg %p53
        %p569 = pneg %p77
        %p570 = pneg %p74
        %p571 = pneg %p98
        %p572 = pneg %p95
        %p573 = pneg %p119
        %p574 = pneg %p116
        %p575 = pneg %p140
        %p576 = pneg %p137
        %p577 = pneg %p161
        %p578 = pneg %p158
        %p579 = pneg %p182
        %p580 = pneg %p179
        %p581 = pneg %p203
        %p582 = pneg %p200
        %p583 = pneg %p224
        %p584 = pneg %p221
        %p585 = pneg %p245
        %p586 = pneg %p242
        %p587 = pneg %p266
        %p588 = pneg %p263
        %p589 = pneg %p287
        %p590 = pneg %p284
        %p591 = pneg %p308
        %p592 = pneg %p305
        %p593 = pneg %p334
        %p594 = pneg %p331
        %s595 = sand.u32 %s321, 1
        %s596 = scalar_lea.sflag [#allocation4], %s595
        %s597 = sand.u32 %s321, 1
        %s598 = smul.addr %s597, 256
        %s599 = scalar_lea.vmem [#allocation19], %s598
        %v600 = vld [vmem:[%s511] sm:$0xff]
        %v601 = vld [vmem:[%s511 + $0x8] sm:$0xff]
        %v602 = vld [vmem:[%s511 + $0x10] sm:$0xff]
        %v603 = vld [vmem:[%s511 + $0x18] sm:$0xff]
        %v604 = vld [vmem:[%s511 + $0x20] sm:$0xff]
        %v605 = vld [vmem:[%s511 + $0x28] sm:$0xff]
        %v606 = vld [vmem:[%s511 + $0x30] sm:$0xff]
        %v607 = vld [vmem:[%s511 + $0x38] sm:$0xff]
        %v608 = vld [vmem:[%s511 + $0x40] sm:$0xff]
        %v609 = vld [vmem:[%s511 + $0x48] sm:$0xff]
        %v610 = vld [vmem:[%s511 + $0x50] sm:$0xff]
        %v611 = vld [vmem:[%s511 + $0x58] sm:$0xff]
        %v612 = vld [vmem:[%s511 + $0x60] sm:$0xff]
        %v613 = vld [vmem:[%s511 + $0x68] sm:$0xff]
        %v614 = vld [vmem:[%s511 + $0x70] sm:$0xff]
        %v615 = vld [vmem:[%s511 + $0x78] sm:$0xff]
        %v616 = vld [vmem:[%s511 + $0x80] sm:$0xff]
        %v617 = vld [vmem:[%s511 + $0x88] sm:$0xff]
        %v618 = vld [vmem:[%s511 + $0x90] sm:$0xff]
        %v619 = vld [vmem:[%s511 + $0x98] sm:$0xff]
        %v620 = vld [vmem:[%s511 + $0xa0] sm:$0xff]
        %v621 = vld [vmem:[%s511 + $0xa8] sm:$0xff]
        %v622 = vld [vmem:[%s511 + $0xb0] sm:$0xff]
        %v623 = vld [vmem:[%s511 + $0xb8] sm:$0xff]
        %v624 = vld [vmem:[%s511 + $0xc0] sm:$0xff]
        %v625 = vld [vmem:[%s511 + $0xc8] sm:$0xff]
        %v626 = vld [vmem:[%s511 + $0xd0] sm:$0xff]
        %v627 = vld [vmem:[%s511 + $0xd8] sm:$0xff]
        %v628 = vld [vmem:[%s511 + $0xe0] sm:$0xff]
        %v629 = vld [vmem:[%s511 + $0xe8] sm:$0xff]
        %v630 = vld [vmem:[%s511 + $0xf0] sm:$0xff]
        %v631 = vld [vmem:[%s511 + $0xf8] sm:$0xff]
        %v632 = vpack.c.bf16 %v602, %v600
        %v633 = vpack.c.bf16 %v603, %v601
        %v634 = vpack.c.bf16 %v606, %v604
        %v635 = vpack.c.bf16 %v607, %v605
        %v636 = vpack.c.bf16 %v610, %v608
        %v637 = vpack.c.bf16 %v611, %v609
        %v638 = vpack.c.bf16 %v614, %v612
        %v639 = vpack.c.bf16 %v615, %v613
        %v640 = vpack.c.bf16 %v618, %v616
        %v641 = vpack.c.bf16 %v619, %v617
        %v642 = vpack.c.bf16 %v622, %v620
        %v643 = vpack.c.bf16 %v623, %v621
        %v644 = vpack.c.bf16 %v626, %v624
        %v645 = vpack.c.bf16 %v627, %v625
        %v646 = vpack.c.bf16 %v630, %v628
        %v647 = vpack.c.bf16 %v631, %v629
        %v648 = vld [vmem:[#allocation5] sm:$0xff]
        %v649 = vld [vmem:[#allocation5 + $0x8] sm:$0xff]
        %v650 = vld [vmem:[#allocation5 + $0x10] sm:$0xff]
        %v651 = vld [vmem:[#allocation5 + $0x18] sm:$0xff]
        %v652 = vld [vmem:[#allocation5 + $0x20] sm:$0xff]
        %v653 = vld [vmem:[#allocation5 + $0x28] sm:$0xff]
        %v654 = vld [vmem:[#allocation5 + $0x30] sm:$0xff]
        %v655 = vld [vmem:[#allocation5 + $0x38] sm:$0xff]
        %v656 = vld [vmem:[#allocation5 + $0x40] sm:$0xff]
        %v657 = vld [vmem:[#allocation5 + $0x48] sm:$0xff]
        %v658 = vld [vmem:[#allocation5 + $0x50] sm:$0xff]
        %v659 = vld [vmem:[#allocation5 + $0x58] sm:$0xff]
        %v660 = vld [vmem:[#allocation5 + $0x60] sm:$0xff]
        %v661 = vld [vmem:[#allocation5 + $0x68] sm:$0xff]
        %v662 = vld [vmem:[#allocation5 + $0x70] sm:$0xff]
        %v663 = vld [vmem:[#allocation5 + $0x78] sm:$0xff]
        %v664 = vld [vmem:[#allocation5 + $0x80] sm:$0xff]
        %v665 = vld [vmem:[#allocation5 + $0x88] sm:$0xff]
        %v666 = vld [vmem:[#allocation5 + $0x90] sm:$0xff]
        %v667 = vld [vmem:[#allocation5 + $0x98] sm:$0xff]
        %v668 = vld [vmem:[#allocation5 + $0xa0] sm:$0xff]
        %v669 = vld [vmem:[#allocation5 + $0xa8] sm:$0xff]
        %v670 = vld [vmem:[#allocation5 + $0xb0] sm:$0xff]
        %v671 = vld [vmem:[#allocation5 + $0xb8] sm:$0xff]
        %v672 = vld [vmem:[#allocation5 + $0xc0] sm:$0xff]
        %v673 = vld [vmem:[#allocation5 + $0xc8] sm:$0xff]
        %v674 = vld [vmem:[#allocation5 + $0xd0] sm:$0xff]
        %v675 = vld [vmem:[#allocation5 + $0xd8] sm:$0xff]
        %v676 = vld [vmem:[#allocation5 + $0xe0] sm:$0xff]
        %v677 = vld [vmem:[#allocation5 + $0xe8] sm:$0xff]
        %v678 = vld [vmem:[#allocation5 + $0xf0] sm:$0xff]
        %v679 = vld [vmem:[#allocation5 + $0xf8] sm:$0xff]
        %v680 = vld [vmem:[#allocation5 + $0x100] sm:$0xff]
        %v681 = vld [vmem:[#allocation5 + $0x108] sm:$0xff]
        %v682 = vld [vmem:[#allocation5 + $0x110] sm:$0xff]
        %v683 = vld [vmem:[#allocation5 + $0x118] sm:$0xff]
        %v684 = vld [vmem:[#allocation5 + $0x120] sm:$0xff]
        %v685 = vld [vmem:[#allocation5 + $0x128] sm:$0xff]
        %v686 = vld [vmem:[#allocation5 + $0x130] sm:$0xff]
        %v687 = vld [vmem:[#allocation5 + $0x138] sm:$0xff]
        %v688 = vld [vmem:[#allocation5 + $0x140] sm:$0xff]
        %v689 = vld [vmem:[#allocation5 + $0x148] sm:$0xff]
        %v690 = vld [vmem:[#allocation5 + $0x150] sm:$0xff]
        %v691 = vld [vmem:[#allocation5 + $0x158] sm:$0xff]
        %v692 = vld [vmem:[#allocation5 + $0x160] sm:$0xff]
        %v693 = vld [vmem:[#allocation5 + $0x168] sm:$0xff]
        %v694 = vld [vmem:[#allocation5 + $0x170] sm:$0xff]
        %v695 = vld [vmem:[#allocation5 + $0x178] sm:$0xff]
        %v696 = vld [vmem:[#allocation5 + $0x180] sm:$0xff]
        %v697 = vld [vmem:[#allocation5 + $0x188] sm:$0xff]
        %v698 = vld [vmem:[#allocation5 + $0x190] sm:$0xff]
        %v699 = vld [vmem:[#allocation5 + $0x198] sm:$0xff]
        %v700 = vld [vmem:[#allocation5 + $0x1a0] sm:$0xff]
        %v701 = vld [vmem:[#allocation5 + $0x1a8] sm:$0xff]
        %v702 = vld [vmem:[#allocation5 + $0x1b0] sm:$0xff]
        %v703 = vld [vmem:[#allocation5 + $0x1b8] sm:$0xff]
        %v704 = vld [vmem:[#allocation5 + $0x1c0] sm:$0xff]
        %v705 = vld [vmem:[#allocation5 + $0x1c8] sm:$0xff]
        %v706 = vld [vmem:[#allocation5 + $0x1d0] sm:$0xff]
        %v707 = vld [vmem:[#allocation5 + $0x1d8] sm:$0xff]
        %v708 = vld [vmem:[#allocation5 + $0x1e0] sm:$0xff]
        %v709 = vld [vmem:[#allocation5 + $0x1e8] sm:$0xff]
        %v710 = vld [vmem:[#allocation5 + $0x1f0] sm:$0xff]
        %v711 = vld [vmem:[#allocation5 + $0x1f8] sm:$0xff]
        %v712 = vld [vmem:[#allocation5 + $0x200] sm:$0xff]
        %v713 = vld [vmem:[#allocation5 + $0x208] sm:$0xff]
        %v714 = vld [vmem:[#allocation5 + $0x210] sm:$0xff]
        %v715 = vld [vmem:[#allocation5 + $0x218] sm:$0xff]
        %v716 = vld [vmem:[#allocation5 + $0x220] sm:$0xff]
        %v717 = vld [vmem:[#allocation5 + $0x228] sm:$0xff]
        %v718 = vld [vmem:[#allocation5 + $0x230] sm:$0xff]
        %v719 = vld [vmem:[#allocation5 + $0x238] sm:$0xff]
        %v720 = vld [vmem:[#allocation5 + $0x240] sm:$0xff]
        %v721 = vld [vmem:[#allocation5 + $0x248] sm:$0xff]
        %v722 = vld [vmem:[#allocation5 + $0x250] sm:$0xff]
        %v723 = vld [vmem:[#allocation5 + $0x258] sm:$0xff]
        %v724 = vld [vmem:[#allocation5 + $0x260] sm:$0xff]
        %v725 = vld [vmem:[#allocation5 + $0x268] sm:$0xff]
        %v726 = vld [vmem:[#allocation5 + $0x270] sm:$0xff]
        %v727 = vld [vmem:[#allocation5 + $0x278] sm:$0xff]
        %v728 = vld [vmem:[#allocation5 + $0x280] sm:$0xff]
        %v729 = vld [vmem:[#allocation5 + $0x288] sm:$0xff]
        %v730 = vld [vmem:[#allocation5 + $0x290] sm:$0xff]
        %v731 = vld [vmem:[#allocation5 + $0x298] sm:$0xff]
        %v732 = vld [vmem:[#allocation5 + $0x2a0] sm:$0xff]
        %v733 = vld [vmem:[#allocation5 + $0x2a8] sm:$0xff]
        %v734 = vld [vmem:[#allocation5 + $0x2b0] sm:$0xff]
        %v735 = vld [vmem:[#allocation5 + $0x2b8] sm:$0xff]
        %v736 = vld [vmem:[#allocation5 + $0x2c0] sm:$0xff]
        %v737 = vld [vmem:[#allocation5 + $0x2c8] sm:$0xff]
        %v738 = vld [vmem:[#allocation5 + $0x2d0] sm:$0xff]
        %v739 = vld [vmem:[#allocation5 + $0x2d8] sm:$0xff]
        %v740 = vld [vmem:[#allocation5 + $0x2e0] sm:$0xff]
        %v741 = vld [vmem:[#allocation5 + $0x2e8] sm:$0xff]
        %v742 = vld [vmem:[#allocation5 + $0x2f0] sm:$0xff]
        %v743 = vld [vmem:[#allocation5 + $0x2f8] sm:$0xff]
        %v744 = vld [vmem:[#allocation7] sm:$0x3f]
        %v746 = vperm.slane %v744, 0
        %v747 = vperm.slane %v744, 1
        %v748 = vperm.slane %v744, 2
        %v749 = vperm.slane %v744, 3
        %v750 = vperm.slane %v744, 4
        %v751 = vperm.slane %v744, 5
        %v854 = vunpack.c.l.b16 %v648
        %v855 = vunpack.c.h.b16 %v648
        %v856 = vunpack.c.l.b16 %v649
        %v857 = vunpack.c.h.b16 %v649
        %v858 = vunpack.c.l.b16 %v650
        %v859 = vunpack.c.h.b16 %v650
        %v860 = vunpack.c.l.b16 %v651
        %v861 = vunpack.c.h.b16 %v651
        %v862 = vunpack.c.l.b16 %v652
        %v863 = vunpack.c.h.b16 %v652
        %v864 = vunpack.c.l.b16 %v653
        %v865 = vunpack.c.h.b16 %v653
        %v866 = vunpack.c.l.b16 %v654
        %v867 = vunpack.c.h.b16 %v654
        %v868 = vunpack.c.l.b16 %v655
        %v869 = vunpack.c.h.b16 %v655
        %v870 = vunpack.c.l.b16 %v656
        %v871 = vunpack.c.h.b16 %v656
        %v872 = vunpack.c.l.b16 %v657
        %v873 = vunpack.c.h.b16 %v657
        %v874 = vunpack.c.l.b16 %v658
        %v875 = vunpack.c.h.b16 %v658
        %v876 = vunpack.c.l.b16 %v659
        %v877 = vunpack.c.h.b16 %v659
        %v878 = vunpack.c.l.b16 %v660
        %v879 = vunpack.c.h.b16 %v660
        %v880 = vunpack.c.l.b16 %v661
        %v881 = vunpack.c.h.b16 %v661
        %v882 = vunpack.c.l.b16 %v662
        %v883 = vunpack.c.h.b16 %v662
        %v884 = vunpack.c.l.b16 %v663
        %v885 = vunpack.c.h.b16 %v663
        %v886 = vunpack.c.l.b16 %v664
        %v887 = vunpack.c.h.b16 %v664
        %v888 = vunpack.c.l.b16 %v665
        %v889 = vunpack.c.h.b16 %v665
        %v890 = vunpack.c.l.b16 %v666
        %v891 = vunpack.c.h.b16 %v666
        %v892 = vunpack.c.l.b16 %v667
        %v893 = vunpack.c.h.b16 %v667
        %v894 = vunpack.c.l.b16 %v668
        %v895 = vunpack.c.h.b16 %v668
        %v896 = vunpack.c.l.b16 %v669
        %v897 = vunpack.c.h.b16 %v669
        %v898 = vunpack.c.l.b16 %v670
        %v899 = vunpack.c.h.b16 %v670
        %v900 = vunpack.c.l.b16 %v671
        %v901 = vunpack.c.h.b16 %v671
        %v902 = vunpack.c.l.b16 %v672
        %v903 = vunpack.c.h.b16 %v672
        %v904 = vunpack.c.l.b16 %v673
        %v905 = vunpack.c.h.b16 %v673
        %v906 = vunpack.c.l.b16 %v674
        %v907 = vunpack.c.h.b16 %v674
        %v908 = vunpack.c.l.b16 %v675
        %v909 = vunpack.c.h.b16 %v675
        %v910 = vunpack.c.l.b16 %v676
        %v911 = vunpack.c.h.b16 %v676
        %v912 = vunpack.c.l.b16 %v677
        %v913 = vunpack.c.h.b16 %v677
        %v914 = vunpack.c.l.b16 %v678
        %v915 = vunpack.c.h.b16 %v678
        %v916 = vunpack.c.l.b16 %v679
        %v917 = vunpack.c.h.b16 %v679
        %v918 = vunpack.c.l.b16 %v680
        %v919 = vunpack.c.h.b16 %v680
        %v920 = vunpack.c.l.b16 %v681
        %v921 = vunpack.c.h.b16 %v681
        %v922 = vunpack.c.l.b16 %v682
        %v923 = vunpack.c.h.b16 %v682
        %v924 = vunpack.c.l.b16 %v683
        %v925 = vunpack.c.h.b16 %v683
        %v926 = vunpack.c.l.b16 %v684
        %v927 = vunpack.c.h.b16 %v684
        %v928 = vunpack.c.l.b16 %v685
        %v929 = vunpack.c.h.b16 %v685
        %v930 = vunpack.c.l.b16 %v686
        %v931 = vunpack.c.h.b16 %v686
        %v932 = vunpack.c.l.b16 %v687
        %v933 = vunpack.c.h.b16 %v687
        %v934 = vunpack.c.l.b16 %v688
        %v935 = vunpack.c.h.b16 %v688
        %v936 = vunpack.c.l.b16 %v689
        %v937 = vunpack.c.h.b16 %v689
        %v938 = vunpack.c.l.b16 %v690
        %v939 = vunpack.c.h.b16 %v690
        %v940 = vunpack.c.l.b16 %v691
        %v941 = vunpack.c.h.b16 %v691
        %v942 = vunpack.c.l.b16 %v692
        %v943 = vunpack.c.h.b16 %v692
        %v944 = vunpack.c.l.b16 %v693
        %v945 = vunpack.c.h.b16 %v693
        %v946 = vunpack.c.l.b16 %v694
        %v947 = vunpack.c.h.b16 %v694
        %v948 = vunpack.c.l.b16 %v695
        %v949 = vunpack.c.h.b16 %v695
        %v950 = vunpack.c.l.b16 %v696
        %v951 = vunpack.c.h.b16 %v696
        %v952 = vunpack.c.l.b16 %v697
        %v953 = vunpack.c.h.b16 %v697
        %v954 = vunpack.c.l.b16 %v698
        %v955 = vunpack.c.h.b16 %v698
        %v956 = vunpack.c.l.b16 %v699
        %v957 = vunpack.c.h.b16 %v699
        %v958 = vunpack.c.l.b16 %v700
        %v959 = vunpack.c.h.b16 %v700
        %v960 = vunpack.c.l.b16 %v701
        %v961 = vunpack.c.h.b16 %v701
        %v962 = vunpack.c.l.b16 %v702
        %v963 = vunpack.c.h.b16 %v702
        %v964 = vunpack.c.l.b16 %v703
        %v965 = vunpack.c.h.b16 %v703
        %v966 = vunpack.c.l.b16 %v704
        %v967 = vunpack.c.h.b16 %v704
        %v968 = vunpack.c.l.b16 %v705
        %v969 = vunpack.c.h.b16 %v705
        %v970 = vunpack.c.l.b16 %v706
        %v971 = vunpack.c.h.b16 %v706
        %v972 = vunpack.c.l.b16 %v707
        %v973 = vunpack.c.h.b16 %v707
        %v974 = vunpack.c.l.b16 %v708
        %v975 = vunpack.c.h.b16 %v708
        %v976 = vunpack.c.l.b16 %v709
        %v977 = vunpack.c.h.b16 %v709
        %v978 = vunpack.c.l.b16 %v710
        %v979 = vunpack.c.h.b16 %v710
        %v980 = vunpack.c.l.b16 %v711
        %v981 = vunpack.c.h.b16 %v711
        %v982 = vunpack.c.l.b16 %v712
        %v983 = vunpack.c.h.b16 %v712
        %v984 = vunpack.c.l.b16 %v713
        %v985 = vunpack.c.h.b16 %v713
        %v986 = vunpack.c.l.b16 %v714
        %v987 = vunpack.c.h.b16 %v714
        %v988 = vunpack.c.l.b16 %v715
        %v989 = vunpack.c.h.b16 %v715
        %v990 = vunpack.c.l.b16 %v716
        %v991 = vunpack.c.h.b16 %v716
        %v992 = vunpack.c.l.b16 %v717
        %v993 = vunpack.c.h.b16 %v717
        %v994 = vunpack.c.l.b16 %v718
        %v995 = vunpack.c.h.b16 %v718
        %v996 = vunpack.c.l.b16 %v719
        %v997 = vunpack.c.h.b16 %v719
        %v998 = vunpack.c.l.b16 %v720
        %v999 = vunpack.c.h.b16 %v720
        %v1000 = vunpack.c.l.b16 %v721
        %v1001 = vunpack.c.h.b16 %v721
        %v1002 = vunpack.c.l.b16 %v722
        %v1003 = vunpack.c.h.b16 %v722
        %v1004 = vunpack.c.l.b16 %v723
        %v1005 = vunpack.c.h.b16 %v723
        %v1006 = vunpack.c.l.b16 %v724
        %v1007 = vunpack.c.h.b16 %v724
        %v1008 = vunpack.c.l.b16 %v725
        %v1009 = vunpack.c.h.b16 %v725
        %v1010 = vunpack.c.l.b16 %v726
        %v1011 = vunpack.c.h.b16 %v726
        %v1012 = vunpack.c.l.b16 %v727
        %v1013 = vunpack.c.h.b16 %v727
        %v1014 = vunpack.c.l.b16 %v728
        %v1015 = vunpack.c.h.b16 %v728
        %v1016 = vunpack.c.l.b16 %v729
        %v1017 = vunpack.c.h.b16 %v729
        %v1018 = vunpack.c.l.b16 %v730
        %v1019 = vunpack.c.h.b16 %v730
        %v1020 = vunpack.c.l.b16 %v731
        %v1021 = vunpack.c.h.b16 %v731
        %v1022 = vunpack.c.l.b16 %v732
        %v1023 = vunpack.c.h.b16 %v732
        %v1024 = vunpack.c.l.b16 %v733
        %v1025 = vunpack.c.h.b16 %v733
        %v1026 = vunpack.c.l.b16 %v734
        %v1027 = vunpack.c.h.b16 %v734
        %v1028 = vunpack.c.l.b16 %v735
        %v1029 = vunpack.c.h.b16 %v735
        %v1030 = vunpack.c.l.b16 %v736
        %v1031 = vunpack.c.h.b16 %v736
        %v1032 = vunpack.c.l.b16 %v737
        %v1033 = vunpack.c.h.b16 %v737
        %v1034 = vunpack.c.l.b16 %v738
        %v1035 = vunpack.c.h.b16 %v738
        %v1036 = vunpack.c.l.b16 %v739
        %v1037 = vunpack.c.h.b16 %v739
        %v1038 = vunpack.c.l.b16 %v740
        %v1039 = vunpack.c.h.b16 %v740
        %v1040 = vunpack.c.l.b16 %v741
        %v1041 = vunpack.c.h.b16 %v741
        %v1042 = vunpack.c.l.b16 %v742
        %v1043 = vunpack.c.h.b16 %v742
        %v1044 = vunpack.c.l.b16 %v743
        %v1045 = vunpack.c.h.b16 %v743
        %v1046 = vpack.c.b16 %v860, %v854
        %v1047 = vpack.c.b16 %v861, %v855
        %v1048 = vpack.c.b16 %v862, %v856
        %v1049 = vpack.c.b16 %v863, %v857
        %v1050 = vpack.c.b16 %v864, %v858
        %v1051 = vpack.c.b16 %v865, %v859
        %v1052 = vpack.c.b16 %v872, %v866
        %v1053 = vpack.c.b16 %v873, %v867
        %v1054 = vpack.c.b16 %v874, %v868
        %v1055 = vpack.c.b16 %v875, %v869
        %v1056 = vpack.c.b16 %v876, %v870
        %v1057 = vpack.c.b16 %v877, %v871
        %v1058 = vpack.c.b16 %v884, %v878
        %v1059 = vpack.c.b16 %v885, %v879
        %v1060 = vpack.c.b16 %v886, %v880
        %v1061 = vpack.c.b16 %v887, %v881
        %v1062 = vpack.c.b16 %v888, %v882
        %v1063 = vpack.c.b16 %v889, %v883
        %v1064 = vpack.c.b16 %v896, %v890
        %v1065 = vpack.c.b16 %v897, %v891
        %v1066 = vpack.c.b16 %v898, %v892
        %v1067 = vpack.c.b16 %v899, %v893
        %v1068 = vpack.c.b16 %v900, %v894
        %v1069 = vpack.c.b16 %v901, %v895
        %v1070 = vpack.c.b16 %v908, %v902
        %v1071 = vpack.c.b16 %v909, %v903
        %v1072 = vpack.c.b16 %v910, %v904
        %v1073 = vpack.c.b16 %v911, %v905
        %v1074 = vpack.c.b16 %v912, %v906
        %v1075 = vpack.c.b16 %v913, %v907
        %v1076 = vpack.c.b16 %v920, %v914
        %v1077 = vpack.c.b16 %v921, %v915
        %v1078 = vpack.c.b16 %v922, %v916
        %v1079 = vpack.c.b16 %v923, %v917
        %v1080 = vpack.c.b16 %v924, %v918
        %v1081 = vpack.c.b16 %v925, %v919
        %v1082 = vpack.c.b16 %v932, %v926
        %v1083 = vpack.c.b16 %v933, %v927
        %v1084 = vpack.c.b16 %v934, %v928
        %v1085 = vpack.c.b16 %v935, %v929
        %v1086 = vpack.c.b16 %v936, %v930
        %v1087 = vpack.c.b16 %v937, %v931
        %v1088 = vpack.c.b16 %v944, %v938
        %v1089 = vpack.c.b16 %v945, %v939
        %v1090 = vpack.c.b16 %v946, %v940
        %v1091 = vpack.c.b16 %v947, %v941
        %v1092 = vpack.c.b16 %v948, %v942
        %v1093 = vpack.c.b16 %v949, %v943
        %v1094 = vpack.c.b16 %v956, %v950
        %v1095 = vpack.c.b16 %v957, %v951
        %v1096 = vpack.c.b16 %v958, %v952
        %v1097 = vpack.c.b16 %v959, %v953
        %v1098 = vpack.c.b16 %v960, %v954
        %v1099 = vpack.c.b16 %v961, %v955
        %v1100 = vpack.c.b16 %v968, %v962
        %v1101 = vpack.c.b16 %v969, %v963
        %v1102 = vpack.c.b16 %v970, %v964
        %v1103 = vpack.c.b16 %v971, %v965
        %v1104 = vpack.c.b16 %v972, %v966
        %v1105 = vpack.c.b16 %v973, %v967
        %v1106 = vpack.c.b16 %v980, %v974
        %v1107 = vpack.c.b16 %v981, %v975
        %v1108 = vpack.c.b16 %v982, %v976
        %v1109 = vpack.c.b16 %v983, %v977
        %v1110 = vpack.c.b16 %v984, %v978
        %v1111 = vpack.c.b16 %v985, %v979
        %v1112 = vpack.c.b16 %v992, %v986
        %v1113 = vpack.c.b16 %v993, %v987
        %v1114 = vpack.c.b16 %v994, %v988
        %v1115 = vpack.c.b16 %v995, %v989
        %v1116 = vpack.c.b16 %v996, %v990
        %v1117 = vpack.c.b16 %v997, %v991
        %v1118 = vpack.c.b16 %v1004, %v998
        %v1119 = vpack.c.b16 %v1005, %v999
        %v1120 = vpack.c.b16 %v1006, %v1000
        %v1121 = vpack.c.b16 %v1007, %v1001
        %v1122 = vpack.c.b16 %v1008, %v1002
        %v1123 = vpack.c.b16 %v1009, %v1003
        %v1124 = vpack.c.b16 %v1016, %v1010
        %v1125 = vpack.c.b16 %v1017, %v1011
        %v1126 = vpack.c.b16 %v1018, %v1012
        %v1127 = vpack.c.b16 %v1019, %v1013
        %v1128 = vpack.c.b16 %v1020, %v1014
        %v1129 = vpack.c.b16 %v1021, %v1015
        %v1130 = vpack.c.b16 %v1028, %v1022
        %v1131 = vpack.c.b16 %v1029, %v1023
        %v1132 = vpack.c.b16 %v1030, %v1024
        %v1133 = vpack.c.b16 %v1031, %v1025
        %v1134 = vpack.c.b16 %v1032, %v1026
        %v1135 = vpack.c.b16 %v1033, %v1027
        %v1136 = vpack.c.b16 %v1040, %v1034
        %v1137 = vpack.c.b16 %v1041, %v1035
        %v1138 = vpack.c.b16 %v1042, %v1036
        %v1139 = vpack.c.b16 %v1043, %v1037
        %v1140 = vpack.c.b16 %v1044, %v1038
        %v1141 = vpack.c.b16 %v1045, %v1039
        %1238 = vmatpush.bf16.msra.mxu0 %v1088
        %1239 = vmatpush.bf16.msra.mxu0 %v1082
        %1240 = vmatpush.bf16.msra.mxu0 %v1076
        %1241 = vmatpush.bf16.msra.mxu0 %v1070
        %1242 = vmatpush.bf16.msra.mxu0 %v1064
        %1243 = vmatpush.bf16.msra.mxu0 %v1058
        %1244 = vmatpush.bf16.msra.mxu0 %v1052
        %1245 = vmatpush.bf16.msra.mxu0 %v1046
        %1246 = vmatmul.bf16.gmra.mxu0 %v632
        %v1247 = vpop.f32.mrf.mxu0
        %v1248 = vadd.f32 %v746, %v1247
        %v1249 = vpop.f32.mrf.mxu0
        %v1250 = vadd.f32 %v746, %v1249
        %1251 = vmatmul.bf16.gmra.mxu0 %v634
        %v1252 = vpop.f32.mrf.mxu0
        %v1253 = vadd.f32 %v746, %v1252
        %v1254 = vpop.f32.mrf.mxu0
        %v1255 = vadd.f32 %v746, %v1254
        %1256 = vmatmul.bf16.gmra.mxu0 %v636
        %v1257 = vpop.f32.mrf.mxu0
        %v1258 = vadd.f32 %v746, %v1257
        %v1259 = vpop.f32.mrf.mxu0
        %v1260 = vadd.f32 %v746, %v1259
        %1261 = vmatmul.bf16.gmra.mxu0 %v638
        %v1262 = vpop.f32.mrf.mxu0
        %v1263 = vadd.f32 %v746, %v1262
        %v1264 = vpop.f32.mrf.mxu0
        %v1265 = vadd.f32 %v746, %v1264
        %1266 = vmatmul.bf16.gmra.mxu0 %v640
        %v1267 = vpop.f32.mrf.mxu0
        %v1268 = vadd.f32 %v746, %v1267
        %v1269 = vpop.f32.mrf.mxu0
        %v1270 = vadd.f32 %v746, %v1269
        %1271 = vmatmul.bf16.gmra.mxu0 %v642
        %v1272 = vpop.f32.mrf.mxu0
        %v1273 = vadd.f32 %v746, %v1272
        %v1274 = vpop.f32.mrf.mxu0
        %v1275 = vadd.f32 %v746, %v1274
        %1276 = vmatmul.bf16.gmra.mxu0 %v644
        %v1277 = vpop.f32.mrf.mxu0
        %v1278 = vadd.f32 %v746, %v1277
        %v1279 = vpop.f32.mrf.mxu0
        %v1280 = vadd.f32 %v746, %v1279
        %1281 = vmatmul.bf16.gmra.mxu0 %v646
        %v1282 = vpop.f32.mrf.mxu0
        %v1283 = vadd.f32 %v746, %v1282
        %v1284 = vpop.f32.mrf.mxu0
        %v1285 = vadd.f32 %v746, %v1284
        %1286 = vdwg.mxu0
        %1287 = vmatpush.bf16.msra.mxu0 %v1136
        %1288 = vmatpush.bf16.msra.mxu0 %v1130
        %1289 = vmatpush.bf16.msra.mxu0 %v1124
        %1290 = vmatpush.bf16.msra.mxu0 %v1118
        %1291 = vmatpush.bf16.msra.mxu0 %v1112
        %1292 = vmatpush.bf16.msra.mxu0 %v1106
        %1293 = vmatpush.bf16.msra.mxu0 %v1100
        %1294 = vmatpush.bf16.msra.mxu0 %v1094
        %1295 = vmatmul.bf16.gmra.mxu0 %v633
        %v1296 = vpop.f32.mrf.mxu0
        %v1297 = vadd.f32 %v1248, %v1296
        %v1298 = vpop.f32.mrf.mxu0
        %v1299 = vadd.f32 %v1250, %v1298
        %1300 = vmatmul.bf16.gmra.mxu0 %v635
        %v1301 = vpop.f32.mrf.mxu0
        %v1302 = vadd.f32 %v1253, %v1301
        %v1303 = vpop.f32.mrf.mxu0
        %v1304 = vadd.f32 %v1255, %v1303
        %1305 = vmatmul.bf16.gmra.mxu0 %v637
        %v1306 = vpop.f32.mrf.mxu0
        %v1307 = vadd.f32 %v1258, %v1306
        %v1308 = vpop.f32.mrf.mxu0
        %v1309 = vadd.f32 %v1260, %v1308
        %1310 = vmatmul.bf16.gmra.mxu0 %v639
        %v1311 = vpop.f32.mrf.mxu0
        %v1312 = vadd.f32 %v1263, %v1311
        %v1313 = vpop.f32.mrf.mxu0
        %v1314 = vadd.f32 %v1265, %v1313
        %1315 = vmatmul.bf16.gmra.mxu0 %v641
        %v1316 = vpop.f32.mrf.mxu0
        %v1317 = vadd.f32 %v1268, %v1316
        %v1318 = vpop.f32.mrf.mxu0
        %v1319 = vadd.f32 %v1270, %v1318
        %1320 = vmatmul.bf16.gmra.mxu0 %v643
        %v1321 = vpop.f32.mrf.mxu0
        %v1322 = vadd.f32 %v1273, %v1321
        %v1323 = vpop.f32.mrf.mxu0
        %v1324 = vadd.f32 %v1275, %v1323
        %1325 = vmatmul.bf16.gmra.mxu0 %v645
        %v1326 = vpop.f32.mrf.mxu0
        %v1327 = vadd.f32 %v1278, %v1326
        %v1328 = vpop.f32.mrf.mxu0
        %v1329 = vadd.f32 %v1280, %v1328
        %1330 = vmatmul.bf16.gmra.mxu0 %v647
        %v1331 = vpop.f32.mrf.mxu0
        %v1332 = vadd.f32 %v1283, %v1331
        %v1333 = vpop.f32.mrf.mxu0
        %v1334 = vadd.f32 %v1285, %v1333
        %1335 = vdwg.mxu0
        %1336 = vmatpush.bf16.msra.mxu0 %v1089
        %1337 = vmatpush.bf16.msra.mxu0 %v1083
        %1338 = vmatpush.bf16.msra.mxu0 %v1077
        %1339 = vmatpush.bf16.msra.mxu0 %v1071
        %1340 = vmatpush.bf16.msra.mxu0 %v1065
        %1341 = vmatpush.bf16.msra.mxu0 %v1059
        %1342 = vmatpush.bf16.msra.mxu0 %v1053
        %1343 = vmatpush.bf16.msra.mxu0 %v1047
        %1344 = vmatmul.bf16.gmra.mxu0 %v632
        %v1345 = vpop.f32.mrf.mxu0
        %v1346 = vadd.f32 %v747, %v1345
        %v1347 = vpop.f32.mrf.mxu0
        %v1348 = vadd.f32 %v747, %v1347
        %1349 = vmatmul.bf16.gmra.mxu0 %v634
        %v1350 = vpop.f32.mrf.mxu0
        %v1351 = vadd.f32 %v747, %v1350
        %v1352 = vpop.f32.mrf.mxu0
        %v1353 = vadd.f32 %v747, %v1352
        %1354 = vmatmul.bf16.gmra.mxu0 %v636
        %v1355 = vpop.f32.mrf.mxu0
        %v1356 = vadd.f32 %v747, %v1355
        %v1357 = vpop.f32.mrf.mxu0
        %v1358 = vadd.f32 %v747, %v1357
        %1359 = vmatmul.bf16.gmra.mxu0 %v638
        %v1360 = vpop.f32.mrf.mxu0
        %v1361 = vadd.f32 %v747, %v1360
        %v1362 = vpop.f32.mrf.mxu0
        %v1363 = vadd.f32 %v747, %v1362
        %1364 = vmatmul.bf16.gmra.mxu0 %v640
        %v1365 = vpop.f32.mrf.mxu0
        %v1366 = vadd.f32 %v747, %v1365
        %v1367 = vpop.f32.mrf.mxu0
        %v1368 = vadd.f32 %v747, %v1367
        %1369 = vmatmul.bf16.gmra.mxu0 %v642
        %v1370 = vpop.f32.mrf.mxu0
        %v1371 = vadd.f32 %v747, %v1370
        %v1372 = vpop.f32.mrf.mxu0
        %v1373 = vadd.f32 %v747, %v1372
        %1374 = vmatmul.bf16.gmra.mxu0 %v644
        %v1375 = vpop.f32.mrf.mxu0
        %v1376 = vadd.f32 %v747, %v1375
        %v1377 = vpop.f32.mrf.mxu0
        %v1378 = vadd.f32 %v747, %v1377
        %1379 = vmatmul.bf16.gmra.mxu0 %v646
        %v1380 = vpop.f32.mrf.mxu0
        %v1381 = vadd.f32 %v747, %v1380
        %v1382 = vpop.f32.mrf.mxu0
        %v1383 = vadd.f32 %v747, %v1382
        %1384 = vdwg.mxu0
        %1385 = vmatpush.bf16.msra.mxu0 %v1137
        %1386 = vmatpush.bf16.msra.mxu0 %v1131
        %1387 = vmatpush.bf16.msra.mxu0 %v1125
        %1388 = vmatpush.bf16.msra.mxu0 %v1119
        %1389 = vmatpush.bf16.msra.mxu0 %v1113
        %1390 = vmatpush.bf16.msra.mxu0 %v1107
        %1391 = vmatpush.bf16.msra.mxu0 %v1101
        %1392 = vmatpush.bf16.msra.mxu0 %v1095
        %1393 = vmatmul.bf16.gmra.mxu0 %v633
        %v1394 = vpop.f32.mrf.mxu0
        %v1395 = vadd.f32 %v1346, %v1394
        %v1396 = vpop.f32.mrf.mxu0
        %v1397 = vadd.f32 %v1348, %v1396
        %1398 = vmatmul.bf16.gmra.mxu0 %v635
        %v1399 = vpop.f32.mrf.mxu0
        %v1400 = vadd.f32 %v1351, %v1399
        %v1401 = vpop.f32.mrf.mxu0
        %v1402 = vadd.f32 %v1353, %v1401
        %1403 = vmatmul.bf16.gmra.mxu0 %v637
        %v1404 = vpop.f32.mrf.mxu0
        %v1405 = vadd.f32 %v1356, %v1404
        %v1406 = vpop.f32.mrf.mxu0
        %v1407 = vadd.f32 %v1358, %v1406
        %1408 = vmatmul.bf16.gmra.mxu0 %v639
        %v1409 = vpop.f32.mrf.mxu0
        %v1410 = vadd.f32 %v1361, %v1409
        %v1411 = vpop.f32.mrf.mxu0
        %v1412 = vadd.f32 %v1363, %v1411
        %1413 = vmatmul.bf16.gmra.mxu0 %v641
        %v1414 = vpop.f32.mrf.mxu0
        %v1415 = vadd.f32 %v1366, %v1414
        %v1416 = vpop.f32.mrf.mxu0
        %v1417 = vadd.f32 %v1368, %v1416
        %1418 = vmatmul.bf16.gmra.mxu0 %v643
        %v1419 = vpop.f32.mrf.mxu0
        %v1420 = vadd.f32 %v1371, %v1419
        %v1421 = vpop.f32.mrf.mxu0
        %v1422 = vadd.f32 %v1373, %v1421
        %1423 = vmatmul.bf16.gmra.mxu0 %v645
        %v1424 = vpop.f32.mrf.mxu0
        %v1425 = vadd.f32 %v1376, %v1424
        %v1426 = vpop.f32.mrf.mxu0
        %v1427 = vadd.f32 %v1378, %v1426
        %1428 = vmatmul.bf16.gmra.mxu0 %v647
        %v1429 = vpop.f32.mrf.mxu0
        %v1430 = vadd.f32 %v1381, %v1429
        %v1431 = vpop.f32.mrf.mxu0
        %v1432 = vadd.f32 %v1383, %v1431
        %1433 = vdwg.mxu0
        %1434 = vmatpush.bf16.msra.mxu0 %v1090
        %1435 = vmatpush.bf16.msra.mxu0 %v1084
        %1436 = vmatpush.bf16.msra.mxu0 %v1078
        %1437 = vmatpush.bf16.msra.mxu0 %v1072
        %1438 = vmatpush.bf16.msra.mxu0 %v1066
        %1439 = vmatpush.bf16.msra.mxu0 %v1060
        %1440 = vmatpush.bf16.msra.mxu0 %v1054
        %1441 = vmatpush.bf16.msra.mxu0 %v1048
        %1442 = vmatmul.bf16.gmra.mxu0 %v632
        %v1443 = vpop.f32.mrf.mxu0
        %v1444 = vadd.f32 %v748, %v1443
        %v1445 = vpop.f32.mrf.mxu0
        %v1446 = vadd.f32 %v748, %v1445
        %1447 = vmatmul.bf16.gmra.mxu0 %v634
        %v1448 = vpop.f32.mrf.mxu0
        %v1449 = vadd.f32 %v748, %v1448
        %v1450 = vpop.f32.mrf.mxu0
        %v1451 = vadd.f32 %v748, %v1450
        %1452 = vmatmul.bf16.gmra.mxu0 %v636
        %v1453 = vpop.f32.mrf.mxu0
        %v1454 = vadd.f32 %v748, %v1453
        %v1455 = vpop.f32.mrf.mxu0
        %v1456 = vadd.f32 %v748, %v1455
        %1457 = vmatmul.bf16.gmra.mxu0 %v638
        %v1458 = vpop.f32.mrf.mxu0
        %v1459 = vadd.f32 %v748, %v1458
        %v1460 = vpop.f32.mrf.mxu0
        %v1461 = vadd.f32 %v748, %v1460
        %1462 = vmatmul.bf16.gmra.mxu0 %v640
        %v1463 = vpop.f32.mrf.mxu0
        %v1464 = vadd.f32 %v748, %v1463
        %v1465 = vpop.f32.mrf.mxu0
        %v1466 = vadd.f32 %v748, %v1465
        %1467 = vmatmul.bf16.gmra.mxu0 %v642
        %v1468 = vpop.f32.mrf.mxu0
        %v1469 = vadd.f32 %v748, %v1468
        %v1470 = vpop.f32.mrf.mxu0
        %v1471 = vadd.f32 %v748, %v1470
        %1472 = vmatmul.bf16.gmra.mxu0 %v644
        %v1473 = vpop.f32.mrf.mxu0
        %v1474 = vadd.f32 %v748, %v1473
        %v1475 = vpop.f32.mrf.mxu0
        %v1476 = vadd.f32 %v748, %v1475
        %1477 = vmatmul.bf16.gmra.mxu0 %v646
        %v1478 = vpop.f32.mrf.mxu0
        %v1479 = vadd.f32 %v748, %v1478
        %v1480 = vpop.f32.mrf.mxu0
        %v1481 = vadd.f32 %v748, %v1480
        %1482 = vdwg.mxu0
        %1483 = vmatpush.bf16.msra.mxu0 %v1138
        %1484 = vmatpush.bf16.msra.mxu0 %v1132
        %1485 = vmatpush.bf16.msra.mxu0 %v1126
        %1486 = vmatpush.bf16.msra.mxu0 %v1120
        %1487 = vmatpush.bf16.msra.mxu0 %v1114
        %1488 = vmatpush.bf16.msra.mxu0 %v1108
        %1489 = vmatpush.bf16.msra.mxu0 %v1102
        %1490 = vmatpush.bf16.msra.mxu0 %v1096
        %1491 = vmatmul.bf16.gmra.mxu0 %v633
        %v1492 = vpop.f32.mrf.mxu0
        %v1493 = vadd.f32 %v1444, %v1492
        %v1494 = vpop.f32.mrf.mxu0
        %v1495 = vadd.f32 %v1446, %v1494
        %1496 = vmatmul.bf16.gmra.mxu0 %v635
        %v1497 = vpop.f32.mrf.mxu0
        %v1498 = vadd.f32 %v1449, %v1497
        %v1499 = vpop.f32.mrf.mxu0
        %v1500 = vadd.f32 %v1451, %v1499
        %1501 = vmatmul.bf16.gmra.mxu0 %v637
        %v1502 = vpop.f32.mrf.mxu0
        %v1503 = vadd.f32 %v1454, %v1502
        %v1504 = vpop.f32.mrf.mxu0
        %v1505 = vadd.f32 %v1456, %v1504
        %1506 = vmatmul.bf16.gmra.mxu0 %v639
        %v1507 = vpop.f32.mrf.mxu0
        %v1508 = vadd.f32 %v1459, %v1507
        %v1509 = vpop.f32.mrf.mxu0
        %v1510 = vadd.f32 %v1461, %v1509
        %1511 = vmatmul.bf16.gmra.mxu0 %v641
        %v1512 = vpop.f32.mrf.mxu0
        %v1513 = vadd.f32 %v1464, %v1512
        %v1514 = vpop.f32.mrf.mxu0
        %v1515 = vadd.f32 %v1466, %v1514
        %1516 = vmatmul.bf16.gmra.mxu0 %v643
        %v1517 = vpop.f32.mrf.mxu0
        %v1518 = vadd.f32 %v1469, %v1517
        %v1519 = vpop.f32.mrf.mxu0
        %v1520 = vadd.f32 %v1471, %v1519
        %1521 = vmatmul.bf16.gmra.mxu0 %v645
        %v1522 = vpop.f32.mrf.mxu0
        %v1523 = vadd.f32 %v1474, %v1522
        %v1524 = vpop.f32.mrf.mxu0
        %v1525 = vadd.f32 %v1476, %v1524
        %1526 = vmatmul.bf16.gmra.mxu0 %v647
        %v1527 = vpop.f32.mrf.mxu0
        %v1528 = vadd.f32 %v1479, %v1527
        %v1529 = vpop.f32.mrf.mxu0
        %v1530 = vadd.f32 %v1481, %v1529
        %1531 = vdwg.mxu0
        %1532 = vmatpush.bf16.msra.mxu0 %v1091
        %1533 = vmatpush.bf16.msra.mxu0 %v1085
        %1534 = vmatpush.bf16.msra.mxu0 %v1079
        %1535 = vmatpush.bf16.msra.mxu0 %v1073
        %1536 = vmatpush.bf16.msra.mxu0 %v1067
        %1537 = vmatpush.bf16.msra.mxu0 %v1061
        %1538 = vmatpush.bf16.msra.mxu0 %v1055
        %1539 = vmatpush.bf16.msra.mxu0 %v1049
        %1540 = vmatmul.bf16.gmra.mxu0 %v632
        %v1541 = vpop.f32.mrf.mxu0
        %v1542 = vadd.f32 %v749, %v1541
        %v1543 = vpop.f32.mrf.mxu0
        %v1544 = vadd.f32 %v749, %v1543
        %1545 = vmatmul.bf16.gmra.mxu0 %v634
        %v1546 = vpop.f32.mrf.mxu0
        %v1547 = vadd.f32 %v749, %v1546
        %v1548 = vpop.f32.mrf.mxu0
        %v1549 = vadd.f32 %v749, %v1548
        %1550 = vmatmul.bf16.gmra.mxu0 %v636
        %v1551 = vpop.f32.mrf.mxu0
        %v1552 = vadd.f32 %v749, %v1551
        %v1553 = vpop.f32.mrf.mxu0
        %v1554 = vadd.f32 %v749, %v1553
        %1555 = vmatmul.bf16.gmra.mxu0 %v638
        %v1556 = vpop.f32.mrf.mxu0
        %v1557 = vadd.f32 %v749, %v1556
        %v1558 = vpop.f32.mrf.mxu0
        %v1559 = vadd.f32 %v749, %v1558
        %1560 = vmatmul.bf16.gmra.mxu0 %v640
        %v1561 = vpop.f32.mrf.mxu0
        %v1562 = vadd.f32 %v749, %v1561
        %v1563 = vpop.f32.mrf.mxu0
        %v1564 = vadd.f32 %v749, %v1563
        %1565 = vmatmul.bf16.gmra.mxu0 %v642
        %v1566 = vpop.f32.mrf.mxu0
        %v1567 = vadd.f32 %v749, %v1566
        %v1568 = vpop.f32.mrf.mxu0
        %v1569 = vadd.f32 %v749, %v1568
        %1570 = vmatmul.bf16.gmra.mxu0 %v644
        %v1571 = vpop.f32.mrf.mxu0
        %v1572 = vadd.f32 %v749, %v1571
        %v1573 = vpop.f32.mrf.mxu0
        %v1574 = vadd.f32 %v749, %v1573
        %1575 = vmatmul.bf16.gmra.mxu0 %v646
        %v1576 = vpop.f32.mrf.mxu0
        %v1577 = vadd.f32 %v749, %v1576
        %v1578 = vpop.f32.mrf.mxu0
        %v1579 = vadd.f32 %v749, %v1578
        %1580 = vdwg.mxu0
        %1581 = vmatpush.bf16.msra.mxu0 %v1139
        %1582 = vmatpush.bf16.msra.mxu0 %v1133
        %1583 = vmatpush.bf16.msra.mxu0 %v1127
        %1584 = vmatpush.bf16.msra.mxu0 %v1121
        %1585 = vmatpush.bf16.msra.mxu0 %v1115
        %1586 = vmatpush.bf16.msra.mxu0 %v1109
        %1587 = vmatpush.bf16.msra.mxu0 %v1103
        %1588 = vmatpush.bf16.msra.mxu0 %v1097
        %1589 = vmatmul.bf16.gmra.mxu0 %v633
        %v1590 = vpop.f32.mrf.mxu0
        %v1591 = vadd.f32 %v1542, %v1590
        %v1592 = vpop.f32.mrf.mxu0
        %v1593 = vadd.f32 %v1544, %v1592
        %1594 = vmatmul.bf16.gmra.mxu0 %v635
        %v1595 = vpop.f32.mrf.mxu0
        %v1596 = vadd.f32 %v1547, %v1595
        %v1597 = vpop.f32.mrf.mxu0
        %v1598 = vadd.f32 %v1549, %v1597
        %1599 = vmatmul.bf16.gmra.mxu0 %v637
        %v1600 = vpop.f32.mrf.mxu0
        %v1601 = vadd.f32 %v1552, %v1600
        %v1602 = vpop.f32.mrf.mxu0
        %v1603 = vadd.f32 %v1554, %v1602
        %1604 = vmatmul.bf16.gmra.mxu0 %v639
        %v1605 = vpop.f32.mrf.mxu0
        %v1606 = vadd.f32 %v1557, %v1605
        %v1607 = vpop.f32.mrf.mxu0
        %v1608 = vadd.f32 %v1559, %v1607
        %1609 = vmatmul.bf16.gmra.mxu0 %v641
        %v1610 = vpop.f32.mrf.mxu0
        %v1611 = vadd.f32 %v1562, %v1610
        %v1612 = vpop.f32.mrf.mxu0
        %v1613 = vadd.f32 %v1564, %v1612
        %1614 = vmatmul.bf16.gmra.mxu0 %v643
        %v1615 = vpop.f32.mrf.mxu0
        %v1616 = vadd.f32 %v1567, %v1615
        %v1617 = vpop.f32.mrf.mxu0
        %v1618 = vadd.f32 %v1569, %v1617
        %1619 = vmatmul.bf16.gmra.mxu0 %v645
        %v1620 = vpop.f32.mrf.mxu0
        %v1621 = vadd.f32 %v1572, %v1620
        %v1622 = vpop.f32.mrf.mxu0
        %v1623 = vadd.f32 %v1574, %v1622
        %1624 = vmatmul.bf16.gmra.mxu0 %v647
        %v1625 = vpop.f32.mrf.mxu0
        %v1626 = vadd.f32 %v1577, %v1625
        %v1627 = vpop.f32.mrf.mxu0
        %v1628 = vadd.f32 %v1579, %v1627
        %1629 = vdwg.mxu0
        %1630 = vmatpush.bf16.msra.mxu0 %v1092
        %1631 = vmatpush.bf16.msra.mxu0 %v1086
        %1632 = vmatpush.bf16.msra.mxu0 %v1080
        %1633 = vmatpush.bf16.msra.mxu0 %v1074
        %1634 = vmatpush.bf16.msra.mxu0 %v1068
        %1635 = vmatpush.bf16.msra.mxu0 %v1062
        %1636 = vmatpush.bf16.msra.mxu0 %v1056
        %1637 = vmatpush.bf16.msra.mxu0 %v1050
        %1638 = vmatmul.bf16.gmra.mxu0 %v632
        %v1639 = vpop.f32.mrf.mxu0
        %v1640 = vadd.f32 %v750, %v1639
        %v1641 = vpop.f32.mrf.mxu0
        %v1642 = vadd.f32 %v750, %v1641
        %1643 = vmatmul.bf16.gmra.mxu0 %v634
        %v1644 = vpop.f32.mrf.mxu0
        %v1645 = vadd.f32 %v750, %v1644
        %v1646 = vpop.f32.mrf.mxu0
        %v1647 = vadd.f32 %v750, %v1646
        %1648 = vmatmul.bf16.gmra.mxu0 %v636
        %v1649 = vpop.f32.mrf.mxu0
        %v1650 = vadd.f32 %v750, %v1649
        %v1651 = vpop.f32.mrf.mxu0
        %v1652 = vadd.f32 %v750, %v1651
        %1653 = vmatmul.bf16.gmra.mxu0 %v638
        %v1654 = vpop.f32.mrf.mxu0
        %v1655 = vadd.f32 %v750, %v1654
        %v1656 = vpop.f32.mrf.mxu0
        %v1657 = vadd.f32 %v750, %v1656
        %1658 = vmatmul.bf16.gmra.mxu0 %v640
        %v1659 = vpop.f32.mrf.mxu0
        %v1660 = vadd.f32 %v750, %v1659
        %v1661 = vpop.f32.mrf.mxu0
        %v1662 = vadd.f32 %v750, %v1661
        %1663 = vmatmul.bf16.gmra.mxu0 %v642
        %v1664 = vpop.f32.mrf.mxu0
        %v1665 = vadd.f32 %v750, %v1664
        %v1666 = vpop.f32.mrf.mxu0
        %v1667 = vadd.f32 %v750, %v1666
        %1668 = vmatmul.bf16.gmra.mxu0 %v644
        %v1669 = vpop.f32.mrf.mxu0
        %v1670 = vadd.f32 %v750, %v1669
        %v1671 = vpop.f32.mrf.mxu0
        %v1672 = vadd.f32 %v750, %v1671
        %1673 = vmatmul.bf16.gmra.mxu0 %v646
        %v1674 = vpop.f32.mrf.mxu0
        %v1675 = vadd.f32 %v750, %v1674
        %v1676 = vpop.f32.mrf.mxu0
        %v1677 = vadd.f32 %v750, %v1676
        %1678 = vdwg.mxu0
        %1679 = vmatpush.bf16.msra.mxu0 %v1140
        %1680 = vmatpush.bf16.msra.mxu0 %v1134
        %1681 = vmatpush.bf16.msra.mxu0 %v1128
        %1682 = vmatpush.bf16.msra.mxu0 %v1122
        %1683 = vmatpush.bf16.msra.mxu0 %v1116
        %1684 = vmatpush.bf16.msra.mxu0 %v1110
        %1685 = vmatpush.bf16.msra.mxu0 %v1104
        %1686 = vmatpush.bf16.msra.mxu0 %v1098
        %1687 = vmatmul.bf16.gmra.mxu0 %v633
        %v1688 = vpop.f32.mrf.mxu0
        %v1689 = vadd.f32 %v1640, %v1688
        %v1690 = vpop.f32.mrf.mxu0
        %v1691 = vadd.f32 %v1642, %v1690
        %1692 = vmatmul.bf16.gmra.mxu0 %v635
        %v1693 = vpop.f32.mrf.mxu0
        %v1694 = vadd.f32 %v1645, %v1693
        %v1695 = vpop.f32.mrf.mxu0
        %v1696 = vadd.f32 %v1647, %v1695
        %1697 = vmatmul.bf16.gmra.mxu0 %v637
        %v1698 = vpop.f32.mrf.mxu0
        %v1699 = vadd.f32 %v1650, %v1698
        %v1700 = vpop.f32.mrf.mxu0
        %v1701 = vadd.f32 %v1652, %v1700
        %1702 = vmatmul.bf16.gmra.mxu0 %v639
        %v1703 = vpop.f32.mrf.mxu0
        %v1704 = vadd.f32 %v1655, %v1703
        %v1705 = vpop.f32.mrf.mxu0
        %v1706 = vadd.f32 %v1657, %v1705
        %1707 = vmatmul.bf16.gmra.mxu0 %v641
        %v1708 = vpop.f32.mrf.mxu0
        %v1709 = vadd.f32 %v1660, %v1708
        %v1710 = vpop.f32.mrf.mxu0
        %v1711 = vadd.f32 %v1662, %v1710
        %1712 = vmatmul.bf16.gmra.mxu0 %v643
        %v1713 = vpop.f32.mrf.mxu0
        %v1714 = vadd.f32 %v1665, %v1713
        %v1715 = vpop.f32.mrf.mxu0
        %v1716 = vadd.f32 %v1667, %v1715
        %1717 = vmatmul.bf16.gmra.mxu0 %v645
        %v1718 = vpop.f32.mrf.mxu0
        %v1719 = vadd.f32 %v1670, %v1718
        %v1720 = vpop.f32.mrf.mxu0
        %v1721 = vadd.f32 %v1672, %v1720
        %1722 = vmatmul.bf16.gmra.mxu0 %v647
        %v1723 = vpop.f32.mrf.mxu0
        %v1724 = vadd.f32 %v1675, %v1723
        %v1725 = vpop.f32.mrf.mxu0
        %v1726 = vadd.f32 %v1677, %v1725
        %1727 = vdwg.mxu0
        %1728 = vmatpush.bf16.msra.mxu0 %v1093
        %1729 = vmatpush.bf16.msra.mxu0 %v1087
        %1730 = vmatpush.bf16.msra.mxu0 %v1081
        %1731 = vmatpush.bf16.msra.mxu0 %v1075
        %1732 = vmatpush.bf16.msra.mxu0 %v1069
        %1733 = vmatpush.bf16.msra.mxu0 %v1063
        %1734 = vmatpush.bf16.msra.mxu0 %v1057
        %1735 = vmatpush.bf16.msra.mxu0 %v1051
        %1736 = vmatmul.bf16.gmra.mxu0 %v632
        %v1737 = vpop.f32.mrf.mxu0
        %v1738 = vadd.f32 %v751, %v1737
        %v1739 = vpop.f32.mrf.mxu0
        %v1740 = vadd.f32 %v751, %v1739
        %1741 = vmatmul.bf16.gmra.mxu0 %v634
        %v1742 = vpop.f32.mrf.mxu0
        %v1743 = vadd.f32 %v751, %v1742
        %v1744 = vpop.f32.mrf.mxu0
        %v1745 = vadd.f32 %v751, %v1744
        %1746 = vmatmul.bf16.gmra.mxu0 %v636
        %v1747 = vpop.f32.mrf.mxu0
        %v1748 = vadd.f32 %v751, %v1747
        %v1749 = vpop.f32.mrf.mxu0
        %v1750 = vadd.f32 %v751, %v1749
        %1751 = vmatmul.bf16.gmra.mxu0 %v638
        %v1752 = vpop.f32.mrf.mxu0
        %v1753 = vadd.f32 %v751, %v1752
        %v1754 = vpop.f32.mrf.mxu0
        %v1755 = vadd.f32 %v751, %v1754
        %1756 = vmatmul.bf16.gmra.mxu0 %v640
        %v1757 = vpop.f32.mrf.mxu0
        %v1758 = vadd.f32 %v751, %v1757
        %v1759 = vpop.f32.mrf.mxu0
        %v1760 = vadd.f32 %v751, %v1759
        %1761 = vmatmul.bf16.gmra.mxu0 %v642
        %v1762 = vpop.f32.mrf.mxu0
        %v1763 = vadd.f32 %v751, %v1762
        %v1764 = vpop.f32.mrf.mxu0
        %v1765 = vadd.f32 %v751, %v1764
        %1766 = vmatmul.bf16.gmra.mxu0 %v644
        %v1767 = vpop.f32.mrf.mxu0
        %v1768 = vadd.f32 %v751, %v1767
        %v1769 = vpop.f32.mrf.mxu0
        %v1770 = vadd.f32 %v751, %v1769
        %1771 = vmatmul.bf16.gmra.mxu0 %v646
        %v1772 = vpop.f32.mrf.mxu0
        %v1773 = vadd.f32 %v751, %v1772
        %v1774 = vpop.f32.mrf.mxu0
        %v1775 = vadd.f32 %v751, %v1774
        %1776 = vdwg.mxu0
        %1777 = vmatpush.bf16.msra.mxu0 %v1141
        %1778 = vmatpush.bf16.msra.mxu0 %v1135
        %1779 = vmatpush.bf16.msra.mxu0 %v1129
        %1780 = vmatpush.bf16.msra.mxu0 %v1123
        %1781 = vmatpush.bf16.msra.mxu0 %v1117
        %1782 = vmatpush.bf16.msra.mxu0 %v1111
        %1783 = vmatpush.bf16.msra.mxu0 %v1105
        %1784 = vmatpush.bf16.msra.mxu0 %v1099
        %1785 = vmatmul.bf16.gmra.mxu0 %v633
        %v1786 = vpop.f32.mrf.mxu0
        %v1787 = vadd.f32 %v1738, %v1786
        %v1788 = vpop.f32.mrf.mxu0
        %v1789 = vadd.f32 %v1740, %v1788
        %1790 = vmatmul.bf16.gmra.mxu0 %v635
        %v1791 = vpop.f32.mrf.mxu0
        %v1792 = vadd.f32 %v1743, %v1791
        %v1793 = vpop.f32.mrf.mxu0
        %v1794 = vadd.f32 %v1745, %v1793
        %1795 = vmatmul.bf16.gmra.mxu0 %v637
        %v1796 = vpop.f32.mrf.mxu0
        %v1797 = vadd.f32 %v1748, %v1796
        %v1798 = vpop.f32.mrf.mxu0
        %v1799 = vadd.f32 %v1750, %v1798
        %1800 = vmatmul.bf16.gmra.mxu0 %v639
        %v1801 = vpop.f32.mrf.mxu0
        %v1802 = vadd.f32 %v1753, %v1801
        %v1803 = vpop.f32.mrf.mxu0
        %v1804 = vadd.f32 %v1755, %v1803
        %1805 = vmatmul.bf16.gmra.mxu0 %v641
        %v1806 = vpop.f32.mrf.mxu0
        %v1807 = vadd.f32 %v1758, %v1806
        %v1808 = vpop.f32.mrf.mxu0
        %v1809 = vadd.f32 %v1760, %v1808
        %1810 = vmatmul.bf16.gmra.mxu0 %v643
        %v1811 = vpop.f32.mrf.mxu0
        %v1812 = vadd.f32 %v1763, %v1811
        %v1813 = vpop.f32.mrf.mxu0
        %v1814 = vadd.f32 %v1765, %v1813
        %1815 = vmatmul.bf16.gmra.mxu0 %v645
        %v1816 = vpop.f32.mrf.mxu0
        %v1817 = vadd.f32 %v1768, %v1816
        %v1818 = vpop.f32.mrf.mxu0
        %v1819 = vadd.f32 %v1770, %v1818
        %1820 = vmatmul.bf16.gmra.mxu0 %v647
        %v1821 = vpop.f32.mrf.mxu0
        %v1822 = vadd.f32 %v1773, %v1821
        %v1823 = vpop.f32.mrf.mxu0
        %v1824 = vadd.f32 %v1775, %v1823
        %1825 = vdwg.mxu0
        %v1826 = vpack.c.bf16 %v1299, %v1297
        %v1827 = vpack.c.bf16 %v1304, %v1302
        %v1828 = vpack.c.bf16 %v1309, %v1307
        %v1829 = vpack.c.bf16 %v1314, %v1312
        %v1830 = vpack.c.bf16 %v1319, %v1317
        %v1831 = vpack.c.bf16 %v1324, %v1322
        %v1832 = vpack.c.bf16 %v1329, %v1327
        %v1833 = vpack.c.bf16 %v1334, %v1332
        %v1834 = vpack.c.bf16 %v1495, %v1493
        %v1835 = vpack.c.bf16 %v1500, %v1498
        %v1836 = vpack.c.bf16 %v1505, %v1503
        %v1837 = vpack.c.bf16 %v1510, %v1508
        %v1838 = vpack.c.bf16 %v1515, %v1513
        %v1839 = vpack.c.bf16 %v1520, %v1518
        %v1840 = vpack.c.bf16 %v1525, %v1523
        %v1841 = vpack.c.bf16 %v1530, %v1528
        %v1842 = vpack.c.bf16 %v1691, %v1689
        %v1843 = vpack.c.bf16 %v1696, %v1694
        %v1844 = vpack.c.bf16 %v1701, %v1699
        %v1845 = vpack.c.bf16 %v1706, %v1704
        %v1846 = vpack.c.bf16 %v1711, %v1709
        %v1847 = vpack.c.bf16 %v1716, %v1714
        %v1848 = vpack.c.bf16 %v1721, %v1719
        %v1849 = vpack.c.bf16 %v1726, %v1724
        %1850 = vmatpush.bf16.xpose.msra.mxu0 %v1841
        %1851 = vmatpush.bf16.xpose.msra.mxu0 %v1840
        %1852 = vmatpush.bf16.xpose.msra.mxu0 %v1839
        %1853 = vmatpush.bf16.xpose.msra.mxu0 %v1838
        %1854 = vmatpush.bf16.xpose.msra.mxu0 %v1837
        %1855 = vmatpush.bf16.xpose.msra.mxu0 %v1836
        %1856 = vmatpush.bf16.xpose.msra.mxu0 %v1835
        %1857 = vmatpush.bf16.xpose.msra.mxu0 %v1834
        %1858 = vmatmul.bf16.gmra.mxu0 %v1826
        %v1859 = vpop.f32.mrf.mxu0
        %v1860 = vadd.f32 0.0, %v1859
        %v1861 = vpop.f32.mrf.mxu0
        %v1862 = vadd.f32 0.0, %v1861
        %1863 = vmatmul.bf16.gmra.mxu0 %v1827
        %v1864 = vpop.f32.mrf.mxu0
        %v1865 = vadd.f32 0.0, %v1864
        %v1866 = vpop.f32.mrf.mxu0
        %v1867 = vadd.f32 0.0, %v1866
        %1868 = vmatmul.bf16.gmra.mxu0 %v1828
        %v1869 = vpop.f32.mrf.mxu0
        %v1870 = vadd.f32 0.0, %v1869
        %v1871 = vpop.f32.mrf.mxu0
        %v1872 = vadd.f32 0.0, %v1871
        %1873 = vmatmul.bf16.gmra.mxu0 %v1829
        %v1874 = vpop.f32.mrf.mxu0
        %v1875 = vadd.f32 0.0, %v1874
        %v1876 = vpop.f32.mrf.mxu0
        %v1877 = vadd.f32 0.0, %v1876
        %1878 = vmatmul.bf16.gmra.mxu0 %v1830
        %v1879 = vpop.f32.mrf.mxu0
        %v1880 = vadd.f32 0.0, %v1879
        %v1881 = vpop.f32.mrf.mxu0
        %v1882 = vadd.f32 0.0, %v1881
        %1883 = vmatmul.bf16.gmra.mxu0 %v1831
        %v1884 = vpop.f32.mrf.mxu0
        %v1885 = vadd.f32 0.0, %v1884
        %v1886 = vpop.f32.mrf.mxu0
        %v1887 = vadd.f32 0.0, %v1886
        %1888 = vmatmul.bf16.gmra.mxu0 %v1832
        %v1889 = vpop.f32.mrf.mxu0
        %v1890 = vadd.f32 0.0, %v1889
        %v1891 = vpop.f32.mrf.mxu0
        %v1892 = vadd.f32 0.0, %v1891
        %1893 = vmatmul.bf16.gmra.mxu0 %v1833
        %v1894 = vpop.f32.mrf.mxu0
        %v1895 = vadd.f32 0.0, %v1894
        %v1896 = vpop.f32.mrf.mxu0
        %v1897 = vadd.f32 0.0, %v1896
        %1898 = vdwg.mxu0
        %1899 = vmax.xlane.f32.xlu0 %v1860
        %v1900 = vpop.xlane.xlu0 %1899
        %1901 = vmax.xlane.f32.xlu0 %v1862
        %v1902 = vpop.xlane.xlu0 %1901
        %1903 = vmax.xlane.f32.xlu0 %v1865
        %v1904 = vpop.xlane.xlu0 %1903
        %1905 = vmax.xlane.f32.xlu0 %v1867
        %v1906 = vpop.xlane.xlu0 %1905
        %1907 = vmax.xlane.f32.xlu0 %v1870
        %v1908 = vpop.xlane.xlu0 %1907
        %1909 = vmax.xlane.f32.xlu0 %v1872
        %v1910 = vpop.xlane.xlu0 %1909
        %1911 = vmax.xlane.f32.xlu0 %v1875
        %v1912 = vpop.xlane.xlu0 %1911
        %1913 = vmax.xlane.f32.xlu0 %v1877
        %v1914 = vpop.xlane.xlu0 %1913
        %1915 = vmax.xlane.f32.xlu0 %v1880
        %v1916 = vpop.xlane.xlu0 %1915
        %1917 = vmax.xlane.f32.xlu0 %v1882
        %v1918 = vpop.xlane.xlu0 %1917
        %1919 = vmax.xlane.f32.xlu0 %v1885
        %v1920 = vpop.xlane.xlu0 %1919
        %1921 = vmax.xlane.f32.xlu0 %v1887
        %v1922 = vpop.xlane.xlu0 %1921
        %1923 = vmax.xlane.f32.xlu0 %v1890
        %v1924 = vpop.xlane.xlu0 %1923
        %1925 = vmax.xlane.f32.xlu0 %v1892
        %v1926 = vpop.xlane.xlu0 %1925
        %1927 = vmax.xlane.f32.xlu0 %v1895
        %v1928 = vpop.xlane.xlu0 %1927
        %1929 = vmax.xlane.f32.xlu0 %v1897
        %v1930 = vpop.xlane.xlu0 %1929
        %v1931 = vsub.f32 %v1860, %v1900
        %v1932 = vsub.f32 %v1862, %v1902
        %v1933 = vsub.f32 %v1865, %v1904
        %v1934 = vsub.f32 %v1867, %v1906
        %v1935 = vsub.f32 %v1870, %v1908
        %v1936 = vsub.f32 %v1872, %v1910
        %v1937 = vsub.f32 %v1875, %v1912
        %v1938 = vsub.f32 %v1877, %v1914
        %v1939 = vsub.f32 %v1880, %v1916
        %v1940 = vsub.f32 %v1882, %v1918
        %v1941 = vsub.f32 %v1885, %v1920
        %v1942 = vsub.f32 %v1887, %v1922
        %v1943 = vsub.f32 %v1890, %v1924
        %v1944 = vsub.f32 %v1892, %v1926
        %v1945 = vsub.f32 %v1895, %v1928
        %v1946 = vsub.f32 %v1897, %v1930
        %v1947 = vmul.f32 %v1931, 1.442695
        %v1948 = vpow.pop %v1947
        %v1949 = vmul.f32 %v1932, 1.442695
        %v1950 = vpow.pop %v1949
        %v1951 = vmul.f32 %v1933, 1.442695
        %v1952 = vpow.pop %v1951
        %v1953 = vmul.f32 %v1934, 1.442695
        %v1954 = vpow.pop %v1953
        %v1955 = vmul.f32 %v1935, 1.442695
        %v1956 = vpow.pop %v1955
        %v1957 = vmul.f32 %v1936, 1.442695
        %v1958 = vpow.pop %v1957
        %v1959 = vmul.f32 %v1937, 1.442695
        %v1960 = vpow.pop %v1959
        %v1961 = vmul.f32 %v1938, 1.442695
        %v1962 = vpow.pop %v1961
        %v1963 = vmul.f32 %v1939, 1.442695
        %v1964 = vpow.pop %v1963
        %v1965 = vmul.f32 %v1940, 1.442695
        %v1966 = vpow.pop %v1965
        %v1967 = vmul.f32 %v1941, 1.442695
        %v1968 = vpow.pop %v1967
        %v1969 = vmul.f32 %v1942, 1.442695
        %v1970 = vpow.pop %v1969
        %v1971 = vmul.f32 %v1943, 1.442695
        %v1972 = vpow.pop %v1971
        %v1973 = vmul.f32 %v1944, 1.442695
        %v1974 = vpow.pop %v1973
        %v1975 = vmul.f32 %v1945, 1.442695
        %v1976 = vpow.pop %v1975
        %v1977 = vmul.f32 %v1946, 1.442695
        %v1978 = vpow.pop %v1977
        %1979 = vadd.xlane.f32.xlu0 %v1948
        %v1980 = vpop.xlane.xlu0 %1979
        %1981 = vadd.xlane.f32.xlu0 %v1950
        %v1982 = vpop.xlane.xlu0 %1981
        %1983 = vadd.xlane.f32.xlu0 %v1952
        %v1984 = vpop.xlane.xlu0 %1983
        %1985 = vadd.xlane.f32.xlu0 %v1954
        %v1986 = vpop.xlane.xlu0 %1985
        %1987 = vadd.xlane.f32.xlu0 %v1956
        %v1988 = vpop.xlane.xlu0 %1987
        %1989 = vadd.xlane.f32.xlu0 %v1958
        %v1990 = vpop.xlane.xlu0 %1989
        %1991 = vadd.xlane.f32.xlu0 %v1960
        %v1992 = vpop.xlane.xlu0 %1991
        %1993 = vadd.xlane.f32.xlu0 %v1962
        %v1994 = vpop.xlane.xlu0 %1993
        %1995 = vadd.xlane.f32.xlu0 %v1964
        %v1996 = vpop.xlane.xlu0 %1995
        %1997 = vadd.xlane.f32.xlu0 %v1966
        %v1998 = vpop.xlane.xlu0 %1997
        %1999 = vadd.xlane.f32.xlu0 %v1968
        %v2000 = vpop.xlane.xlu0 %1999
        %2001 = vadd.xlane.f32.xlu0 %v1970
        %v2002 = vpop.xlane.xlu0 %2001
        %2003 = vadd.xlane.f32.xlu0 %v1972
        %v2004 = vpop.xlane.xlu0 %2003
        %2005 = vadd.xlane.f32.xlu0 %v1974
        %v2006 = vpop.xlane.xlu0 %2005
        %2007 = vadd.xlane.f32.xlu0 %v1976
        %v2008 = vpop.xlane.xlu0 %2007
        %2009 = vadd.xlane.f32.xlu0 %v1978
        %v2010 = vpop.xlane.xlu0 %2009
        %v2011 = vrcp.pop %v1980
        %v2012 = vrcp.pop %v1982
        %v2013 = vrcp.pop %v1984
        %v2014 = vrcp.pop %v1986
        %v2015 = vrcp.pop %v1988
        %v2016 = vrcp.pop %v1990
        %v2017 = vrcp.pop %v1992
        %v2018 = vrcp.pop %v1994
        %v2019 = vrcp.pop %v1996
        %v2020 = vrcp.pop %v1998
        %v2021 = vrcp.pop %v2000
        %v2022 = vrcp.pop %v2002
        %v2023 = vrcp.pop %v2004
        %v2024 = vrcp.pop %v2006
        %v2025 = vrcp.pop %v2008
        %v2026 = vrcp.pop %v2010
        %v2027 = vmul.f32 %v1948, %v2011
        %v2028 = vmul.f32 %v1950, %v2012
        %v2029 = vmul.f32 %v1952, %v2013
        %v2030 = vmul.f32 %v1954, %v2014
        %v2031 = vmul.f32 %v1956, %v2015
        %v2032 = vmul.f32 %v1958, %v2016
        %v2033 = vmul.f32 %v1960, %v2017
        %v2034 = vmul.f32 %v1962, %v2018
        %v2035 = vmul.f32 %v1964, %v2019
        %v2036 = vmul.f32 %v1966, %v2020
        %v2037 = vmul.f32 %v1968, %v2021
        %v2038 = vmul.f32 %v1970, %v2022
        %v2039 = vmul.f32 %v1972, %v2023
        %v2040 = vmul.f32 %v1974, %v2024
        %v2041 = vmul.f32 %v1976, %v2025
        %v2042 = vmul.f32 %v1978, %v2026
        %v2043 = vpack.c.bf16 %v2028, %v2027
        %v2044 = vpack.c.bf16 %v2030, %v2029
        %v2045 = vpack.c.bf16 %v2032, %v2031
        %v2046 = vpack.c.bf16 %v2034, %v2033
        %v2047 = vpack.c.bf16 %v2036, %v2035
        %v2048 = vpack.c.bf16 %v2038, %v2037
        %v2049 = vpack.c.bf16 %v2040, %v2039
        %v2050 = vpack.c.bf16 %v2042, %v2041
        %2051 = vmatpush.bf16.msra.mxu0 %v1849
        %2052 = vmatpush.bf16.msra.mxu0 %v1848
        %2053 = vmatpush.bf16.msra.mxu0 %v1847
        %2054 = vmatpush.bf16.msra.mxu0 %v1846
        %2055 = vmatpush.bf16.msra.mxu0 %v1845
        %2056 = vmatpush.bf16.msra.mxu0 %v1844
        %2057 = vmatpush.bf16.msra.mxu0 %v1843
        %2058 = vmatpush.bf16.msra.mxu0 %v1842
        %2059 = vmatmul.bf16.gmra.mxu0 %v2043
        %v2060 = vpop.f32.mrf.mxu0
        %v2061 = vadd.f32 0.0, %v2060
        %v2062 = vpop.f32.mrf.mxu0
        %v2063 = vadd.f32 0.0, %v2062
        %2064 = vmatmul.bf16.gmra.mxu0 %v2044
        %v2065 = vpop.f32.mrf.mxu0
        %v2066 = vadd.f32 0.0, %v2065
        %v2067 = vpop.f32.mrf.mxu0
        %v2068 = vadd.f32 0.0, %v2067
        %2069 = vmatmul.bf16.gmra.mxu0 %v2045
        %v2070 = vpop.f32.mrf.mxu0
        %v2071 = vadd.f32 0.0, %v2070
        %v2072 = vpop.f32.mrf.mxu0
        %v2073 = vadd.f32 0.0, %v2072
        %2074 = vmatmul.bf16.gmra.mxu0 %v2046
        %v2075 = vpop.f32.mrf.mxu0
        %v2076 = vadd.f32 0.0, %v2075
        %v2077 = vpop.f32.mrf.mxu0
        %v2078 = vadd.f32 0.0, %v2077
        %2079 = vmatmul.bf16.gmra.mxu0 %v2047
        %v2080 = vpop.f32.mrf.mxu0
        %v2081 = vadd.f32 0.0, %v2080
        %v2082 = vpop.f32.mrf.mxu0
        %v2083 = vadd.f32 0.0, %v2082
        %2084 = vmatmul.bf16.gmra.mxu0 %v2048
        %v2085 = vpop.f32.mrf.mxu0
        %v2086 = vadd.f32 0.0, %v2085
        %v2087 = vpop.f32.mrf.mxu0
        %v2088 = vadd.f32 0.0, %v2087
        %2089 = vmatmul.bf16.gmra.mxu0 %v2049
        %v2090 = vpop.f32.mrf.mxu0
        %v2091 = vadd.f32 0.0, %v2090
        %v2092 = vpop.f32.mrf.mxu0
        %v2093 = vadd.f32 0.0, %v2092
        %2094 = vmatmul.bf16.gmra.mxu0 %v2050
        %v2095 = vpop.f32.mrf.mxu0
        %v2096 = vadd.f32 0.0, %v2095
        %v2097 = vpop.f32.mrf.mxu0
        %v2098 = vadd.f32 0.0, %v2097
        %2099 = vdwg.mxu0
        %v2100 = vpack.c.bf16 %v2063, %v2061
        %v2101 = vpack.c.bf16 %v2068, %v2066
        %v2102 = vpack.c.bf16 %v2073, %v2071
        %v2103 = vpack.c.bf16 %v2078, %v2076
        %v2104 = vpack.c.bf16 %v2083, %v2081
        %v2105 = vpack.c.bf16 %v2088, %v2086
        %v2106 = vpack.c.bf16 %v2093, %v2091
        %v2107 = vpack.c.bf16 %v2098, %v2096
        %v2108 = vld [vmem:[#allocation8] sm:$0xff]
        %v2109 = vld [vmem:[#allocation8 + $0x8] sm:$0xff]
        %v2110 = vld [vmem:[#allocation8 + $0x10] sm:$0xff]
        %v2111 = vld [vmem:[#allocation8 + $0x18] sm:$0xff]
        %v2112 = vld [vmem:[#allocation8 + $0x20] sm:$0xff]
        %v2113 = vld [vmem:[#allocation8 + $0x28] sm:$0xff]
        %v2114 = vld [vmem:[#allocation8 + $0x30] sm:$0xff]
        %v2115 = vld [vmem:[#allocation8 + $0x38] sm:$0xff]
        %v2116 = vld [vmem:[#allocation8 + $0x40] sm:$0xff]
        %v2117 = vld [vmem:[#allocation8 + $0x48] sm:$0xff]
        %v2118 = vld [vmem:[#allocation8 + $0x50] sm:$0xff]
        %v2119 = vld [vmem:[#allocation8 + $0x58] sm:$0xff]
        %v2120 = vld [vmem:[#allocation8 + $0x60] sm:$0xff]
        %v2121 = vld [vmem:[#allocation8 + $0x68] sm:$0xff]
        %v2122 = vld [vmem:[#allocation8 + $0x70] sm:$0xff]
        %v2123 = vld [vmem:[#allocation8 + $0x78] sm:$0xff]
        %v2124 = vpack.c.bf16 %v1397, %v1395
        %v2125 = vpack.c.bf16 %v1402, %v1400
        %v2126 = vpack.c.bf16 %v1407, %v1405
        %v2127 = vpack.c.bf16 %v1412, %v1410
        %v2128 = vpack.c.bf16 %v1417, %v1415
        %v2129 = vpack.c.bf16 %v1422, %v1420
        %v2130 = vpack.c.bf16 %v1427, %v1425
        %v2131 = vpack.c.bf16 %v1432, %v1430
        %v2132 = vpack.c.bf16 %v1593, %v1591
        %v2133 = vpack.c.bf16 %v1598, %v1596
        %v2134 = vpack.c.bf16 %v1603, %v1601
        %v2135 = vpack.c.bf16 %v1608, %v1606
        %v2136 = vpack.c.bf16 %v1613, %v1611
        %v2137 = vpack.c.bf16 %v1618, %v1616
        %v2138 = vpack.c.bf16 %v1623, %v1621
        %v2139 = vpack.c.bf16 %v1628, %v1626
        %v2140 = vpack.c.bf16 %v1789, %v1787
        %v2141 = vpack.c.bf16 %v1794, %v1792
        %v2142 = vpack.c.bf16 %v1799, %v1797
        %v2143 = vpack.c.bf16 %v1804, %v1802
        %v2144 = vpack.c.bf16 %v1809, %v1807
        %v2145 = vpack.c.bf16 %v1814, %v1812
        %v2146 = vpack.c.bf16 %v1819, %v1817
        %v2147 = vpack.c.bf16 %v1824, %v1822
        %2148 = vmatpush.bf16.xpose.msra.mxu0 %v2139
        %2149 = vmatpush.bf16.xpose.msra.mxu0 %v2138
        %2150 = vmatpush.bf16.xpose.msra.mxu0 %v2137
        %2151 = vmatpush.bf16.xpose.msra.mxu0 %v2136
        %2152 = vmatpush.bf16.xpose.msra.mxu0 %v2135
        %2153 = vmatpush.bf16.xpose.msra.mxu0 %v2134
        %2154 = vmatpush.bf16.xpose.msra.mxu0 %v2133
        %2155 = vmatpush.bf16.xpose.msra.mxu0 %v2132
        %2156 = vmatmul.bf16.gmra.mxu0 %v2124
        %v2157 = vpop.f32.mrf.mxu0
        %v2158 = vadd.f32 0.0, %v2157
        %v2159 = vpop.f32.mrf.mxu0
        %v2160 = vadd.f32 0.0, %v2159
        %2161 = vmatmul.bf16.gmra.mxu0 %v2125
        %v2162 = vpop.f32.mrf.mxu0
        %v2163 = vadd.f32 0.0, %v2162
        %v2164 = vpop.f32.mrf.mxu0
        %v2165 = vadd.f32 0.0, %v2164
        %2166 = vmatmul.bf16.gmra.mxu0 %v2126
        %v2167 = vpop.f32.mrf.mxu0
        %v2168 = vadd.f32 0.0, %v2167
        %v2169 = vpop.f32.mrf.mxu0
        %v2170 = vadd.f32 0.0, %v2169
        %2171 = vmatmul.bf16.gmra.mxu0 %v2127
        %v2172 = vpop.f32.mrf.mxu0
        %v2173 = vadd.f32 0.0, %v2172
        %v2174 = vpop.f32.mrf.mxu0
        %v2175 = vadd.f32 0.0, %v2174
        %2176 = vmatmul.bf16.gmra.mxu0 %v2128
        %v2177 = vpop.f32.mrf.mxu0
        %v2178 = vadd.f32 0.0, %v2177
        %v2179 = vpop.f32.mrf.mxu0
        %v2180 = vadd.f32 0.0, %v2179
        %2181 = vmatmul.bf16.gmra.mxu0 %v2129
        %v2182 = vpop.f32.mrf.mxu0
        %v2183 = vadd.f32 0.0, %v2182
        %v2184 = vpop.f32.mrf.mxu0
        %v2185 = vadd.f32 0.0, %v2184
        %2186 = vmatmul.bf16.gmra.mxu0 %v2130
        %v2187 = vpop.f32.mrf.mxu0
        %v2188 = vadd.f32 0.0, %v2187
        %v2189 = vpop.f32.mrf.mxu0
        %v2190 = vadd.f32 0.0, %v2189
        %2191 = vmatmul.bf16.gmra.mxu0 %v2131
        %v2192 = vpop.f32.mrf.mxu0
        %v2193 = vadd.f32 0.0, %v2192
        %v2194 = vpop.f32.mrf.mxu0
        %v2195 = vadd.f32 0.0, %v2194
        %2196 = vdwg.mxu0
        %2197 = vmax.xlane.f32.xlu0 %v2158
        %v2198 = vpop.xlane.xlu0 %2197
        %2199 = vmax.xlane.f32.xlu0 %v2160
        %v2200 = vpop.xlane.xlu0 %2199
        %2201 = vmax.xlane.f32.xlu0 %v2163
        %v2202 = vpop.xlane.xlu0 %2201
        %2203 = vmax.xlane.f32.xlu0 %v2165
        %v2204 = vpop.xlane.xlu0 %2203
        %2205 = vmax.xlane.f32.xlu0 %v2168
        %v2206 = vpop.xlane.xlu0 %2205
        %2207 = vmax.xlane.f32.xlu0 %v2170
        %v2208 = vpop.xlane.xlu0 %2207
        %2209 = vmax.xlane.f32.xlu0 %v2173
        %v2210 = vpop.xlane.xlu0 %2209
        %2211 = vmax.xlane.f32.xlu0 %v2175
        %v2212 = vpop.xlane.xlu0 %2211
        %2213 = vmax.xlane.f32.xlu0 %v2178
        %v2214 = vpop.xlane.xlu0 %2213
        %2215 = vmax.xlane.f32.xlu0 %v2180
        %v2216 = vpop.xlane.xlu0 %2215
        %2217 = vmax.xlane.f32.xlu0 %v2183
        %v2218 = vpop.xlane.xlu0 %2217
        %2219 = vmax.xlane.f32.xlu0 %v2185
        %v2220 = vpop.xlane.xlu0 %2219
        %2221 = vmax.xlane.f32.xlu0 %v2188
        %v2222 = vpop.xlane.xlu0 %2221
        %2223 = vmax.xlane.f32.xlu0 %v2190
        %v2224 = vpop.xlane.xlu0 %2223
        %2225 = vmax.xlane.f32.xlu0 %v2193
        %v2226 = vpop.xlane.xlu0 %2225
        %2227 = vmax.xlane.f32.xlu0 %v2195
        %v2228 = vpop.xlane.xlu0 %2227
        %v2229 = vsub.f32 %v2158, %v2198
        %v2230 = vsub.f32 %v2160, %v2200
        %v2231 = vsub.f32 %v2163, %v2202
        %v2232 = vsub.f32 %v2165, %v2204
        %v2233 = vsub.f32 %v2168, %v2206
        %v2234 = vsub.f32 %v2170, %v2208
        %v2235 = vsub.f32 %v2173, %v2210
        %v2236 = vsub.f32 %v2175, %v2212
        %v2237 = vsub.f32 %v2178, %v2214
        %v2238 = vsub.f32 %v2180, %v2216
        %v2239 = vsub.f32 %v2183, %v2218
        %v2240 = vsub.f32 %v2185, %v2220
        %v2241 = vsub.f32 %v2188, %v2222
        %v2242 = vsub.f32 %v2190, %v2224
        %v2243 = vsub.f32 %v2193, %v2226
        %v2244 = vsub.f32 %v2195, %v2228
        %v2245 = vmul.f32 %v2229, 1.442695
        %v2246 = vpow.pop %v2245
        %v2247 = vmul.f32 %v2230, 1.442695
        %v2248 = vpow.pop %v2247
        %v2249 = vmul.f32 %v2231, 1.442695
        %v2250 = vpow.pop %v2249
        %v2251 = vmul.f32 %v2232, 1.442695
        %v2252 = vpow.pop %v2251
        %v2253 = vmul.f32 %v2233, 1.442695
        %v2254 = vpow.pop %v2253
        %v2255 = vmul.f32 %v2234, 1.442695
        %v2256 = vpow.pop %v2255
        %v2257 = vmul.f32 %v2235, 1.442695
        %v2258 = vpow.pop %v2257
        %v2259 = vmul.f32 %v2236, 1.442695
        %v2260 = vpow.pop %v2259
        %v2261 = vmul.f32 %v2237, 1.442695
        %v2262 = vpow.pop %v2261
        %v2263 = vmul.f32 %v2238, 1.442695
        %v2264 = vpow.pop %v2263
        %v2265 = vmul.f32 %v2239, 1.442695
        %v2266 = vpow.pop %v2265
        %v2267 = vmul.f32 %v2240, 1.442695
        %v2268 = vpow.pop %v2267
        %v2269 = vmul.f32 %v2241, 1.442695
        %v2270 = vpow.pop %v2269
        %v2271 = vmul.f32 %v2242, 1.442695
        %v2272 = vpow.pop %v2271
        %v2273 = vmul.f32 %v2243, 1.442695
        %v2274 = vpow.pop %v2273
        %v2275 = vmul.f32 %v2244, 1.442695
        %v2276 = vpow.pop %v2275
        %2277 = vadd.xlane.f32.xlu0 %v2246
        %v2278 = vpop.xlane.xlu0 %2277
        %2279 = vadd.xlane.f32.xlu0 %v2248
        %v2280 = vpop.xlane.xlu0 %2279
        %2281 = vadd.xlane.f32.xlu0 %v2250
        %v2282 = vpop.xlane.xlu0 %2281
        %2283 = vadd.xlane.f32.xlu0 %v2252
        %v2284 = vpop.xlane.xlu0 %2283
        %2285 = vadd.xlane.f32.xlu0 %v2254
        %v2286 = vpop.xlane.xlu0 %2285
        %2287 = vadd.xlane.f32.xlu0 %v2256
        %v2288 = vpop.xlane.xlu0 %2287
        %2289 = vadd.xlane.f32.xlu0 %v2258
        %v2290 = vpop.xlane.xlu0 %2289
        %2291 = vadd.xlane.f32.xlu0 %v2260
        %v2292 = vpop.xlane.xlu0 %2291
        %2293 = vadd.xlane.f32.xlu0 %v2262
        %v2294 = vpop.xlane.xlu0 %2293
        %2295 = vadd.xlane.f32.xlu0 %v2264
        %v2296 = vpop.xlane.xlu0 %2295
        %2297 = vadd.xlane.f32.xlu0 %v2266
        %v2298 = vpop.xlane.xlu0 %2297
        %2299 = vadd.xlane.f32.xlu0 %v2268
        %v2300 = vpop.xlane.xlu0 %2299
        %2301 = vadd.xlane.f32.xlu0 %v2270
        %v2302 = vpop.xlane.xlu0 %2301
        %2303 = vadd.xlane.f32.xlu0 %v2272
        %v2304 = vpop.xlane.xlu0 %2303
        %2305 = vadd.xlane.f32.xlu0 %v2274
        %v2306 = vpop.xlane.xlu0 %2305
        %2307 = vadd.xlane.f32.xlu0 %v2276
        %v2308 = vpop.xlane.xlu0 %2307
        %v2309 = vrcp.pop %v2278
        %v2310 = vrcp.pop %v2280
        %v2311 = vrcp.pop %v2282
        %v2312 = vrcp.pop %v2284
        %v2313 = vrcp.pop %v2286
        %v2314 = vrcp.pop %v2288
        %v2315 = vrcp.pop %v2290
        %v2316 = vrcp.pop %v2292
        %v2317 = vrcp.pop %v2294
        %v2318 = vrcp.pop %v2296
        %v2319 = vrcp.pop %v2298
        %v2320 = vrcp.pop %v2300
        %v2321 = vrcp.pop %v2302
        %v2322 = vrcp.pop %v2304
        %v2323 = vrcp.pop %v2306
        %v2324 = vrcp.pop %v2308
        %v2325 = vmul.f32 %v2246, %v2309
        %v2326 = vmul.f32 %v2248, %v2310
        %v2327 = vmul.f32 %v2250, %v2311
        %v2328 = vmul.f32 %v2252, %v2312
        %v2329 = vmul.f32 %v2254, %v2313
        %v2330 = vmul.f32 %v2256, %v2314
        %v2331 = vmul.f32 %v2258, %v2315
        %v2332 = vmul.f32 %v2260, %v2316
        %v2333 = vmul.f32 %v2262, %v2317
        %v2334 = vmul.f32 %v2264, %v2318
        %v2335 = vmul.f32 %v2266, %v2319
        %v2336 = vmul.f32 %v2268, %v2320
        %v2337 = vmul.f32 %v2270, %v2321
        %v2338 = vmul.f32 %v2272, %v2322
        %v2339 = vmul.f32 %v2274, %v2323
        %v2340 = vmul.f32 %v2276, %v2324
        %v2341 = vpack.c.bf16 %v2326, %v2325
        %v2342 = vpack.c.bf16 %v2328, %v2327
        %v2343 = vpack.c.bf16 %v2330, %v2329
        %v2344 = vpack.c.bf16 %v2332, %v2331
        %v2345 = vpack.c.bf16 %v2334, %v2333
        %v2346 = vpack.c.bf16 %v2336, %v2335
        %v2347 = vpack.c.bf16 %v2338, %v2337
        %v2348 = vpack.c.bf16 %v2340, %v2339
        %2349 = vmatpush.bf16.msra.mxu0 %v2147
        %2350 = vmatpush.bf16.msra.mxu0 %v2146
        %2351 = vmatpush.bf16.msra.mxu0 %v2145
        %2352 = vmatpush.bf16.msra.mxu0 %v2144
        %2353 = vmatpush.bf16.msra.mxu0 %v2143
        %2354 = vmatpush.bf16.msra.mxu0 %v2142
        %2355 = vmatpush.bf16.msra.mxu0 %v2141
        %2356 = vmatpush.bf16.msra.mxu0 %v2140
        %2357 = vmatmul.bf16.gmra.mxu0 %v2341
        %v2358 = vpop.f32.mrf.mxu0
        %v2359 = vadd.f32 0.0, %v2358
        %v2360 = vpop.f32.mrf.mxu0
        %v2361 = vadd.f32 0.0, %v2360
        %2362 = vmatmul.bf16.gmra.mxu0 %v2342
        %v2363 = vpop.f32.mrf.mxu0
        %v2364 = vadd.f32 0.0, %v2363
        %v2365 = vpop.f32.mrf.mxu0
        %v2366 = vadd.f32 0.0, %v2365
        %2367 = vmatmul.bf16.gmra.mxu0 %v2343
        %v2368 = vpop.f32.mrf.mxu0
        %v2369 = vadd.f32 0.0, %v2368
        %v2370 = vpop.f32.mrf.mxu0
        %v2371 = vadd.f32 0.0, %v2370
        %2372 = vmatmul.bf16.gmra.mxu0 %v2344
        %v2373 = vpop.f32.mrf.mxu0
        %v2374 = vadd.f32 0.0, %v2373
        %v2375 = vpop.f32.mrf.mxu0
        %v2376 = vadd.f32 0.0, %v2375
        %2377 = vmatmul.bf16.gmra.mxu0 %v2345
        %v2378 = vpop.f32.mrf.mxu0
        %v2379 = vadd.f32 0.0, %v2378
        %v2380 = vpop.f32.mrf.mxu0
        %v2381 = vadd.f32 0.0, %v2380
        %2382 = vmatmul.bf16.gmra.mxu0 %v2346
        %v2383 = vpop.f32.mrf.mxu0
        %v2384 = vadd.f32 0.0, %v2383
        %v2385 = vpop.f32.mrf.mxu0
        %v2386 = vadd.f32 0.0, %v2385
        %2387 = vmatmul.bf16.gmra.mxu0 %v2347
        %v2388 = vpop.f32.mrf.mxu0
        %v2389 = vadd.f32 0.0, %v2388
        %v2390 = vpop.f32.mrf.mxu0
        %v2391 = vadd.f32 0.0, %v2390
        %2392 = vmatmul.bf16.gmra.mxu0 %v2348
        %v2393 = vpop.f32.mrf.mxu0
        %v2394 = vadd.f32 0.0, %v2393
        %v2395 = vpop.f32.mrf.mxu0
        %v2396 = vadd.f32 0.0, %v2395
        %2397 = vdwg.mxu0
        %v2398 = vpack.c.bf16 %v2361, %v2359
        %v2399 = vpack.c.bf16 %v2366, %v2364
        %v2400 = vpack.c.bf16 %v2371, %v2369
        %v2401 = vpack.c.bf16 %v2376, %v2374
        %v2402 = vpack.c.bf16 %v2381, %v2379
        %v2403 = vpack.c.bf16 %v2386, %v2384
        %v2404 = vpack.c.bf16 %v2391, %v2389
        %v2405 = vpack.c.bf16 %v2396, %v2394
        %v2406 = vld [vmem:[#allocation8 + $0x80] sm:$0xff]
        %v2407 = vld [vmem:[#allocation8 + $0x88] sm:$0xff]
        %v2408 = vld [vmem:[#allocation8 + $0x90] sm:$0xff]
        %v2409 = vld [vmem:[#allocation8 + $0x98] sm:$0xff]
        %v2410 = vld [vmem:[#allocation8 + $0xa0] sm:$0xff]
        %v2411 = vld [vmem:[#allocation8 + $0xa8] sm:$0xff]
        %v2412 = vld [vmem:[#allocation8 + $0xb0] sm:$0xff]
        %v2413 = vld [vmem:[#allocation8 + $0xb8] sm:$0xff]
        %v2414 = vld [vmem:[#allocation8 + $0xc0] sm:$0xff]
        %v2415 = vld [vmem:[#allocation8 + $0xc8] sm:$0xff]
        %v2416 = vld [vmem:[#allocation8 + $0xd0] sm:$0xff]
        %v2417 = vld [vmem:[#allocation8 + $0xd8] sm:$0xff]
        %v2418 = vld [vmem:[#allocation8 + $0xe0] sm:$0xff]
        %v2419 = vld [vmem:[#allocation8 + $0xe8] sm:$0xff]
        %v2420 = vld [vmem:[#allocation8 + $0xf0] sm:$0xff]
        %v2421 = vld [vmem:[#allocation8 + $0xf8] sm:$0xff]
        %v2438 = vunpack.c.l.b16 %v2406
        %v2439 = vunpack.c.h.b16 %v2406
        %v2440 = vunpack.c.l.b16 %v2407
        %v2441 = vunpack.c.h.b16 %v2407
        %v2442 = vunpack.c.l.b16 %v2408
        %v2443 = vunpack.c.h.b16 %v2408
        %v2444 = vunpack.c.l.b16 %v2409
        %v2445 = vunpack.c.h.b16 %v2409
        %v2446 = vunpack.c.l.b16 %v2410
        %v2447 = vunpack.c.h.b16 %v2410
        %v2448 = vunpack.c.l.b16 %v2411
        %v2449 = vunpack.c.h.b16 %v2411
        %v2450 = vunpack.c.l.b16 %v2412
        %v2451 = vunpack.c.h.b16 %v2412
        %v2452 = vunpack.c.l.b16 %v2413
        %v2453 = vunpack.c.h.b16 %v2413
        %v2454 = vunpack.c.l.b16 %v2414
        %v2455 = vunpack.c.h.b16 %v2414
        %v2456 = vunpack.c.l.b16 %v2415
        %v2457 = vunpack.c.h.b16 %v2415
        %v2458 = vunpack.c.l.b16 %v2416
        %v2459 = vunpack.c.h.b16 %v2416
        %v2460 = vunpack.c.l.b16 %v2417
        %v2461 = vunpack.c.h.b16 %v2417
        %v2462 = vunpack.c.l.b16 %v2418
        %v2463 = vunpack.c.h.b16 %v2418
        %v2464 = vunpack.c.l.b16 %v2419
        %v2465 = vunpack.c.h.b16 %v2419
        %v2466 = vunpack.c.l.b16 %v2420
        %v2467 = vunpack.c.h.b16 %v2420
        %v2468 = vunpack.c.l.b16 %v2421
        %v2469 = vunpack.c.h.b16 %v2421
        %v2470 = vpack.c.b16 %v2440, %v2438
        %v2471 = vpack.c.b16 %v2441, %v2439
        %v2472 = vpack.c.b16 %v2444, %v2442
        %v2473 = vpack.c.b16 %v2445, %v2443
        %v2474 = vpack.c.b16 %v2448, %v2446
        %v2475 = vpack.c.b16 %v2449, %v2447
        %v2476 = vpack.c.b16 %v2452, %v2450
        %v2477 = vpack.c.b16 %v2453, %v2451
        %v2478 = vpack.c.b16 %v2456, %v2454
        %v2479 = vpack.c.b16 %v2457, %v2455
        %v2480 = vpack.c.b16 %v2460, %v2458
        %v2481 = vpack.c.b16 %v2461, %v2459
        %v2482 = vpack.c.b16 %v2464, %v2462
        %v2483 = vpack.c.b16 %v2465, %v2463
        %v2484 = vpack.c.b16 %v2468, %v2466
        %v2485 = vpack.c.b16 %v2469, %v2467
        %2502 = vmatpush.bf16.msra.mxu0 %v2484
        %2503 = vmatpush.bf16.msra.mxu0 %v2482
        %2504 = vmatpush.bf16.msra.mxu0 %v2480
        %2505 = vmatpush.bf16.msra.mxu0 %v2478
        %2506 = vmatpush.bf16.msra.mxu0 %v2476
        %2507 = vmatpush.bf16.msra.mxu0 %v2474
        %2508 = vmatpush.bf16.msra.mxu0 %v2472
        %2509 = vmatpush.bf16.msra.mxu0 %v2470
        %2510 = vmatmul.bf16.gmra.mxu0 %v2398
        %v2511 = vpop.f32.mrf.mxu0
        %v2512 = vadd.f32 0.0, %v2511
        %v2513 = vpop.f32.mrf.mxu0
        %v2514 = vadd.f32 0.0, %v2513
        %2515 = vmatmul.bf16.gmra.mxu0 %v2399
        %v2516 = vpop.f32.mrf.mxu0
        %v2517 = vadd.f32 0.0, %v2516
        %v2518 = vpop.f32.mrf.mxu0
        %v2519 = vadd.f32 0.0, %v2518
        %2520 = vmatmul.bf16.gmra.mxu0 %v2400
        %v2521 = vpop.f32.mrf.mxu0
        %v2522 = vadd.f32 0.0, %v2521
        %v2523 = vpop.f32.mrf.mxu0
        %v2524 = vadd.f32 0.0, %v2523
        %2525 = vmatmul.bf16.gmra.mxu0 %v2401
        %v2526 = vpop.f32.mrf.mxu0
        %v2527 = vadd.f32 0.0, %v2526
        %v2528 = vpop.f32.mrf.mxu0
        %v2529 = vadd.f32 0.0, %v2528
        %2530 = vmatmul.bf16.gmra.mxu0 %v2402
        %v2531 = vpop.f32.mrf.mxu0
        %v2532 = vadd.f32 0.0, %v2531
        %v2533 = vpop.f32.mrf.mxu0
        %v2534 = vadd.f32 0.0, %v2533
        %2535 = vmatmul.bf16.gmra.mxu0 %v2403
        %v2536 = vpop.f32.mrf.mxu0
        %v2537 = vadd.f32 0.0, %v2536
        %v2538 = vpop.f32.mrf.mxu0
        %v2539 = vadd.f32 0.0, %v2538
        %2540 = vmatmul.bf16.gmra.mxu0 %v2404
        %v2541 = vpop.f32.mrf.mxu0
        %v2542 = vadd.f32 0.0, %v2541
        %v2543 = vpop.f32.mrf.mxu0
        %v2544 = vadd.f32 0.0, %v2543
        %2545 = vmatmul.bf16.gmra.mxu0 %v2405
        %v2546 = vpop.f32.mrf.mxu0
        %v2547 = vadd.f32 0.0, %v2546
        %v2548 = vpop.f32.mrf.mxu0
        %v2549 = vadd.f32 0.0, %v2548
        %2550 = vdwg.mxu0
        %2551 = vmatpush.bf16.msra.mxu0 %v2485
        %2552 = vmatpush.bf16.msra.mxu0 %v2483
        %2553 = vmatpush.bf16.msra.mxu0 %v2481
        %2554 = vmatpush.bf16.msra.mxu0 %v2479
        %2555 = vmatpush.bf16.msra.mxu0 %v2477
        %2556 = vmatpush.bf16.msra.mxu0 %v2475
        %2557 = vmatpush.bf16.msra.mxu0 %v2473
        %2558 = vmatpush.bf16.msra.mxu0 %v2471
        %2559 = vmatmul.bf16.gmra.mxu0 %v2398
        %v2560 = vpop.f32.mrf.mxu0
        %v2561 = vadd.f32 0.0, %v2560
        %v2562 = vpop.f32.mrf.mxu0
        %v2563 = vadd.f32 0.0, %v2562
        %2564 = vmatmul.bf16.gmra.mxu0 %v2399
        %v2565 = vpop.f32.mrf.mxu0
        %v2566 = vadd.f32 0.0, %v2565
        %v2567 = vpop.f32.mrf.mxu0
        %v2568 = vadd.f32 0.0, %v2567
        %2569 = vmatmul.bf16.gmra.mxu0 %v2400
        %v2570 = vpop.f32.mrf.mxu0
        %v2571 = vadd.f32 0.0, %v2570
        %v2572 = vpop.f32.mrf.mxu0
        %v2573 = vadd.f32 0.0, %v2572
        %2574 = vmatmul.bf16.gmra.mxu0 %v2401
        %v2575 = vpop.f32.mrf.mxu0
        %v2576 = vadd.f32 0.0, %v2575
        %v2577 = vpop.f32.mrf.mxu0
        %v2578 = vadd.f32 0.0, %v2577
        %2579 = vmatmul.bf16.gmra.mxu0 %v2402
        %v2580 = vpop.f32.mrf.mxu0
        %v2581 = vadd.f32 0.0, %v2580
        %v2582 = vpop.f32.mrf.mxu0
        %v2583 = vadd.f32 0.0, %v2582
        %2584 = vmatmul.bf16.gmra.mxu0 %v2403
        %v2585 = vpop.f32.mrf.mxu0
        %v2586 = vadd.f32 0.0, %v2585
        %v2587 = vpop.f32.mrf.mxu0
        %v2588 = vadd.f32 0.0, %v2587
        %2589 = vmatmul.bf16.gmra.mxu0 %v2404
        %v2590 = vpop.f32.mrf.mxu0
        %v2591 = vadd.f32 0.0, %v2590
        %v2592 = vpop.f32.mrf.mxu0
        %v2593 = vadd.f32 0.0, %v2592
        %2594 = vmatmul.bf16.gmra.mxu0 %v2405
        %v2595 = vpop.f32.mrf.mxu0
        %v2596 = vadd.f32 0.0, %v2595
        %v2597 = vpop.f32.mrf.mxu0
        %v2598 = vadd.f32 0.0, %v2597
        %2599 = vdwg.mxu0
        %v2616 = vunpack.c.l.b16 %v2108
        %v2617 = vunpack.c.h.b16 %v2108
        %v2618 = vunpack.c.l.b16 %v2109
        %v2619 = vunpack.c.h.b16 %v2109
        %v2620 = vunpack.c.l.b16 %v2110
        %v2621 = vunpack.c.h.b16 %v2110
        %v2622 = vunpack.c.l.b16 %v2111
        %v2623 = vunpack.c.h.b16 %v2111
        %v2624 = vunpack.c.l.b16 %v2112
        %v2625 = vunpack.c.h.b16 %v2112
        %v2626 = vunpack.c.l.b16 %v2113
        %v2627 = vunpack.c.h.b16 %v2113
        %v2628 = vunpack.c.l.b16 %v2114
        %v2629 = vunpack.c.h.b16 %v2114
        %v2630 = vunpack.c.l.b16 %v2115
        %v2631 = vunpack.c.h.b16 %v2115
        %v2632 = vunpack.c.l.b16 %v2116
        %v2633 = vunpack.c.h.b16 %v2116
        %v2634 = vunpack.c.l.b16 %v2117
        %v2635 = vunpack.c.h.b16 %v2117
        %v2636 = vunpack.c.l.b16 %v2118
        %v2637 = vunpack.c.h.b16 %v2118
        %v2638 = vunpack.c.l.b16 %v2119
        %v2639 = vunpack.c.h.b16 %v2119
        %v2640 = vunpack.c.l.b16 %v2120
        %v2641 = vunpack.c.h.b16 %v2120
        %v2642 = vunpack.c.l.b16 %v2121
        %v2643 = vunpack.c.h.b16 %v2121
        %v2644 = vunpack.c.l.b16 %v2122
        %v2645 = vunpack.c.h.b16 %v2122
        %v2646 = vunpack.c.l.b16 %v2123
        %v2647 = vunpack.c.h.b16 %v2123
        %v2648 = vpack.c.b16 %v2618, %v2616
        %v2649 = vpack.c.b16 %v2619, %v2617
        %v2650 = vpack.c.b16 %v2622, %v2620
        %v2651 = vpack.c.b16 %v2623, %v2621
        %v2652 = vpack.c.b16 %v2626, %v2624
        %v2653 = vpack.c.b16 %v2627, %v2625
        %v2654 = vpack.c.b16 %v2630, %v2628
        %v2655 = vpack.c.b16 %v2631, %v2629
        %v2656 = vpack.c.b16 %v2634, %v2632
        %v2657 = vpack.c.b16 %v2635, %v2633
        %v2658 = vpack.c.b16 %v2638, %v2636
        %v2659 = vpack.c.b16 %v2639, %v2637
        %v2660 = vpack.c.b16 %v2642, %v2640
        %v2661 = vpack.c.b16 %v2643, %v2641
        %v2662 = vpack.c.b16 %v2646, %v2644
        %v2663 = vpack.c.b16 %v2647, %v2645
        %2680 = vmatpush.bf16.msra.mxu0 %v2662
        %2681 = vmatpush.bf16.msra.mxu0 %v2660
        %2682 = vmatpush.bf16.msra.mxu0 %v2658
        %2683 = vmatpush.bf16.msra.mxu0 %v2656
        %2684 = vmatpush.bf16.msra.mxu0 %v2654
        %2685 = vmatpush.bf16.msra.mxu0 %v2652
        %2686 = vmatpush.bf16.msra.mxu0 %v2650
        %2687 = vmatpush.bf16.msra.mxu0 %v2648
        %2688 = vmatmul.bf16.gmra.mxu0 %v2100
        %v2689 = vpop.f32.mrf.mxu0
        %v2690 = vadd.f32 %v2512, %v2689
        %v2691 = vpop.f32.mrf.mxu0
        %v2692 = vadd.f32 %v2514, %v2691
        %2693 = vmatmul.bf16.gmra.mxu0 %v2101
        %v2694 = vpop.f32.mrf.mxu0
        %v2695 = vadd.f32 %v2517, %v2694
        %v2696 = vpop.f32.mrf.mxu0
        %v2697 = vadd.f32 %v2519, %v2696
        %2698 = vmatmul.bf16.gmra.mxu0 %v2102
        %v2699 = vpop.f32.mrf.mxu0
        %v2700 = vadd.f32 %v2522, %v2699
        %v2701 = vpop.f32.mrf.mxu0
        %v2702 = vadd.f32 %v2524, %v2701
        %2703 = vmatmul.bf16.gmra.mxu0 %v2103
        %v2704 = vpop.f32.mrf.mxu0
        %v2705 = vadd.f32 %v2527, %v2704
        %v2706 = vpop.f32.mrf.mxu0
        %v2707 = vadd.f32 %v2529, %v2706
        %2708 = vmatmul.bf16.gmra.mxu0 %v2104
        %v2709 = vpop.f32.mrf.mxu0
        %v2710 = vadd.f32 %v2532, %v2709
        %v2711 = vpop.f32.mrf.mxu0
        %v2712 = vadd.f32 %v2534, %v2711
        %2713 = vmatmul.bf16.gmra.mxu0 %v2105
        %v2714 = vpop.f32.mrf.mxu0
        %v2715 = vadd.f32 %v2537, %v2714
        %v2716 = vpop.f32.mrf.mxu0
        %v2717 = vadd.f32 %v2539, %v2716
        %2718 = vmatmul.bf16.gmra.mxu0 %v2106
        %v2719 = vpop.f32.mrf.mxu0
        %v2720 = vadd.f32 %v2542, %v2719
        %v2721 = vpop.f32.mrf.mxu0
        %v2722 = vadd.f32 %v2544, %v2721
        %2723 = vmatmul.bf16.gmra.mxu0 %v2107
        %v2724 = vpop.f32.mrf.mxu0
        %v2725 = vadd.f32 %v2547, %v2724
        %v2726 = vpop.f32.mrf.mxu0
        %v2727 = vadd.f32 %v2549, %v2726
        %2728 = vdwg.mxu0
        %2729 = vmatpush.bf16.msra.mxu0 %v2663
        %2730 = vmatpush.bf16.msra.mxu0 %v2661
        %2731 = vmatpush.bf16.msra.mxu0 %v2659
        %2732 = vmatpush.bf16.msra.mxu0 %v2657
        %2733 = vmatpush.bf16.msra.mxu0 %v2655
        %2734 = vmatpush.bf16.msra.mxu0 %v2653
        %2735 = vmatpush.bf16.msra.mxu0 %v2651
        %2736 = vmatpush.bf16.msra.mxu0 %v2649
        %2737 = vmatmul.bf16.gmra.mxu0 %v2100
        %v2738 = vpop.f32.mrf.mxu0
        %v2739 = vadd.f32 %v2561, %v2738
        %v2740 = vpop.f32.mrf.mxu0
        %v2741 = vadd.f32 %v2563, %v2740
        %2742 = vmatmul.bf16.gmra.mxu0 %v2101
        %v2743 = vpop.f32.mrf.mxu0
        %v2744 = vadd.f32 %v2566, %v2743
        %v2745 = vpop.f32.mrf.mxu0
        %v2746 = vadd.f32 %v2568, %v2745
        %2747 = vmatmul.bf16.gmra.mxu0 %v2102
        %v2748 = vpop.f32.mrf.mxu0
        %v2749 = vadd.f32 %v2571, %v2748
        %v2750 = vpop.f32.mrf.mxu0
        %v2751 = vadd.f32 %v2573, %v2750
        %2752 = vmatmul.bf16.gmra.mxu0 %v2103
        %v2753 = vpop.f32.mrf.mxu0
        %v2754 = vadd.f32 %v2576, %v2753
        %v2755 = vpop.f32.mrf.mxu0
        %v2756 = vadd.f32 %v2578, %v2755
        %2757 = vmatmul.bf16.gmra.mxu0 %v2104
        %v2758 = vpop.f32.mrf.mxu0
        %v2759 = vadd.f32 %v2581, %v2758
        %v2760 = vpop.f32.mrf.mxu0
        %v2761 = vadd.f32 %v2583, %v2760
        %2762 = vmatmul.bf16.gmra.mxu0 %v2105
        %v2763 = vpop.f32.mrf.mxu0
        %v2764 = vadd.f32 %v2586, %v2763
        %v2765 = vpop.f32.mrf.mxu0
        %v2766 = vadd.f32 %v2588, %v2765
        %2767 = vmatmul.bf16.gmra.mxu0 %v2106
        %v2768 = vpop.f32.mrf.mxu0
        %v2769 = vadd.f32 %v2591, %v2768
        %v2770 = vpop.f32.mrf.mxu0
        %v2771 = vadd.f32 %v2593, %v2770
        %2772 = vmatmul.bf16.gmra.mxu0 %v2107
        %v2773 = vpop.f32.mrf.mxu0
        %v2774 = vadd.f32 %v2596, %v2773
        %v2775 = vpop.f32.mrf.mxu0
        %v2776 = vadd.f32 %v2598, %v2775
        %2777 = vdwg.mxu0
        %v2778 = vld [vmem:[%s4] sm:$0x3]
        %v2780 = vperm.slane %v2778, 0
        %v2781 = vperm.slane %v2778, 1
        %v2784 = vadd.f32 %v2690, %v2780
        %v2785 = vadd.f32 %v2739, %v2781
        %v2786 = vadd.f32 %v2692, %v2780
        %v2787 = vadd.f32 %v2741, %v2781
        %v2788 = vadd.f32 %v2695, %v2780
        %v2789 = vadd.f32 %v2744, %v2781
        %v2790 = vadd.f32 %v2697, %v2780
        %v2791 = vadd.f32 %v2746, %v2781
        %v2792 = vadd.f32 %v2700, %v2780
        %v2793 = vadd.f32 %v2749, %v2781
        %v2794 = vadd.f32 %v2702, %v2780
        %v2795 = vadd.f32 %v2751, %v2781
        %v2796 = vadd.f32 %v2705, %v2780
        %v2797 = vadd.f32 %v2754, %v2781
        %v2798 = vadd.f32 %v2707, %v2780
        %v2799 = vadd.f32 %v2756, %v2781
        %v2800 = vadd.f32 %v2710, %v2780
        %v2801 = vadd.f32 %v2759, %v2781
        %v2802 = vadd.f32 %v2712, %v2780
        %v2803 = vadd.f32 %v2761, %v2781
        %v2804 = vadd.f32 %v2715, %v2780
        %v2805 = vadd.f32 %v2764, %v2781
        %v2806 = vadd.f32 %v2717, %v2780
        %v2807 = vadd.f32 %v2766, %v2781
        %v2808 = vadd.f32 %v2720, %v2780
        %v2809 = vadd.f32 %v2769, %v2781
        %v2810 = vadd.f32 %v2722, %v2780
        %v2811 = vadd.f32 %v2771, %v2781
        %v2812 = vadd.f32 %v2725, %v2780
        %v2813 = vadd.f32 %v2774, %v2781
        %v2814 = vadd.f32 %v2727, %v2780
        %v2815 = vadd.f32 %v2776, %v2781
        %v2816 = vadd.f32 %v600, %v2784
        %v2817 = vadd.f32 %v601, %v2785
        %v2818 = vadd.f32 %v602, %v2786
        %v2819 = vadd.f32 %v603, %v2787
        %v2820 = vadd.f32 %v604, %v2788
        %v2821 = vadd.f32 %v605, %v2789
        %v2822 = vadd.f32 %v606, %v2790
        %v2823 = vadd.f32 %v607, %v2791
        %v2824 = vadd.f32 %v608, %v2792
        %v2825 = vadd.f32 %v609, %v2793
        %v2826 = vadd.f32 %v610, %v2794
        %v2827 = vadd.f32 %v611, %v2795
        %v2828 = vadd.f32 %v612, %v2796
        %v2829 = vadd.f32 %v613, %v2797
        %v2830 = vadd.f32 %v614, %v2798
        %v2831 = vadd.f32 %v615, %v2799
        %v2832 = vadd.f32 %v616, %v2800
        %v2833 = vadd.f32 %v617, %v2801
        %v2834 = vadd.f32 %v618, %v2802
        %v2835 = vadd.f32 %v619, %v2803
        %v2836 = vadd.f32 %v620, %v2804
        %v2837 = vadd.f32 %v621, %v2805
        %v2838 = vadd.f32 %v622, %v2806
        %v2839 = vadd.f32 %v623, %v2807
        %v2840 = vadd.f32 %v624, %v2808
        %v2841 = vadd.f32 %v625, %v2809
        %v2842 = vadd.f32 %v626, %v2810
        %v2843 = vadd.f32 %v627, %v2811
        %v2844 = vadd.f32 %v628, %v2812
        %v2845 = vadd.f32 %v629, %v2813
        %v2846 = vadd.f32 %v630, %v2814
        %v2847 = vadd.f32 %v631, %v2815
        %v2848 = vld [vmem:[%s9] sm:$0x3]
        %v2849 = vld [vmem:[#allocation16] sm:$0x3]
        %v2850 = vadd.f32 %v2816, %v2817
        %2851 = vadd.xlane.f32.xlu0 %v2850
        %v2852 = vpop.xlane.xlu0 %2851
        %v2853 = vadd.f32 %v2818, %v2819
        %2854 = vadd.xlane.f32.xlu0 %v2853
        %v2855 = vpop.xlane.xlu0 %2854
        %v2856 = vadd.f32 %v2820, %v2821
        %2857 = vadd.xlane.f32.xlu0 %v2856
        %v2858 = vpop.xlane.xlu0 %2857
        %v2859 = vadd.f32 %v2822, %v2823
        %2860 = vadd.xlane.f32.xlu0 %v2859
        %v2861 = vpop.xlane.xlu0 %2860
        %v2862 = vadd.f32 %v2824, %v2825
        %2863 = vadd.xlane.f32.xlu0 %v2862
        %v2864 = vpop.xlane.xlu0 %2863
        %v2865 = vadd.f32 %v2826, %v2827
        %2866 = vadd.xlane.f32.xlu0 %v2865
        %v2867 = vpop.xlane.xlu0 %2866
        %v2868 = vadd.f32 %v2828, %v2829
        %2869 = vadd.xlane.f32.xlu0 %v2868
        %v2870 = vpop.xlane.xlu0 %2869
        %v2871 = vadd.f32 %v2830, %v2831
        %2872 = vadd.xlane.f32.xlu0 %v2871
        %v2873 = vpop.xlane.xlu0 %2872
        %v2874 = vadd.f32 %v2832, %v2833
        %2875 = vadd.xlane.f32.xlu0 %v2874
        %v2876 = vpop.xlane.xlu0 %2875
        %v2877 = vadd.f32 %v2834, %v2835
        %2878 = vadd.xlane.f32.xlu0 %v2877
        %v2879 = vpop.xlane.xlu0 %2878
        %v2880 = vadd.f32 %v2836, %v2837
        %2881 = vadd.xlane.f32.xlu0 %v2880
        %v2882 = vpop.xlane.xlu0 %2881
        %v2883 = vadd.f32 %v2838, %v2839
        %2884 = vadd.xlane.f32.xlu0 %v2883
        %v2885 = vpop.xlane.xlu0 %2884
        %v2886 = vadd.f32 %v2840, %v2841
        %2887 = vadd.xlane.f32.xlu0 %v2886
        %v2888 = vpop.xlane.xlu0 %2887
        %v2889 = vadd.f32 %v2842, %v2843
        %2890 = vadd.xlane.f32.xlu0 %v2889
        %v2891 = vpop.xlane.xlu0 %2890
        %v2892 = vadd.f32 %v2844, %v2845
        %2893 = vadd.xlane.f32.xlu0 %v2892
        %v2894 = vpop.xlane.xlu0 %2893
        %v2895 = vadd.f32 %v2846, %v2847
        %2896 = vadd.xlane.f32.xlu0 %v2895
        %v2897 = vpop.xlane.xlu0 %2896
        %v2898 = vrcp.pop 256.0
        %v2899 = vmul.f32 256.0, %v2898
        %v2900 = vsub.f32 1.0, %v2899
        %v2901 = vmul.f32 %v2898, %v2900
        %v2902 = vadd.f32 %v2898, %v2901
        %vm2903 = vweird.f32 %v2898
        %v2904 = vsel %vm2903, %v2898, %v2902
        %v2905 = vmul.f32 %v2852, %v2904
        %v2906 = vmul.f32 %v2855, %v2904
        %v2907 = vmul.f32 %v2858, %v2904
        %v2908 = vmul.f32 %v2861, %v2904
        %v2909 = vmul.f32 %v2864, %v2904
        %v2910 = vmul.f32 %v2867, %v2904
        %v2911 = vmul.f32 %v2870, %v2904
        %v2912 = vmul.f32 %v2873, %v2904
        %v2913 = vmul.f32 %v2876, %v2904
        %v2914 = vmul.f32 %v2879, %v2904
        %v2915 = vmul.f32 %v2882, %v2904
        %v2916 = vmul.f32 %v2885, %v2904
        %v2917 = vmul.f32 %v2888, %v2904
        %v2918 = vmul.f32 %v2891, %v2904
        %v2919 = vmul.f32 %v2894, %v2904
        %v2920 = vmul.f32 %v2897, %v2904
        %v2921 = vmul.f32 %v2816, %v2816
        %v2922 = vmul.f32 %v2817, %v2817
        %v2923 = vmul.f32 %v2818, %v2818
        %v2924 = vmul.f32 %v2819, %v2819
        %v2925 = vmul.f32 %v2820, %v2820
        %v2926 = vmul.f32 %v2821, %v2821
        %v2927 = vmul.f32 %v2822, %v2822
        %v2928 = vmul.f32 %v2823, %v2823
        %v2929 = vmul.f32 %v2824, %v2824
        %v2930 = vmul.f32 %v2825, %v2825
        %v2931 = vmul.f32 %v2826, %v2826
        %v2932 = vmul.f32 %v2827, %v2827
        %v2933 = vmul.f32 %v2828, %v2828
        %v2934 = vmul.f32 %v2829, %v2829
        %v2935 = vmul.f32 %v2830, %v2830
        %v2936 = vmul.f32 %v2831, %v2831
        %v2937 = vmul.f32 %v2832, %v2832
        %v2938 = vmul.f32 %v2833, %v2833
        %v2939 = vmul.f32 %v2834, %v2834
        %v2940 = vmul.f32 %v2835, %v2835
        %v2941 = vmul.f32 %v2836, %v2836
        %v2942 = vmul.f32 %v2837, %v2837
        %v2943 = vmul.f32 %v2838, %v2838
        %v2944 = vmul.f32 %v2839, %v2839
        %v2945 = vmul.f32 %v2840, %v2840
        %v2946 = vmul.f32 %v2841, %v2841
        %v2947 = vmul.f32 %v2842, %v2842
        %v2948 = vmul.f32 %v2843, %v2843
        %v2949 = vmul.f32 %v2844, %v2844
        %v2950 = vmul.f32 %v2845, %v2845
        %v2951 = vmul.f32 %v2846, %v2846
        %v2952 = vmul.f32 %v2847, %v2847
        %v2953 = vadd.f32 %v2921, %v2922
        %2954 = vadd.xlane.f32.xlu0 %v2953
        %v2955 = vpop.xlane.xlu0 %2954
        %v2956 = vadd.f32 %v2923, %v2924
        %2957 = vadd.xlane.f32.xlu0 %v2956
        %v2958 = vpop.xlane.xlu0 %2957
        %v2959 = vadd.f32 %v2925, %v2926
        %2960 = vadd.xlane.f32.xlu0 %v2959
        %v2961 = vpop.xlane.xlu0 %2960
        %v2962 = vadd.f32 %v2927, %v2928
        %2963 = vadd.xlane.f32.xlu0 %v2962
        %v2964 = vpop.xlane.xlu0 %2963
        %v2965 = vadd.f32 %v2929, %v2930
        %2966 = vadd.xlane.f32.xlu0 %v2965
        %v2967 = vpop.xlane.xlu0 %2966
        %v2968 = vadd.f32 %v2931, %v2932
        %2969 = vadd.xlane.f32.xlu0 %v2968
        %v2970 = vpop.xlane.xlu0 %2969
        %v2971 = vadd.f32 %v2933, %v2934
        %2972 = vadd.xlane.f32.xlu0 %v2971
        %v2973 = vpop.xlane.xlu0 %2972
        %v2974 = vadd.f32 %v2935, %v2936
        %2975 = vadd.xlane.f32.xlu0 %v2974
        %v2976 = vpop.xlane.xlu0 %2975
        %v2977 = vadd.f32 %v2937, %v2938
        %2978 = vadd.xlane.f32.xlu0 %v2977
        %v2979 = vpop.xlane.xlu0 %2978
        %v2980 = vadd.f32 %v2939, %v2940
        %2981 = vadd.xlane.f32.xlu0 %v2980
        %v2982 = vpop.xlane.xlu0 %2981
        %v2983 = vadd.f32 %v2941, %v2942
        %2984 = vadd.xlane.f32.xlu0 %v2983
        %v2985 = vpop.xlane.xlu0 %2984
        %v2986 = vadd.f32 %v2943, %v2944
        %2987 = vadd.xlane.f32.xlu0 %v2986
        %v2988 = vpop.xlane.xlu0 %2987
        %v2989 = vadd.f32 %v2945, %v2946
        %2990 = vadd.xlane.f32.xlu0 %v2989
        %v2991 = vpop.xlane.xlu0 %2990
        %v2992 = vadd.f32 %v2947, %v2948
        %2993 = vadd.xlane.f32.xlu0 %v2992
        %v2994 = vpop.xlane.xlu0 %2993
        %v2995 = vadd.f32 %v2949, %v2950
        %2996 = vadd.xlane.f32.xlu0 %v2995
        %v2997 = vpop.xlane.xlu0 %2996
        %v2998 = vadd.f32 %v2951, %v2952
        %2999 = vadd.xlane.f32.xlu0 %v2998
        %v3000 = vpop.xlane.xlu0 %2999
        %v3001 = vmul.f32 %v2955, %v2904
        %v3002 = vmul.f32 %v2958, %v2904
        %v3003 = vmul.f32 %v2961, %v2904
        %v3004 = vmul.f32 %v2964, %v2904
        %v3005 = vmul.f32 %v2967, %v2904
        %v3006 = vmul.f32 %v2970, %v2904
        %v3007 = vmul.f32 %v2973, %v2904
        %v3008 = vmul.f32 %v2976, %v2904
        %v3009 = vmul.f32 %v2979, %v2904
        %v3010 = vmul.f32 %v2982, %v2904
        %v3011 = vmul.f32 %v2985, %v2904
        %v3012 = vmul.f32 %v2988, %v2904
        %v3013 = vmul.f32 %v2991, %v2904
        %v3014 = vmul.f32 %v2994, %v2904
        %v3015 = vmul.f32 %v2997, %v2904
        %v3016 = vmul.f32 %v3000, %v2904
        %v3017 = vmul.f32 %v2905, %v2905
        %v3018 = vmul.f32 %v2906, %v2906
        %v3019 = vmul.f32 %v2907, %v2907
        %v3020 = vmul.f32 %v2908, %v2908
        %v3021 = vmul.f32 %v2909, %v2909
        %v3022 = vmul.f32 %v2910, %v2910
        %v3023 = vmul.f32 %v2911, %v2911
        %v3024 = vmul.f32 %v2912, %v2912
        %v3025 = vmul.f32 %v2913, %v2913
        %v3026 = vmul.f32 %v2914, %v2914
        %v3027 = vmul.f32 %v2915, %v2915
        %v3028 = vmul.f32 %v2916, %v2916
        %v3029 = vmul.f32 %v2917, %v2917
        %v3030 = vmul.f32 %v2918, %v2918
        %v3031 = vmul.f32 %v2919, %v2919
        %v3032 = vmul.f32 %v2920, %v2920
        %v3033 = vsub.f32 %v3001, %v3017
        %v3034 = vsub.f32 %v3002, %v3018
        %v3035 = vsub.f32 %v3003, %v3019
        %v3036 = vsub.f32 %v3004, %v3020
        %v3037 = vsub.f32 %v3005, %v3021
        %v3038 = vsub.f32 %v3006, %v3022
        %v3039 = vsub.f32 %v3007, %v3023
        %v3040 = vsub.f32 %v3008, %v3024
        %v3041 = vsub.f32 %v3009, %v3025
        %v3042 = vsub.f32 %v3010, %v3026
        %v3043 = vsub.f32 %v3011, %v3027
        %v3044 = vsub.f32 %v3012, %v3028
        %v3045 = vsub.f32 %v3013, %v3029
        %v3046 = vsub.f32 %v3014, %v3030
        %v3047 = vsub.f32 %v3015, %v3031
        %v3048 = vsub.f32 %v3016, %v3032
        %v3049 = vmax.f32 %v3033, 0.0
        %v3050 = vmax.f32 %v3034, 0.0
        %v3051 = vmax.f32 %v3035, 0.0
        %v3052 = vmax.f32 %v3036, 0.0
        %v3053 = vmax.f32 %v3037, 0.0
        %v3054 = vmax.f32 %v3038, 0.0
        %v3055 = vmax.f32 %v3039, 0.0
        %v3056 = vmax.f32 %v3040, 0.0
        %v3057 = vmax.f32 %v3041, 0.0
        %v3058 = vmax.f32 %v3042, 0.0
        %v3059 = vmax.f32 %v3043, 0.0
        %v3060 = vmax.f32 %v3044, 0.0
        %v3061 = vmax.f32 %v3045, 0.0
        %v3062 = vmax.f32 %v3046, 0.0
        %v3063 = vmax.f32 %v3047, 0.0
        %v3064 = vmax.f32 %v3048, 0.0
        %v3065 = vsub.f32 %v2816, %v2905
        %v3066 = vsub.f32 %v2817, %v2905
        %v3067 = vsub.f32 %v2818, %v2906
        %v3068 = vsub.f32 %v2819, %v2906
        %v3069 = vsub.f32 %v2820, %v2907
        %v3070 = vsub.f32 %v2821, %v2907
        %v3071 = vsub.f32 %v2822, %v2908
        %v3072 = vsub.f32 %v2823, %v2908
        %v3073 = vsub.f32 %v2824, %v2909
        %v3074 = vsub.f32 %v2825, %v2909
        %v3075 = vsub.f32 %v2826, %v2910
        %v3076 = vsub.f32 %v2827, %v2910
        %v3077 = vsub.f32 %v2828, %v2911
        %v3078 = vsub.f32 %v2829, %v2911
        %v3079 = vsub.f32 %v2830, %v2912
        %v3080 = vsub.f32 %v2831, %v2912
        %v3081 = vsub.f32 %v2832, %v2913
        %v3082 = vsub.f32 %v2833, %v2913
        %v3083 = vsub.f32 %v2834, %v2914
        %v3084 = vsub.f32 %v2835, %v2914
        %v3085 = vsub.f32 %v2836, %v2915
        %v3086 = vsub.f32 %v2837, %v2915
        %v3087 = vsub.f32 %v2838, %v2916
        %v3088 = vsub.f32 %v2839, %v2916
        %v3089 = vsub.f32 %v2840, %v2917
        %v3090 = vsub.f32 %v2841, %v2917
        %v3091 = vsub.f32 %v2842, %v2918
        %v3092 = vsub.f32 %v2843, %v2918
        %v3093 = vsub.f32 %v2844, %v2919
        %v3094 = vsub.f32 %v2845, %v2919
        %v3095 = vsub.f32 %v2846, %v2920
        %v3096 = vsub.f32 %v2847, %v2920
        %v3097 = vadd.f32 %v3049, 1e-05
        %v3098 = vadd.f32 %v3050, 1e-05
        %v3099 = vadd.f32 %v3051, 1e-05
        %v3100 = vadd.f32 %v3052, 1e-05
        %v3101 = vadd.f32 %v3053, 1e-05
        %v3102 = vadd.f32 %v3054, 1e-05
        %v3103 = vadd.f32 %v3055, 1e-05
        %v3104 = vadd.f32 %v3056, 1e-05
        %v3105 = vadd.f32 %v3057, 1e-05
        %v3106 = vadd.f32 %v3058, 1e-05
        %v3107 = vadd.f32 %v3059, 1e-05
        %v3108 = vadd.f32 %v3060, 1e-05
        %v3109 = vadd.f32 %v3061, 1e-05
        %v3110 = vadd.f32 %v3062, 1e-05
        %v3111 = vadd.f32 %v3063, 1e-05
        %v3112 = vadd.f32 %v3064, 1e-05
        %v3113 = vrsqrt.pop %v3097
        %v3114 = vmul.f32 %v3113, %v3097
        %v3115 = vmul.f32 %v3114, %v3113
        %v3116 = vmul.f32 0.5, %v3115
        %v3117 = vsub.f32 1.5, %v3116
        %v3118 = vmul.f32 %v3113, %v3117
        %vm3119 = vweird.f32 %v3097
        %vm3120 = vweird.f32 %v3113
        %vm3121 = vmor %vm3119, %vm3120
        %v3122 = vsel %vm3121, %v3113, %v3118
        %v3123 = vrsqrt.pop %v3098
        %v3124 = vmul.f32 %v3123, %v3098
        %v3125 = vmul.f32 %v3124, %v3123
        %v3126 = vmul.f32 0.5, %v3125
        %v3127 = vsub.f32 1.5, %v3126
        %v3128 = vmul.f32 %v3123, %v3127
        %vm3129 = vweird.f32 %v3098
        %vm3130 = vweird.f32 %v3123
        %vm3131 = vmor %vm3129, %vm3130
        %v3132 = vsel %vm3131, %v3123, %v3128
        %v3133 = vrsqrt.pop %v3099
        %v3134 = vmul.f32 %v3133, %v3099
        %v3135 = vmul.f32 %v3134, %v3133
        %v3136 = vmul.f32 0.5, %v3135
        %v3137 = vsub.f32 1.5, %v3136
        %v3138 = vmul.f32 %v3133, %v3137
        %vm3139 = vweird.f32 %v3099
        %vm3140 = vweird.f32 %v3133
        %vm3141 = vmor %vm3139, %vm3140
        %v3142 = vsel %vm3141, %v3133, %v3138
        %v3143 = vrsqrt.pop %v3100
        %v3144 = vmul.f32 %v3143, %v3100
        %v3145 = vmul.f32 %v3144, %v3143
        %v3146 = vmul.f32 0.5, %v3145
        %v3147 = vsub.f32 1.5, %v3146
        %v3148 = vmul.f32 %v3143, %v3147
        %vm3149 = vweird.f32 %v3100
        %vm3150 = vweird.f32 %v3143
        %vm3151 = vmor %vm3149, %vm3150
        %v3152 = vsel %vm3151, %v3143, %v3148
        %v3153 = vrsqrt.pop %v3101
        %v3154 = vmul.f32 %v3153, %v3101
        %v3155 = vmul.f32 %v3154, %v3153
        %v3156 = vmul.f32 0.5, %v3155
        %v3157 = vsub.f32 1.5, %v3156
        %v3158 = vmul.f32 %v3153, %v3157
        %vm3159 = vweird.f32 %v3101
        %vm3160 = vweird.f32 %v3153
        %vm3161 = vmor %vm3159, %vm3160
        %v3162 = vsel %vm3161, %v3153, %v3158
        %v3163 = vrsqrt.pop %v3102
        %v3164 = vmul.f32 %v3163, %v3102
        %v3165 = vmul.f32 %v3164, %v3163
        %v3166 = vmul.f32 0.5, %v3165
        %v3167 = vsub.f32 1.5, %v3166
        %v3168 = vmul.f32 %v3163, %v3167
        %vm3169 = vweird.f32 %v3102
        %vm3170 = vweird.f32 %v3163
        %vm3171 = vmor %vm3169, %vm3170
        %v3172 = vsel %vm3171, %v3163, %v3168
        %v3173 = vrsqrt.pop %v3103
        %v3174 = vmul.f32 %v3173, %v3103
        %v3175 = vmul.f32 %v3174, %v3173
        %v3176 = vmul.f32 0.5, %v3175
        %v3177 = vsub.f32 1.5, %v3176
        %v3178 = vmul.f32 %v3173, %v3177
        %vm3179 = vweird.f32 %v3103
        %vm3180 = vweird.f32 %v3173
        %vm3181 = vmor %vm3179, %vm3180
        %v3182 = vsel %vm3181, %v3173, %v3178
        %v3183 = vrsqrt.pop %v3104
        %v3184 = vmul.f32 %v3183, %v3104
        %v3185 = vmul.f32 %v3184, %v3183
        %v3186 = vmul.f32 0.5, %v3185
        %v3187 = vsub.f32 1.5, %v3186
        %v3188 = vmul.f32 %v3183, %v3187
        %vm3189 = vweird.f32 %v3104
        %vm3190 = vweird.f32 %v3183
        %vm3191 = vmor %vm3189, %vm3190
        %v3192 = vsel %vm3191, %v3183, %v3188
        %v3193 = vrsqrt.pop %v3105
        %v3194 = vmul.f32 %v3193, %v3105
        %v3195 = vmul.f32 %v3194, %v3193
        %v3196 = vmul.f32 0.5, %v3195
        %v3197 = vsub.f32 1.5, %v3196
        %v3198 = vmul.f32 %v3193, %v3197
        %vm3199 = vweird.f32 %v3105
        %vm3200 = vweird.f32 %v3193
        %vm3201 = vmor %vm3199, %vm3200
        %v3202 = vsel %vm3201, %v3193, %v3198
        %v3203 = vrsqrt.pop %v3106
        %v3204 = vmul.f32 %v3203, %v3106
        %v3205 = vmul.f32 %v3204, %v3203
        %v3206 = vmul.f32 0.5, %v3205
        %v3207 = vsub.f32 1.5, %v3206
        %v3208 = vmul.f32 %v3203, %v3207
        %vm3209 = vweird.f32 %v3106
        %vm3210 = vweird.f32 %v3203
        %vm3211 = vmor %vm3209, %vm3210
        %v3212 = vsel %vm3211, %v3203, %v3208
        %v3213 = vrsqrt.pop %v3107
        %v3214 = vmul.f32 %v3213, %v3107
        %v3215 = vmul.f32 %v3214, %v3213
        %v3216 = vmul.f32 0.5, %v3215
        %v3217 = vsub.f32 1.5, %v3216
        %v3218 = vmul.f32 %v3213, %v3217
        %vm3219 = vweird.f32 %v3107
        %vm3220 = vweird.f32 %v3213
        %vm3221 = vmor %vm3219, %vm3220
        %v3222 = vsel %vm3221, %v3213, %v3218
        %v3223 = vrsqrt.pop %v3108
        %v3224 = vmul.f32 %v3223, %v3108
        %v3225 = vmul.f32 %v3224, %v3223
        %v3226 = vmul.f32 0.5, %v3225
        %v3227 = vsub.f32 1.5, %v3226
        %v3228 = vmul.f32 %v3223, %v3227
        %vm3229 = vweird.f32 %v3108
        %vm3230 = vweird.f32 %v3223
        %vm3231 = vmor %vm3229, %vm3230
        %v3232 = vsel %vm3231, %v3223, %v3228
        %v3233 = vrsqrt.pop %v3109
        %v3234 = vmul.f32 %v3233, %v3109
        %v3235 = vmul.f32 %v3234, %v3233
        %v3236 = vmul.f32 0.5, %v3235
        %v3237 = vsub.f32 1.5, %v3236
        %v3238 = vmul.f32 %v3233, %v3237
        %vm3239 = vweird.f32 %v3109
        %vm3240 = vweird.f32 %v3233
        %vm3241 = vmor %vm3239, %vm3240
        %v3242 = vsel %vm3241, %v3233, %v3238
        %v3243 = vrsqrt.pop %v3110
        %v3244 = vmul.f32 %v3243, %v3110
        %v3245 = vmul.f32 %v3244, %v3243
        %v3246 = vmul.f32 0.5, %v3245
        %v3247 = vsub.f32 1.5, %v3246
        %v3248 = vmul.f32 %v3243, %v3247
        %vm3249 = vweird.f32 %v3110
        %vm3250 = vweird.f32 %v3243
        %vm3251 = vmor %vm3249, %vm3250
        %v3252 = vsel %vm3251, %v3243, %v3248
        %v3253 = vrsqrt.pop %v3111
        %v3254 = vmul.f32 %v3253, %v3111
        %v3255 = vmul.f32 %v3254, %v3253
        %v3256 = vmul.f32 0.5, %v3255
        %v3257 = vsub.f32 1.5, %v3256
        %v3258 = vmul.f32 %v3253, %v3257
        %vm3259 = vweird.f32 %v3111
        %vm3260 = vweird.f32 %v3253
        %vm3261 = vmor %vm3259, %vm3260
        %v3262 = vsel %vm3261, %v3253, %v3258
        %v3263 = vrsqrt.pop %v3112
        %v3264 = vmul.f32 %v3263, %v3112
        %v3265 = vmul.f32 %v3264, %v3263
        %v3266 = vmul.f32 0.5, %v3265
        %v3267 = vsub.f32 1.5, %v3266
        %v3268 = vmul.f32 %v3263, %v3267
        %vm3269 = vweird.f32 %v3112
        %vm3270 = vweird.f32 %v3263
        %vm3271 = vmor %vm3269, %vm3270
        %v3272 = vsel %vm3271, %v3263, %v3268
        %v3273 = vmul.f32 %v3065, %v3122
        %v3274 = vmul.f32 %v3066, %v3122
        %v3275 = vmul.f32 %v3067, %v3132
        %v3276 = vmul.f32 %v3068, %v3132
        %v3277 = vmul.f32 %v3069, %v3142
        %v3278 = vmul.f32 %v3070, %v3142
        %v3279 = vmul.f32 %v3071, %v3152
        %v3280 = vmul.f32 %v3072, %v3152
        %v3281 = vmul.f32 %v3073, %v3162
        %v3282 = vmul.f32 %v3074, %v3162
        %v3283 = vmul.f32 %v3075, %v3172
        %v3284 = vmul.f32 %v3076, %v3172
        %v3285 = vmul.f32 %v3077, %v3182
        %v3286 = vmul.f32 %v3078, %v3182
        %v3287 = vmul.f32 %v3079, %v3192
        %v3288 = vmul.f32 %v3080, %v3192
        %v3289 = vmul.f32 %v3081, %v3202
        %v3290 = vmul.f32 %v3082, %v3202
        %v3291 = vmul.f32 %v3083, %v3212
        %v3292 = vmul.f32 %v3084, %v3212
        %v3293 = vmul.f32 %v3085, %v3222
        %v3294 = vmul.f32 %v3086, %v3222
        %v3295 = vmul.f32 %v3087, %v3232
        %v3296 = vmul.f32 %v3088, %v3232
        %v3297 = vmul.f32 %v3089, %v3242
        %v3298 = vmul.f32 %v3090, %v3242
        %v3299 = vmul.f32 %v3091, %v3252
        %v3300 = vmul.f32 %v3092, %v3252
        %v3301 = vmul.f32 %v3093, %v3262
        %v3302 = vmul.f32 %v3094, %v3262
        %v3303 = vmul.f32 %v3095, %v3272
        %v3304 = vmul.f32 %v3096, %v3272
        %v3306 = vperm.slane %v2848, 0
        %v3307 = vperm.slane %v2848, 1
        %v3310 = vmul.f32 %v3273, %v3306
        %v3311 = vmul.f32 %v3274, %v3307
        %v3312 = vmul.f32 %v3275, %v3306
        %v3313 = vmul.f32 %v3276, %v3307
        %v3314 = vmul.f32 %v3277, %v3306
        %v3315 = vmul.f32 %v3278, %v3307
        %v3316 = vmul.f32 %v3279, %v3306
        %v3317 = vmul.f32 %v3280, %v3307
        %v3318 = vmul.f32 %v3281, %v3306
        %v3319 = vmul.f32 %v3282, %v3307
        %v3320 = vmul.f32 %v3283, %v3306
        %v3321 = vmul.f32 %v3284, %v3307
        %v3322 = vmul.f32 %v3285, %v3306
        %v3323 = vmul.f32 %v3286, %v3307
        %v3324 = vmul.f32 %v3287, %v3306
        %v3325 = vmul.f32 %v3288, %v3307
        %v3326 = vmul.f32 %v3289, %v3306
        %v3327 = vmul.f32 %v3290, %v3307
        %v3328 = vmul.f32 %v3291, %v3306
        %v3329 = vmul.f32 %v3292, %v3307
        %v3330 = vmul.f32 %v3293, %v3306
        %v3331 = vmul.f32 %v3294, %v3307
        %v3332 = vmul.f32 %v3295, %v3306
        %v3333 = vmul.f32 %v3296, %v3307
        %v3334 = vmul.f32 %v3297, %v3306
        %v3335 = vmul.f32 %v3298, %v3307
        %v3336 = vmul.f32 %v3299, %v3306
        %v3337 = vmul.f32 %v3300, %v3307
        %v3338 = vmul.f32 %v3301, %v3306
        %v3339 = vmul.f32 %v3302, %v3307
        %v3340 = vmul.f32 %v3303, %v3306
        %v3341 = vmul.f32 %v3304, %v3307
        %v3343 = vperm.slane %v2849, 0
        %v3344 = vperm.slane %v2849, 1
        %v3347 = vadd.f32 %v3310, %v3343
        %v3348 = vadd.f32 %v3311, %v3344
        %v3349 = vadd.f32 %v3312, %v3343
        %v3350 = vadd.f32 %v3313, %v3344
        %v3351 = vadd.f32 %v3314, %v3343
        %v3352 = vadd.f32 %v3315, %v3344
        %v3353 = vadd.f32 %v3316, %v3343
        %v3354 = vadd.f32 %v3317, %v3344
        %v3355 = vadd.f32 %v3318, %v3343
        %v3356 = vadd.f32 %v3319, %v3344
        %v3357 = vadd.f32 %v3320, %v3343
        %v3358 = vadd.f32 %v3321, %v3344
        %v3359 = vadd.f32 %v3322, %v3343
        %v3360 = vadd.f32 %v3323, %v3344
        %v3361 = vadd.f32 %v3324, %v3343
        %v3362 = vadd.f32 %v3325, %v3344
        %v3363 = vadd.f32 %v3326, %v3343
        %v3364 = vadd.f32 %v3327, %v3344
        %v3365 = vadd.f32 %v3328, %v3343
        %v3366 = vadd.f32 %v3329, %v3344
        %v3367 = vadd.f32 %v3330, %v3343
        %v3368 = vadd.f32 %v3331, %v3344
        %v3369 = vadd.f32 %v3332, %v3343
        %v3370 = vadd.f32 %v3333, %v3344
        %v3371 = vadd.f32 %v3334, %v3343
        %v3372 = vadd.f32 %v3335, %v3344
        %v3373 = vadd.f32 %v3336, %v3343
        %v3374 = vadd.f32 %v3337, %v3344
        %v3375 = vadd.f32 %v3338, %v3343
        %v3376 = vadd.f32 %v3339, %v3344
        %v3377 = vadd.f32 %v3340, %v3343
        %v3378 = vadd.f32 %v3341, %v3344
        %v3379 = vpack.c.bf16 %v3349, %v3347
        %v3380 = vpack.c.bf16 %v3350, %v3348
        %v3381 = vpack.c.bf16 %v3353, %v3351
        %v3382 = vpack.c.bf16 %v3354, %v3352
        %v3383 = vpack.c.bf16 %v3357, %v3355
        %v3384 = vpack.c.bf16 %v3358, %v3356
        %v3385 = vpack.c.bf16 %v3361, %v3359
        %v3386 = vpack.c.bf16 %v3362, %v3360
        %v3387 = vpack.c.bf16 %v3365, %v3363
        %v3388 = vpack.c.bf16 %v3366, %v3364
        %v3389 = vpack.c.bf16 %v3369, %v3367
        %v3390 = vpack.c.bf16 %v3370, %v3368
        %v3391 = vpack.c.bf16 %v3373, %v3371
        %v3392 = vpack.c.bf16 %v3374, %v3372
        %v3393 = vpack.c.bf16 %v3377, %v3375
        %v3394 = vpack.c.bf16 %v3378, %v3376
        %v3395 = vld [vmem:[#allocation10] sm:$0xff]
        %v3396 = vld [vmem:[#allocation10 + $0x8] sm:$0xff]
        %v3397 = vld [vmem:[#allocation10 + $0x10] sm:$0xff]
        %v3398 = vld [vmem:[#allocation10 + $0x18] sm:$0xff]
        %v3399 = vld [vmem:[#allocation10 + $0x20] sm:$0xff]
        %v3400 = vld [vmem:[#allocation10 + $0x28] sm:$0xff]
        %v3401 = vld [vmem:[#allocation10 + $0x30] sm:$0xff]
        %v3402 = vld [vmem:[#allocation10 + $0x38] sm:$0xff]
        %v3403 = vld [vmem:[#allocation10 + $0x40] sm:$0xff]
        %v3404 = vld [vmem:[#allocation10 + $0x48] sm:$0xff]
        %v3405 = vld [vmem:[#allocation10 + $0x50] sm:$0xff]
        %v3406 = vld [vmem:[#allocation10 + $0x58] sm:$0xff]
        %v3407 = vld [vmem:[#allocation10 + $0x60] sm:$0xff]
        %v3408 = vld [vmem:[#allocation10 + $0x68] sm:$0xff]
        %v3409 = vld [vmem:[#allocation10 + $0x70] sm:$0xff]
        %v3410 = vld [vmem:[#allocation10 + $0x78] sm:$0xff]
        %v3411 = vld [vmem:[#allocation10 + $0x80] sm:$0xff]
        %v3412 = vld [vmem:[#allocation10 + $0x88] sm:$0xff]
        %v3413 = vld [vmem:[#allocation10 + $0x90] sm:$0xff]
        %v3414 = vld [vmem:[#allocation10 + $0x98] sm:$0xff]
        %v3415 = vld [vmem:[#allocation10 + $0xa0] sm:$0xff]
        %v3416 = vld [vmem:[#allocation10 + $0xa8] sm:$0xff]
        %v3417 = vld [vmem:[#allocation10 + $0xb0] sm:$0xff]
        %v3418 = vld [vmem:[#allocation10 + $0xb8] sm:$0xff]
        %v3419 = vld [vmem:[#allocation10 + $0xc0] sm:$0xff]
        %v3420 = vld [vmem:[#allocation10 + $0xc8] sm:$0xff]
        %v3421 = vld [vmem:[#allocation10 + $0xd0] sm:$0xff]
        %v3422 = vld [vmem:[#allocation10 + $0xd8] sm:$0xff]
        %v3423 = vld [vmem:[#allocation10 + $0xe0] sm:$0xff]
        %v3424 = vld [vmem:[#allocation10 + $0xe8] sm:$0xff]
        %v3425 = vld [vmem:[#allocation10 + $0xf0] sm:$0xff]
        %v3426 = vld [vmem:[#allocation10 + $0xf8] sm:$0xff]
        %v3427 = vld [vmem:[#allocation10 + $0x100] sm:$0xff]
        %v3428 = vld [vmem:[#allocation10 + $0x108] sm:$0xff]
        %v3429 = vld [vmem:[#allocation10 + $0x110] sm:$0xff]
        %v3430 = vld [vmem:[#allocation10 + $0x118] sm:$0xff]
        %v3431 = vld [vmem:[#allocation10 + $0x120] sm:$0xff]
        %v3432 = vld [vmem:[#allocation10 + $0x128] sm:$0xff]
        %v3433 = vld [vmem:[#allocation10 + $0x130] sm:$0xff]
        %v3434 = vld [vmem:[#allocation10 + $0x138] sm:$0xff]
        %v3435 = vld [vmem:[#allocation10 + $0x140] sm:$0xff]
        %v3436 = vld [vmem:[#allocation10 + $0x148] sm:$0xff]
        %v3437 = vld [vmem:[#allocation10 + $0x150] sm:$0xff]
        %v3438 = vld [vmem:[#allocation10 + $0x158] sm:$0xff]
        %v3439 = vld [vmem:[#allocation10 + $0x160] sm:$0xff]
        %v3440 = vld [vmem:[#allocation10 + $0x168] sm:$0xff]
        %v3441 = vld [vmem:[#allocation10 + $0x170] sm:$0xff]
        %v3442 = vld [vmem:[#allocation10 + $0x178] sm:$0xff]
        %v3443 = vld [vmem:[#allocation10 + $0x180] sm:$0xff]
        %v3444 = vld [vmem:[#allocation10 + $0x188] sm:$0xff]
        %v3445 = vld [vmem:[#allocation10 + $0x190] sm:$0xff]
        %v3446 = vld [vmem:[#allocation10 + $0x198] sm:$0xff]
        %v3447 = vld [vmem:[#allocation10 + $0x1a0] sm:$0xff]
        %v3448 = vld [vmem:[#allocation10 + $0x1a8] sm:$0xff]
        %v3449 = vld [vmem:[#allocation10 + $0x1b0] sm:$0xff]
        %v3450 = vld [vmem:[#allocation10 + $0x1b8] sm:$0xff]
        %v3451 = vld [vmem:[#allocation10 + $0x1c0] sm:$0xff]
        %v3452 = vld [vmem:[#allocation10 + $0x1c8] sm:$0xff]
        %v3453 = vld [vmem:[#allocation10 + $0x1d0] sm:$0xff]
        %v3454 = vld [vmem:[#allocation10 + $0x1d8] sm:$0xff]
        %v3455 = vld [vmem:[#allocation10 + $0x1e0] sm:$0xff]
        %v3456 = vld [vmem:[#allocation10 + $0x1e8] sm:$0xff]
        %v3457 = vld [vmem:[#allocation10 + $0x1f0] sm:$0xff]
        %v3458 = vld [vmem:[#allocation10 + $0x1f8] sm:$0xff]
        %v3459 = vld [vmem:[#allocation11] sm:$0xf]
        %v3461 = vperm.slane %v3459, 0
        %v3462 = vperm.slane %v3459, 1
        %v3463 = vperm.slane %v3459, 2
        %v3464 = vperm.slane %v3459, 3
        %v3533 = vunpack.c.l.b16 %v3395
        %v3534 = vunpack.c.h.b16 %v3395
        %v3535 = vunpack.c.l.b16 %v3396
        %v3536 = vunpack.c.h.b16 %v3396
        %v3537 = vunpack.c.l.b16 %v3397
        %v3538 = vunpack.c.h.b16 %v3397
        %v3539 = vunpack.c.l.b16 %v3398
        %v3540 = vunpack.c.h.b16 %v3398
        %v3541 = vunpack.c.l.b16 %v3399
        %v3542 = vunpack.c.h.b16 %v3399
        %v3543 = vunpack.c.l.b16 %v3400
        %v3544 = vunpack.c.h.b16 %v3400
        %v3545 = vunpack.c.l.b16 %v3401
        %v3546 = vunpack.c.h.b16 %v3401
        %v3547 = vunpack.c.l.b16 %v3402
        %v3548 = vunpack.c.h.b16 %v3402
        %v3549 = vunpack.c.l.b16 %v3403
        %v3550 = vunpack.c.h.b16 %v3403
        %v3551 = vunpack.c.l.b16 %v3404
        %v3552 = vunpack.c.h.b16 %v3404
        %v3553 = vunpack.c.l.b16 %v3405
        %v3554 = vunpack.c.h.b16 %v3405
        %v3555 = vunpack.c.l.b16 %v3406
        %v3556 = vunpack.c.h.b16 %v3406
        %v3557 = vunpack.c.l.b16 %v3407
        %v3558 = vunpack.c.h.b16 %v3407
        %v3559 = vunpack.c.l.b16 %v3408
        %v3560 = vunpack.c.h.b16 %v3408
        %v3561 = vunpack.c.l.b16 %v3409
        %v3562 = vunpack.c.h.b16 %v3409
        %v3563 = vunpack.c.l.b16 %v3410
        %v3564 = vunpack.c.h.b16 %v3410
        %v3565 = vunpack.c.l.b16 %v3411
        %v3566 = vunpack.c.h.b16 %v3411
        %v3567 = vunpack.c.l.b16 %v3412
        %v3568 = vunpack.c.h.b16 %v3412
        %v3569 = vunpack.c.l.b16 %v3413
        %v3570 = vunpack.c.h.b16 %v3413
        %v3571 = vunpack.c.l.b16 %v3414
        %v3572 = vunpack.c.h.b16 %v3414
        %v3573 = vunpack.c.l.b16 %v3415
        %v3574 = vunpack.c.h.b16 %v3415
        %v3575 = vunpack.c.l.b16 %v3416
        %v3576 = vunpack.c.h.b16 %v3416
        %v3577 = vunpack.c.l.b16 %v3417
        %v3578 = vunpack.c.h.b16 %v3417
        %v3579 = vunpack.c.l.b16 %v3418
        %v3580 = vunpack.c.h.b16 %v3418
        %v3581 = vunpack.c.l.b16 %v3419
        %v3582 = vunpack.c.h.b16 %v3419
        %v3583 = vunpack.c.l.b16 %v3420
        %v3584 = vunpack.c.h.b16 %v3420
        %v3585 = vunpack.c.l.b16 %v3421
        %v3586 = vunpack.c.h.b16 %v3421
        %v3587 = vunpack.c.l.b16 %v3422
        %v3588 = vunpack.c.h.b16 %v3422
        %v3589 = vunpack.c.l.b16 %v3423
        %v3590 = vunpack.c.h.b16 %v3423
        %v3591 = vunpack.c.l.b16 %v3424
        %v3592 = vunpack.c.h.b16 %v3424
        %v3593 = vunpack.c.l.b16 %v3425
        %v3594 = vunpack.c.h.b16 %v3425
        %v3595 = vunpack.c.l.b16 %v3426
        %v3596 = vunpack.c.h.b16 %v3426
        %v3597 = vunpack.c.l.b16 %v3427
        %v3598 = vunpack.c.h.b16 %v3427
        %v3599 = vunpack.c.l.b16 %v3428
        %v3600 = vunpack.c.h.b16 %v3428
        %v3601 = vunpack.c.l.b16 %v3429
        %v3602 = vunpack.c.h.b16 %v3429
        %v3603 = vunpack.c.l.b16 %v3430
        %v3604 = vunpack.c.h.b16 %v3430
        %v3605 = vunpack.c.l.b16 %v3431
        %v3606 = vunpack.c.h.b16 %v3431
        %v3607 = vunpack.c.l.b16 %v3432
        %v3608 = vunpack.c.h.b16 %v3432
        %v3609 = vunpack.c.l.b16 %v3433
        %v3610 = vunpack.c.h.b16 %v3433
        %v3611 = vunpack.c.l.b16 %v3434
        %v3612 = vunpack.c.h.b16 %v3434
        %v3613 = vunpack.c.l.b16 %v3435
        %v3614 = vunpack.c.h.b16 %v3435
        %v3615 = vunpack.c.l.b16 %v3436
        %v3616 = vunpack.c.h.b16 %v3436
        %v3617 = vunpack.c.l.b16 %v3437
        %v3618 = vunpack.c.h.b16 %v3437
        %v3619 = vunpack.c.l.b16 %v3438
        %v3620 = vunpack.c.h.b16 %v3438
        %v3621 = vunpack.c.l.b16 %v3439
        %v3622 = vunpack.c.h.b16 %v3439
        %v3623 = vunpack.c.l.b16 %v3440
        %v3624 = vunpack.c.h.b16 %v3440
        %v3625 = vunpack.c.l.b16 %v3441
        %v3626 = vunpack.c.h.b16 %v3441
        %v3627 = vunpack.c.l.b16 %v3442
        %v3628 = vunpack.c.h.b16 %v3442
        %v3629 = vunpack.c.l.b16 %v3443
        %v3630 = vunpack.c.h.b16 %v3443
        %v3631 = vunpack.c.l.b16 %v3444
        %v3632 = vunpack.c.h.b16 %v3444
        %v3633 = vunpack.c.l.b16 %v3445
        %v3634 = vunpack.c.h.b16 %v3445
        %v3635 = vunpack.c.l.b16 %v3446
        %v3636 = vunpack.c.h.b16 %v3446
        %v3637 = vunpack.c.l.b16 %v3447
        %v3638 = vunpack.c.h.b16 %v3447
        %v3639 = vunpack.c.l.b16 %v3448
        %v3640 = vunpack.c.h.b16 %v3448
        %v3641 = vunpack.c.l.b16 %v3449
        %v3642 = vunpack.c.h.b16 %v3449
        %v3643 = vunpack.c.l.b16 %v3450
        %v3644 = vunpack.c.h.b16 %v3450
        %v3645 = vunpack.c.l.b16 %v3451
        %v3646 = vunpack.c.h.b16 %v3451
        %v3647 = vunpack.c.l.b16 %v3452
        %v3648 = vunpack.c.h.b16 %v3452
        %v3649 = vunpack.c.l.b16 %v3453
        %v3650 = vunpack.c.h.b16 %v3453
        %v3651 = vunpack.c.l.b16 %v3454
        %v3652 = vunpack.c.h.b16 %v3454
        %v3653 = vunpack.c.l.b16 %v3455
        %v3654 = vunpack.c.h.b16 %v3455
        %v3655 = vunpack.c.l.b16 %v3456
        %v3656 = vunpack.c.h.b16 %v3456
        %v3657 = vunpack.c.l.b16 %v3457
        %v3658 = vunpack.c.h.b16 %v3457
        %v3659 = vunpack.c.l.b16 %v3458
        %v3660 = vunpack.c.h.b16 %v3458
        %v3661 = vpack.c.b16 %v3537, %v3533
        %v3662 = vpack.c.b16 %v3538, %v3534
        %v3663 = vpack.c.b16 %v3539, %v3535
        %v3664 = vpack.c.b16 %v3540, %v3536
        %v3665 = vpack.c.b16 %v3545, %v3541
        %v3666 = vpack.c.b16 %v3546, %v3542
        %v3667 = vpack.c.b16 %v3547, %v3543
        %v3668 = vpack.c.b16 %v3548, %v3544
        %v3669 = vpack.c.b16 %v3553, %v3549
        %v3670 = vpack.c.b16 %v3554, %v3550
        %v3671 = vpack.c.b16 %v3555, %v3551
        %v3672 = vpack.c.b16 %v3556, %v3552
        %v3673 = vpack.c.b16 %v3561, %v3557
        %v3674 = vpack.c.b16 %v3562, %v3558
        %v3675 = vpack.c.b16 %v3563, %v3559
        %v3676 = vpack.c.b16 %v3564, %v3560
        %v3677 = vpack.c.b16 %v3569, %v3565
        %v3678 = vpack.c.b16 %v3570, %v3566
        %v3679 = vpack.c.b16 %v3571, %v3567
        %v3680 = vpack.c.b16 %v3572, %v3568
        %v3681 = vpack.c.b16 %v3577, %v3573
        %v3682 = vpack.c.b16 %v3578, %v3574
        %v3683 = vpack.c.b16 %v3579, %v3575
        %v3684 = vpack.c.b16 %v3580, %v3576
        %v3685 = vpack.c.b16 %v3585, %v3581
        %v3686 = vpack.c.b16 %v3586, %v3582
        %v3687 = vpack.c.b16 %v3587, %v3583
        %v3688 = vpack.c.b16 %v3588, %v3584
        %v3689 = vpack.c.b16 %v3593, %v3589
        %v3690 = vpack.c.b16 %v3594, %v3590
        %v3691 = vpack.c.b16 %v3595, %v3591
        %v3692 = vpack.c.b16 %v3596, %v3592
        %v3693 = vpack.c.b16 %v3601, %v3597
        %v3694 = vpack.c.b16 %v3602, %v3598
        %v3695 = vpack.c.b16 %v3603, %v3599
        %v3696 = vpack.c.b16 %v3604, %v3600
        %v3697 = vpack.c.b16 %v3609, %v3605
        %v3698 = vpack.c.b16 %v3610, %v3606
        %v3699 = vpack.c.b16 %v3611, %v3607
        %v3700 = vpack.c.b16 %v3612, %v3608
        %v3701 = vpack.c.b16 %v3617, %v3613
        %v3702 = vpack.c.b16 %v3618, %v3614
        %v3703 = vpack.c.b16 %v3619, %v3615
        %v3704 = vpack.c.b16 %v3620, %v3616
        %v3705 = vpack.c.b16 %v3625, %v3621
        %v3706 = vpack.c.b16 %v3626, %v3622
        %v3707 = vpack.c.b16 %v3627, %v3623
        %v3708 = vpack.c.b16 %v3628, %v3624
        %v3709 = vpack.c.b16 %v3633, %v3629
        %v3710 = vpack.c.b16 %v3634, %v3630
        %v3711 = vpack.c.b16 %v3635, %v3631
        %v3712 = vpack.c.b16 %v3636, %v3632
        %v3713 = vpack.c.b16 %v3641, %v3637
        %v3714 = vpack.c.b16 %v3642, %v3638
        %v3715 = vpack.c.b16 %v3643, %v3639
        %v3716 = vpack.c.b16 %v3644, %v3640
        %v3717 = vpack.c.b16 %v3649, %v3645
        %v3718 = vpack.c.b16 %v3650, %v3646
        %v3719 = vpack.c.b16 %v3651, %v3647
        %v3720 = vpack.c.b16 %v3652, %v3648
        %v3721 = vpack.c.b16 %v3657, %v3653
        %v3722 = vpack.c.b16 %v3658, %v3654
        %v3723 = vpack.c.b16 %v3659, %v3655
        %v3724 = vpack.c.b16 %v3660, %v3656
        %3789 = vmatpush.bf16.msra.mxu0 %v3689
        %3790 = vmatpush.bf16.msra.mxu0 %v3685
        %3791 = vmatpush.bf16.msra.mxu0 %v3681
        %3792 = vmatpush.bf16.msra.mxu0 %v3677
        %3793 = vmatpush.bf16.msra.mxu0 %v3673
        %3794 = vmatpush.bf16.msra.mxu0 %v3669
        %3795 = vmatpush.bf16.msra.mxu0 %v3665
        %3796 = vmatpush.bf16.msra.mxu0 %v3661
        %3797 = vmatmul.bf16.gmra.mxu0 %v3379
        %v3798 = vpop.f32.mrf.mxu0
        %v3799 = vadd.f32 %v3461, %v3798
        %v3800 = vpop.f32.mrf.mxu0
        %v3801 = vadd.f32 %v3461, %v3800
        %3802 = vmatmul.bf16.gmra.mxu0 %v3381
        %v3803 = vpop.f32.mrf.mxu0
        %v3804 = vadd.f32 %v3461, %v3803
        %v3805 = vpop.f32.mrf.mxu0
        %v3806 = vadd.f32 %v3461, %v3805
        %3807 = vmatmul.bf16.gmra.mxu0 %v3383
        %v3808 = vpop.f32.mrf.mxu0
        %v3809 = vadd.f32 %v3461, %v3808
        %v3810 = vpop.f32.mrf.mxu0
        %v3811 = vadd.f32 %v3461, %v3810
        %3812 = vmatmul.bf16.gmra.mxu0 %v3385
        %v3813 = vpop.f32.mrf.mxu0
        %v3814 = vadd.f32 %v3461, %v3813
        %v3815 = vpop.f32.mrf.mxu0
        %v3816 = vadd.f32 %v3461, %v3815
        %3817 = vmatmul.bf16.gmra.mxu0 %v3387
        %v3818 = vpop.f32.mrf.mxu0
        %v3819 = vadd.f32 %v3461, %v3818
        %v3820 = vpop.f32.mrf.mxu0
        %v3821 = vadd.f32 %v3461, %v3820
        %3822 = vmatmul.bf16.gmra.mxu0 %v3389
        %v3823 = vpop.f32.mrf.mxu0
        %v3824 = vadd.f32 %v3461, %v3823
        %v3825 = vpop.f32.mrf.mxu0
        %v3826 = vadd.f32 %v3461, %v3825
        %3827 = vmatmul.bf16.gmra.mxu0 %v3391
        %v3828 = vpop.f32.mrf.mxu0
        %v3829 = vadd.f32 %v3461, %v3828
        %v3830 = vpop.f32.mrf.mxu0
        %v3831 = vadd.f32 %v3461, %v3830
        %3832 = vmatmul.bf16.gmra.mxu0 %v3393
        %v3833 = vpop.f32.mrf.mxu0
        %v3834 = vadd.f32 %v3461, %v3833
        %v3835 = vpop.f32.mrf.mxu0
        %v3836 = vadd.f32 %v3461, %v3835
        %3837 = vdwg.mxu0
        %3838 = vmatpush.bf16.msra.mxu0 %v3721
        %3839 = vmatpush.bf16.msra.mxu0 %v3717
        %3840 = vmatpush.bf16.msra.mxu0 %v3713
        %3841 = vmatpush.bf16.msra.mxu0 %v3709
        %3842 = vmatpush.bf16.msra.mxu0 %v3705
        %3843 = vmatpush.bf16.msra.mxu0 %v3701
        %3844 = vmatpush.bf16.msra.mxu0 %v3697
        %3845 = vmatpush.bf16.msra.mxu0 %v3693
        %3846 = vmatmul.bf16.gmra.mxu0 %v3380
        %v3847 = vpop.f32.mrf.mxu0
        %v3848 = vadd.f32 %v3799, %v3847
        %v3849 = vpop.f32.mrf.mxu0
        %v3850 = vadd.f32 %v3801, %v3849
        %3851 = vmatmul.bf16.gmra.mxu0 %v3382
        %v3852 = vpop.f32.mrf.mxu0
        %v3853 = vadd.f32 %v3804, %v3852
        %v3854 = vpop.f32.mrf.mxu0
        %v3855 = vadd.f32 %v3806, %v3854
        %3856 = vmatmul.bf16.gmra.mxu0 %v3384
        %v3857 = vpop.f32.mrf.mxu0
        %v3858 = vadd.f32 %v3809, %v3857
        %v3859 = vpop.f32.mrf.mxu0
        %v3860 = vadd.f32 %v3811, %v3859
        %3861 = vmatmul.bf16.gmra.mxu0 %v3386
        %v3862 = vpop.f32.mrf.mxu0
        %v3863 = vadd.f32 %v3814, %v3862
        %v3864 = vpop.f32.mrf.mxu0
        %v3865 = vadd.f32 %v3816, %v3864
        %3866 = vmatmul.bf16.gmra.mxu0 %v3388
        %v3867 = vpop.f32.mrf.mxu0
        %v3868 = vadd.f32 %v3819, %v3867
        %v3869 = vpop.f32.mrf.mxu0
        %v3870 = vadd.f32 %v3821, %v3869
        %3871 = vmatmul.bf16.gmra.mxu0 %v3390
        %v3872 = vpop.f32.mrf.mxu0
        %v3873 = vadd.f32 %v3824, %v3872
        %v3874 = vpop.f32.mrf.mxu0
        %v3875 = vadd.f32 %v3826, %v3874
        %3876 = vmatmul.bf16.gmra.mxu0 %v3392
        %v3877 = vpop.f32.mrf.mxu0
        %v3878 = vadd.f32 %v3829, %v3877
        %v3879 = vpop.f32.mrf.mxu0
        %v3880 = vadd.f32 %v3831, %v3879
        %3881 = vmatmul.bf16.gmra.mxu0 %v3394
        %v3882 = vpop.f32.mrf.mxu0
        %v3883 = vadd.f32 %v3834, %v3882
        %v3884 = vpop.f32.mrf.mxu0
        %v3885 = vadd.f32 %v3836, %v3884
        %3886 = vdwg.mxu0
        %3887 = vmatpush.bf16.msra.mxu0 %v3690
        %3888 = vmatpush.bf16.msra.mxu0 %v3686
        %3889 = vmatpush.bf16.msra.mxu0 %v3682
        %3890 = vmatpush.bf16.msra.mxu0 %v3678
        %3891 = vmatpush.bf16.msra.mxu0 %v3674
        %3892 = vmatpush.bf16.msra.mxu0 %v3670
        %3893 = vmatpush.bf16.msra.mxu0 %v3666
        %3894 = vmatpush.bf16.msra.mxu0 %v3662
        %3895 = vmatmul.bf16.gmra.mxu0 %v3379
        %v3896 = vpop.f32.mrf.mxu0
        %v3897 = vadd.f32 %v3462, %v3896
        %v3898 = vpop.f32.mrf.mxu0
        %v3899 = vadd.f32 %v3462, %v3898
        %3900 = vmatmul.bf16.gmra.mxu0 %v3381
        %v3901 = vpop.f32.mrf.mxu0
        %v3902 = vadd.f32 %v3462, %v3901
        %v3903 = vpop.f32.mrf.mxu0
        %v3904 = vadd.f32 %v3462, %v3903
        %3905 = vmatmul.bf16.gmra.mxu0 %v3383
        %v3906 = vpop.f32.mrf.mxu0
        %v3907 = vadd.f32 %v3462, %v3906
        %v3908 = vpop.f32.mrf.mxu0
        %v3909 = vadd.f32 %v3462, %v3908
        %3910 = vmatmul.bf16.gmra.mxu0 %v3385
        %v3911 = vpop.f32.mrf.mxu0
        %v3912 = vadd.f32 %v3462, %v3911
        %v3913 = vpop.f32.mrf.mxu0
        %v3914 = vadd.f32 %v3462, %v3913
        %3915 = vmatmul.bf16.gmra.mxu0 %v3387
        %v3916 = vpop.f32.mrf.mxu0
        %v3917 = vadd.f32 %v3462, %v3916
        %v3918 = vpop.f32.mrf.mxu0
        %v3919 = vadd.f32 %v3462, %v3918
        %3920 = vmatmul.bf16.gmra.mxu0 %v3389
        %v3921 = vpop.f32.mrf.mxu0
        %v3922 = vadd.f32 %v3462, %v3921
        %v3923 = vpop.f32.mrf.mxu0
        %v3924 = vadd.f32 %v3462, %v3923
        %3925 = vmatmul.bf16.gmra.mxu0 %v3391
        %v3926 = vpop.f32.mrf.mxu0
        %v3927 = vadd.f32 %v3462, %v3926
        %v3928 = vpop.f32.mrf.mxu0
        %v3929 = vadd.f32 %v3462, %v3928
        %3930 = vmatmul.bf16.gmra.mxu0 %v3393
        %v3931 = vpop.f32.mrf.mxu0
        %v3932 = vadd.f32 %v3462, %v3931
        %v3933 = vpop.f32.mrf.mxu0
        %v3934 = vadd.f32 %v3462, %v3933
        %3935 = vdwg.mxu0
        %3936 = vmatpush.bf16.msra.mxu0 %v3722
        %3937 = vmatpush.bf16.msra.mxu0 %v3718
        %3938 = vmatpush.bf16.msra.mxu0 %v3714
        %3939 = vmatpush.bf16.msra.mxu0 %v3710
        %3940 = vmatpush.bf16.msra.mxu0 %v3706
        %3941 = vmatpush.bf16.msra.mxu0 %v3702
        %3942 = vmatpush.bf16.msra.mxu0 %v3698
        %3943 = vmatpush.bf16.msra.mxu0 %v3694
        %3944 = vmatmul.bf16.gmra.mxu0 %v3380
        %v3945 = vpop.f32.mrf.mxu0
        %v3946 = vadd.f32 %v3897, %v3945
        %v3947 = vpop.f32.mrf.mxu0
        %v3948 = vadd.f32 %v3899, %v3947
        %3949 = vmatmul.bf16.gmra.mxu0 %v3382
        %v3950 = vpop.f32.mrf.mxu0
        %v3951 = vadd.f32 %v3902, %v3950
        %v3952 = vpop.f32.mrf.mxu0
        %v3953 = vadd.f32 %v3904, %v3952
        %3954 = vmatmul.bf16.gmra.mxu0 %v3384
        %v3955 = vpop.f32.mrf.mxu0
        %v3956 = vadd.f32 %v3907, %v3955
        %v3957 = vpop.f32.mrf.mxu0
        %v3958 = vadd.f32 %v3909, %v3957
        %3959 = vmatmul.bf16.gmra.mxu0 %v3386
        %v3960 = vpop.f32.mrf.mxu0
        %v3961 = vadd.f32 %v3912, %v3960
        %v3962 = vpop.f32.mrf.mxu0
        %v3963 = vadd.f32 %v3914, %v3962
        %3964 = vmatmul.bf16.gmra.mxu0 %v3388
        %v3965 = vpop.f32.mrf.mxu0
        %v3966 = vadd.f32 %v3917, %v3965
        %v3967 = vpop.f32.mrf.mxu0
        %v3968 = vadd.f32 %v3919, %v3967
        %3969 = vmatmul.bf16.gmra.mxu0 %v3390
        %v3970 = vpop.f32.mrf.mxu0
        %v3971 = vadd.f32 %v3922, %v3970
        %v3972 = vpop.f32.mrf.mxu0
        %v3973 = vadd.f32 %v3924, %v3972
        %3974 = vmatmul.bf16.gmra.mxu0 %v3392
        %v3975 = vpop.f32.mrf.mxu0
        %v3976 = vadd.f32 %v3927, %v3975
        %v3977 = vpop.f32.mrf.mxu0
        %v3978 = vadd.f32 %v3929, %v3977
        %3979 = vmatmul.bf16.gmra.mxu0 %v3394
        %v3980 = vpop.f32.mrf.mxu0
        %v3981 = vadd.f32 %v3932, %v3980
        %v3982 = vpop.f32.mrf.mxu0
        %v3983 = vadd.f32 %v3934, %v3982
        %3984 = vdwg.mxu0
        %3985 = vmatpush.bf16.msra.mxu0 %v3691
        %3986 = vmatpush.bf16.msra.mxu0 %v3687
        %3987 = vmatpush.bf16.msra.mxu0 %v3683
        %3988 = vmatpush.bf16.msra.mxu0 %v3679
        %3989 = vmatpush.bf16.msra.mxu0 %v3675
        %3990 = vmatpush.bf16.msra.mxu0 %v3671
        %3991 = vmatpush.bf16.msra.mxu0 %v3667
        %3992 = vmatpush.bf16.msra.mxu0 %v3663
        %3993 = vmatmul.bf16.gmra.mxu0 %v3379
        %v3994 = vpop.f32.mrf.mxu0
        %v3995 = vadd.f32 %v3463, %v3994
        %v3996 = vpop.f32.mrf.mxu0
        %v3997 = vadd.f32 %v3463, %v3996
        %3998 = vmatmul.bf16.gmra.mxu0 %v3381
        %v3999 = vpop.f32.mrf.mxu0
        %v4000 = vadd.f32 %v3463, %v3999
        %v4001 = vpop.f32.mrf.mxu0
        %v4002 = vadd.f32 %v3463, %v4001
        %4003 = vmatmul.bf16.gmra.mxu0 %v3383
        %v4004 = vpop.f32.mrf.mxu0
        %v4005 = vadd.f32 %v3463, %v4004
        %v4006 = vpop.f32.mrf.mxu0
        %v4007 = vadd.f32 %v3463, %v4006
        %4008 = vmatmul.bf16.gmra.mxu0 %v3385
        %v4009 = vpop.f32.mrf.mxu0
        %v4010 = vadd.f32 %v3463, %v4009
        %v4011 = vpop.f32.mrf.mxu0
        %v4012 = vadd.f32 %v3463, %v4011
        %4013 = vmatmul.bf16.gmra.mxu0 %v3387
        %v4014 = vpop.f32.mrf.mxu0
        %v4015 = vadd.f32 %v3463, %v4014
        %v4016 = vpop.f32.mrf.mxu0
        %v4017 = vadd.f32 %v3463, %v4016
        %4018 = vmatmul.bf16.gmra.mxu0 %v3389
        %v4019 = vpop.f32.mrf.mxu0
        %v4020 = vadd.f32 %v3463, %v4019
        %v4021 = vpop.f32.mrf.mxu0
        %v4022 = vadd.f32 %v3463, %v4021
        %4023 = vmatmul.bf16.gmra.mxu0 %v3391
        %v4024 = vpop.f32.mrf.mxu0
        %v4025 = vadd.f32 %v3463, %v4024
        %v4026 = vpop.f32.mrf.mxu0
        %v4027 = vadd.f32 %v3463, %v4026
        %4028 = vmatmul.bf16.gmra.mxu0 %v3393
        %v4029 = vpop.f32.mrf.mxu0
        %v4030 = vadd.f32 %v3463, %v4029
        %v4031 = vpop.f32.mrf.mxu0
        %v4032 = vadd.f32 %v3463, %v4031
        %4033 = vdwg.mxu0
        %4034 = vmatpush.bf16.msra.mxu0 %v3723
        %4035 = vmatpush.bf16.msra.mxu0 %v3719
        %4036 = vmatpush.bf16.msra.mxu0 %v3715
        %4037 = vmatpush.bf16.msra.mxu0 %v3711
        %4038 = vmatpush.bf16.msra.mxu0 %v3707
        %4039 = vmatpush.bf16.msra.mxu0 %v3703
        %4040 = vmatpush.bf16.msra.mxu0 %v3699
        %4041 = vmatpush.bf16.msra.mxu0 %v3695
        %4042 = vmatmul.bf16.gmra.mxu0 %v3380
        %v4043 = vpop.f32.mrf.mxu0
        %v4044 = vadd.f32 %v3995, %v4043
        %v4045 = vpop.f32.mrf.mxu0
        %v4046 = vadd.f32 %v3997, %v4045
        %4047 = vmatmul.bf16.gmra.mxu0 %v3382
        %v4048 = vpop.f32.mrf.mxu0
        %v4049 = vadd.f32 %v4000, %v4048
        %v4050 = vpop.f32.mrf.mxu0
        %v4051 = vadd.f32 %v4002, %v4050
        %4052 = vmatmul.bf16.gmra.mxu0 %v3384
        %v4053 = vpop.f32.mrf.mxu0
        %v4054 = vadd.f32 %v4005, %v4053
        %v4055 = vpop.f32.mrf.mxu0
        %v4056 = vadd.f32 %v4007, %v4055
        %4057 = vmatmul.bf16.gmra.mxu0 %v3386
        %v4058 = vpop.f32.mrf.mxu0
        %v4059 = vadd.f32 %v4010, %v4058
        %v4060 = vpop.f32.mrf.mxu0
        %v4061 = vadd.f32 %v4012, %v4060
        %4062 = vmatmul.bf16.gmra.mxu0 %v3388
        %v4063 = vpop.f32.mrf.mxu0
        %v4064 = vadd.f32 %v4015, %v4063
        %v4065 = vpop.f32.mrf.mxu0
        %v4066 = vadd.f32 %v4017, %v4065
        %4067 = vmatmul.bf16.gmra.mxu0 %v3390
        %v4068 = vpop.f32.mrf.mxu0
        %v4069 = vadd.f32 %v4020, %v4068
        %v4070 = vpop.f32.mrf.mxu0
        %v4071 = vadd.f32 %v4022, %v4070
        %4072 = vmatmul.bf16.gmra.mxu0 %v3392
        %v4073 = vpop.f32.mrf.mxu0
        %v4074 = vadd.f32 %v4025, %v4073
        %v4075 = vpop.f32.mrf.mxu0
        %v4076 = vadd.f32 %v4027, %v4075
        %4077 = vmatmul.bf16.gmra.mxu0 %v3394
        %v4078 = vpop.f32.mrf.mxu0
        %v4079 = vadd.f32 %v4030, %v4078
        %v4080 = vpop.f32.mrf.mxu0
        %v4081 = vadd.f32 %v4032, %v4080
        %4082 = vdwg.mxu0
        %4083 = vmatpush.bf16.msra.mxu0 %v3692
        %4084 = vmatpush.bf16.msra.mxu0 %v3688
        %4085 = vmatpush.bf16.msra.mxu0 %v3684
        %4086 = vmatpush.bf16.msra.mxu0 %v3680
        %4087 = vmatpush.bf16.msra.mxu0 %v3676
        %4088 = vmatpush.bf16.msra.mxu0 %v3672
        %4089 = vmatpush.bf16.msra.mxu0 %v3668
        %4090 = vmatpush.bf16.msra.mxu0 %v3664
        %4091 = vmatmul.bf16.gmra.mxu0 %v3379
        %v4092 = vpop.f32.mrf.mxu0
        %v4093 = vadd.f32 %v3464, %v4092
        %v4094 = vpop.f32.mrf.mxu0
        %v4095 = vadd.f32 %v3464, %v4094
        %4096 = vmatmul.bf16.gmra.mxu0 %v3381
        %v4097 = vpop.f32.mrf.mxu0
        %v4098 = vadd.f32 %v3464, %v4097
        %v4099 = vpop.f32.mrf.mxu0
        %v4100 = vadd.f32 %v3464, %v4099
        %4101 = vmatmul.bf16.gmra.mxu0 %v3383
        %v4102 = vpop.f32.mrf.mxu0
        %v4103 = vadd.f32 %v3464, %v4102
        %v4104 = vpop.f32.mrf.mxu0
        %v4105 = vadd.f32 %v3464, %v4104
        %4106 = vmatmul.bf16.gmra.mxu0 %v3385
        %v4107 = vpop.f32.mrf.mxu0
        %v4108 = vadd.f32 %v3464, %v4107
        %v4109 = vpop.f32.mrf.mxu0
        %v4110 = vadd.f32 %v3464, %v4109
        %4111 = vmatmul.bf16.gmra.mxu0 %v3387
        %v4112 = vpop.f32.mrf.mxu0
        %v4113 = vadd.f32 %v3464, %v4112
        %v4114 = vpop.f32.mrf.mxu0
        %v4115 = vadd.f32 %v3464, %v4114
        %4116 = vmatmul.bf16.gmra.mxu0 %v3389
        %v4117 = vpop.f32.mrf.mxu0
        %v4118 = vadd.f32 %v3464, %v4117
        %v4119 = vpop.f32.mrf.mxu0
        %v4120 = vadd.f32 %v3464, %v4119
        %4121 = vmatmul.bf16.gmra.mxu0 %v3391
        %v4122 = vpop.f32.mrf.mxu0
        %v4123 = vadd.f32 %v3464, %v4122
        %v4124 = vpop.f32.mrf.mxu0
        %v4125 = vadd.f32 %v3464, %v4124
        %4126 = vmatmul.bf16.gmra.mxu0 %v3393
        %v4127 = vpop.f32.mrf.mxu0
        %v4128 = vadd.f32 %v3464, %v4127
        %v4129 = vpop.f32.mrf.mxu0
        %v4130 = vadd.f32 %v3464, %v4129
        %4131 = vdwg.mxu0
        %4132 = vmatpush.bf16.msra.mxu0 %v3724
        %4133 = vmatpush.bf16.msra.mxu0 %v3720
        %4134 = vmatpush.bf16.msra.mxu0 %v3716
        %4135 = vmatpush.bf16.msra.mxu0 %v3712
        %4136 = vmatpush.bf16.msra.mxu0 %v3708
        %4137 = vmatpush.bf16.msra.mxu0 %v3704
        %4138 = vmatpush.bf16.msra.mxu0 %v3700
        %4139 = vmatpush.bf16.msra.mxu0 %v3696
        %4140 = vmatmul.bf16.gmra.mxu0 %v3380
        %v4141 = vpop.f32.mrf.mxu0
        %v4142 = vadd.f32 %v4093, %v4141
        %v4143 = vpop.f32.mrf.mxu0
        %v4144 = vadd.f32 %v4095, %v4143
        %4145 = vmatmul.bf16.gmra.mxu0 %v3382
        %v4146 = vpop.f32.mrf.mxu0
        %v4147 = vadd.f32 %v4098, %v4146
        %v4148 = vpop.f32.mrf.mxu0
        %v4149 = vadd.f32 %v4100, %v4148
        %4150 = vmatmul.bf16.gmra.mxu0 %v3384
        %v4151 = vpop.f32.mrf.mxu0
        %v4152 = vadd.f32 %v4103, %v4151
        %v4153 = vpop.f32.mrf.mxu0
        %v4154 = vadd.f32 %v4105, %v4153
        %4155 = vmatmul.bf16.gmra.mxu0 %v3386
        %v4156 = vpop.f32.mrf.mxu0
        %v4157 = vadd.f32 %v4108, %v4156
        %v4158 = vpop.f32.mrf.mxu0
        %v4159 = vadd.f32 %v4110, %v4158
        %4160 = vmatmul.bf16.gmra.mxu0 %v3388
        %v4161 = vpop.f32.mrf.mxu0
        %v4162 = vadd.f32 %v4113, %v4161
        %v4163 = vpop.f32.mrf.mxu0
        %v4164 = vadd.f32 %v4115, %v4163
        %4165 = vmatmul.bf16.gmra.mxu0 %v3390
        %v4166 = vpop.f32.mrf.mxu0
        %v4167 = vadd.f32 %v4118, %v4166
        %v4168 = vpop.f32.mrf.mxu0
        %v4169 = vadd.f32 %v4120, %v4168
        %4170 = vmatmul.bf16.gmra.mxu0 %v3392
        %v4171 = vpop.f32.mrf.mxu0
        %v4172 = vadd.f32 %v4123, %v4171
        %v4173 = vpop.f32.mrf.mxu0
        %v4174 = vadd.f32 %v4125, %v4173
        %4175 = vmatmul.bf16.gmra.mxu0 %v3394
        %v4176 = vpop.f32.mrf.mxu0
        %v4177 = vadd.f32 %v4128, %v4176
        %v4178 = vpop.f32.mrf.mxu0
        %v4179 = vadd.f32 %v4130, %v4178
        %4180 = vdwg.mxu0
        %v4181 = vmax.f32 %v3848, 0.0
        %v4182 = vmax.f32 %v3946, 0.0
        %v4183 = vmax.f32 %v4044, 0.0
        %v4184 = vmax.f32 %v4142, 0.0
        %v4185 = vmax.f32 %v3850, 0.0
        %v4186 = vmax.f32 %v3948, 0.0
        %v4187 = vmax.f32 %v4046, 0.0
        %v4188 = vmax.f32 %v4144, 0.0
        %v4189 = vmax.f32 %v3853, 0.0
        %v4190 = vmax.f32 %v3951, 0.0
        %v4191 = vmax.f32 %v4049, 0.0
        %v4192 = vmax.f32 %v4147, 0.0
        %v4193 = vmax.f32 %v3855, 0.0
        %v4194 = vmax.f32 %v3953, 0.0
        %v4195 = vmax.f32 %v4051, 0.0
        %v4196 = vmax.f32 %v4149, 0.0
        %v4197 = vmax.f32 %v3858, 0.0
        %v4198 = vmax.f32 %v3956, 0.0
        %v4199 = vmax.f32 %v4054, 0.0
        %v4200 = vmax.f32 %v4152, 0.0
        %v4201 = vmax.f32 %v3860, 0.0
        %v4202 = vmax.f32 %v3958, 0.0
        %v4203 = vmax.f32 %v4056, 0.0
        %v4204 = vmax.f32 %v4154, 0.0
        %v4205 = vmax.f32 %v3863, 0.0
        %v4206 = vmax.f32 %v3961, 0.0
        %v4207 = vmax.f32 %v4059, 0.0
        %v4208 = vmax.f32 %v4157, 0.0
        %v4209 = vmax.f32 %v3865, 0.0
        %v4210 = vmax.f32 %v3963, 0.0
        %v4211 = vmax.f32 %v4061, 0.0
        %v4212 = vmax.f32 %v4159, 0.0
        %v4213 = vmax.f32 %v3868, 0.0
        %v4214 = vmax.f32 %v3966, 0.0
        %v4215 = vmax.f32 %v4064, 0.0
        %v4216 = vmax.f32 %v4162, 0.0
        %v4217 = vmax.f32 %v3870, 0.0
        %v4218 = vmax.f32 %v3968, 0.0
        %v4219 = vmax.f32 %v4066, 0.0
        %v4220 = vmax.f32 %v4164, 0.0
        %v4221 = vmax.f32 %v3873, 0.0
        %v4222 = vmax.f32 %v3971, 0.0
        %v4223 = vmax.f32 %v4069, 0.0
        %v4224 = vmax.f32 %v4167, 0.0
        %v4225 = vmax.f32 %v3875, 0.0
        %v4226 = vmax.f32 %v3973, 0.0
        %v4227 = vmax.f32 %v4071, 0.0
        %v4228 = vmax.f32 %v4169, 0.0
        %v4229 = vmax.f32 %v3878, 0.0
        %v4230 = vmax.f32 %v3976, 0.0
        %v4231 = vmax.f32 %v4074, 0.0
        %v4232 = vmax.f32 %v4172, 0.0
        %v4233 = vmax.f32 %v3880, 0.0
        %v4234 = vmax.f32 %v3978, 0.0
        %v4235 = vmax.f32 %v4076, 0.0
        %v4236 = vmax.f32 %v4174, 0.0
        %v4237 = vmax.f32 %v3883, 0.0
        %v4238 = vmax.f32 %v3981, 0.0
        %v4239 = vmax.f32 %v4079, 0.0
        %v4240 = vmax.f32 %v4177, 0.0
        %v4241 = vmax.f32 %v3885, 0.0
        %v4242 = vmax.f32 %v3983, 0.0
        %v4243 = vmax.f32 %v4081, 0.0
        %v4244 = vmax.f32 %v4179, 0.0
        %v4245 = vpack.c.bf16 %v4185, %v4181
        %v4246 = vpack.c.bf16 %v4186, %v4182
        %v4247 = vpack.c.bf16 %v4187, %v4183
        %v4248 = vpack.c.bf16 %v4188, %v4184
        %v4249 = vpack.c.bf16 %v4193, %v4189
        %v4250 = vpack.c.bf16 %v4194, %v4190
        %v4251 = vpack.c.bf16 %v4195, %v4191
        %v4252 = vpack.c.bf16 %v4196, %v4192
        %v4253 = vpack.c.bf16 %v4201, %v4197
        %v4254 = vpack.c.bf16 %v4202, %v4198
        %v4255 = vpack.c.bf16 %v4203, %v4199
        %v4256 = vpack.c.bf16 %v4204, %v4200
        %v4257 = vpack.c.bf16 %v4209, %v4205
        %v4258 = vpack.c.bf16 %v4210, %v4206
        %v4259 = vpack.c.bf16 %v4211, %v4207
        %v4260 = vpack.c.bf16 %v4212, %v4208
        %v4261 = vpack.c.bf16 %v4217, %v4213
        %v4262 = vpack.c.bf16 %v4218, %v4214
        %v4263 = vpack.c.bf16 %v4219, %v4215
        %v4264 = vpack.c.bf16 %v4220, %v4216
        %v4265 = vpack.c.bf16 %v4225, %v4221
        %v4266 = vpack.c.bf16 %v4226, %v4222
        %v4267 = vpack.c.bf16 %v4227, %v4223
        %v4268 = vpack.c.bf16 %v4228, %v4224
        %v4269 = vpack.c.bf16 %v4233, %v4229
        %v4270 = vpack.c.bf16 %v4234, %v4230
        %v4271 = vpack.c.bf16 %v4235, %v4231
        %v4272 = vpack.c.bf16 %v4236, %v4232
        %v4273 = vpack.c.bf16 %v4241, %v4237
        %v4274 = vpack.c.bf16 %v4242, %v4238
        %v4275 = vpack.c.bf16 %v4243, %v4239
        %v4276 = vpack.c.bf16 %v4244, %v4240
        %v4277 = vld [vmem:[#allocation13] sm:$0xff]
        %v4278 = vld [vmem:[#allocation13 + $0x8] sm:$0xff]
        %v4279 = vld [vmem:[#allocation13 + $0x10] sm:$0xff]
        %v4280 = vld [vmem:[#allocation13 + $0x18] sm:$0xff]
        %v4281 = vld [vmem:[#allocation13 + $0x20] sm:$0xff]
        %v4282 = vld [vmem:[#allocation13 + $0x28] sm:$0xff]
        %v4283 = vld [vmem:[#allocation13 + $0x30] sm:$0xff]
        %v4284 = vld [vmem:[#allocation13 + $0x38] sm:$0xff]
        %v4285 = vld [vmem:[#allocation13 + $0x40] sm:$0xff]
        %v4286 = vld [vmem:[#allocation13 + $0x48] sm:$0xff]
        %v4287 = vld [vmem:[#allocation13 + $0x50] sm:$0xff]
        %v4288 = vld [vmem:[#allocation13 + $0x58] sm:$0xff]
        %v4289 = vld [vmem:[#allocation13 + $0x60] sm:$0xff]
        %v4290 = vld [vmem:[#allocation13 + $0x68] sm:$0xff]
        %v4291 = vld [vmem:[#allocation13 + $0x70] sm:$0xff]
        %v4292 = vld [vmem:[#allocation13 + $0x78] sm:$0xff]
        %v4293 = vld [vmem:[#allocation13 + $0x80] sm:$0xff]
        %v4294 = vld [vmem:[#allocation13 + $0x88] sm:$0xff]
        %v4295 = vld [vmem:[#allocation13 + $0x90] sm:$0xff]
        %v4296 = vld [vmem:[#allocation13 + $0x98] sm:$0xff]
        %v4297 = vld [vmem:[#allocation13 + $0xa0] sm:$0xff]
        %v4298 = vld [vmem:[#allocation13 + $0xa8] sm:$0xff]
        %v4299 = vld [vmem:[#allocation13 + $0xb0] sm:$0xff]
        %v4300 = vld [vmem:[#allocation13 + $0xb8] sm:$0xff]
        %v4301 = vld [vmem:[#allocation13 + $0xc0] sm:$0xff]
        %v4302 = vld [vmem:[#allocation13 + $0xc8] sm:$0xff]
        %v4303 = vld [vmem:[#allocation13 + $0xd0] sm:$0xff]
        %v4304 = vld [vmem:[#allocation13 + $0xd8] sm:$0xff]
        %v4305 = vld [vmem:[#allocation13 + $0xe0] sm:$0xff]
        %v4306 = vld [vmem:[#allocation13 + $0xe8] sm:$0xff]
        %v4307 = vld [vmem:[#allocation13 + $0xf0] sm:$0xff]
        %v4308 = vld [vmem:[#allocation13 + $0xf8] sm:$0xff]
        %v4309 = vld [vmem:[#allocation13 + $0x100] sm:$0xff]
        %v4310 = vld [vmem:[#allocation13 + $0x108] sm:$0xff]
        %v4311 = vld [vmem:[#allocation13 + $0x110] sm:$0xff]
        %v4312 = vld [vmem:[#allocation13 + $0x118] sm:$0xff]
        %v4313 = vld [vmem:[#allocation13 + $0x120] sm:$0xff]
        %v4314 = vld [vmem:[#allocation13 + $0x128] sm:$0xff]
        %v4315 = vld [vmem:[#allocation13 + $0x130] sm:$0xff]
        %v4316 = vld [vmem:[#allocation13 + $0x138] sm:$0xff]
        %v4317 = vld [vmem:[#allocation13 + $0x140] sm:$0xff]
        %v4318 = vld [vmem:[#allocation13 + $0x148] sm:$0xff]
        %v4319 = vld [vmem:[#allocation13 + $0x150] sm:$0xff]
        %v4320 = vld [vmem:[#allocation13 + $0x158] sm:$0xff]
        %v4321 = vld [vmem:[#allocation13 + $0x160] sm:$0xff]
        %v4322 = vld [vmem:[#allocation13 + $0x168] sm:$0xff]
        %v4323 = vld [vmem:[#allocation13 + $0x170] sm:$0xff]
        %v4324 = vld [vmem:[#allocation13 + $0x178] sm:$0xff]
        %v4325 = vld [vmem:[#allocation13 + $0x180] sm:$0xff]
        %v4326 = vld [vmem:[#allocation13 + $0x188] sm:$0xff]
        %v4327 = vld [vmem:[#allocation13 + $0x190] sm:$0xff]
        %v4328 = vld [vmem:[#allocation13 + $0x198] sm:$0xff]
        %v4329 = vld [vmem:[#allocation13 + $0x1a0] sm:$0xff]
        %v4330 = vld [vmem:[#allocation13 + $0x1a8] sm:$0xff]
        %v4331 = vld [vmem:[#allocation13 + $0x1b0] sm:$0xff]
        %v4332 = vld [vmem:[#allocation13 + $0x1b8] sm:$0xff]
        %v4333 = vld [vmem:[#allocation13 + $0x1c0] sm:$0xff]
        %v4334 = vld [vmem:[#allocation13 + $0x1c8] sm:$0xff]
        %v4335 = vld [vmem:[#allocation13 + $0x1d0] sm:$0xff]
        %v4336 = vld [vmem:[#allocation13 + $0x1d8] sm:$0xff]
        %v4337 = vld [vmem:[#allocation13 + $0x1e0] sm:$0xff]
        %v4338 = vld [vmem:[#allocation13 + $0x1e8] sm:$0xff]
        %v4339 = vld [vmem:[#allocation13 + $0x1f0] sm:$0xff]
        %v4340 = vld [vmem:[#allocation13 + $0x1f8] sm:$0xff]
        %v4341 = vld [vmem:[#allocation14] sm:$0x3]
        %v4343 = vperm.slane %v4341, 0
        %v4344 = vperm.slane %v4341, 1
        %v4411 = vunpack.c.l.b16 %v4277
        %v4412 = vunpack.c.h.b16 %v4277
        %v4413 = vunpack.c.l.b16 %v4278
        %v4414 = vunpack.c.h.b16 %v4278
        %v4415 = vunpack.c.l.b16 %v4279
        %v4416 = vunpack.c.h.b16 %v4279
        %v4417 = vunpack.c.l.b16 %v4280
        %v4418 = vunpack.c.h.b16 %v4280
        %v4419 = vunpack.c.l.b16 %v4281
        %v4420 = vunpack.c.h.b16 %v4281
        %v4421 = vunpack.c.l.b16 %v4282
        %v4422 = vunpack.c.h.b16 %v4282
        %v4423 = vunpack.c.l.b16 %v4283
        %v4424 = vunpack.c.h.b16 %v4283
        %v4425 = vunpack.c.l.b16 %v4284
        %v4426 = vunpack.c.h.b16 %v4284
        %v4427 = vunpack.c.l.b16 %v4285
        %v4428 = vunpack.c.h.b16 %v4285
        %v4429 = vunpack.c.l.b16 %v4286
        %v4430 = vunpack.c.h.b16 %v4286
        %v4431 = vunpack.c.l.b16 %v4287
        %v4432 = vunpack.c.h.b16 %v4287
        %v4433 = vunpack.c.l.b16 %v4288
        %v4434 = vunpack.c.h.b16 %v4288
        %v4435 = vunpack.c.l.b16 %v4289
        %v4436 = vunpack.c.h.b16 %v4289
        %v4437 = vunpack.c.l.b16 %v4290
        %v4438 = vunpack.c.h.b16 %v4290
        %v4439 = vunpack.c.l.b16 %v4291
        %v4440 = vunpack.c.h.b16 %v4291
        %v4441 = vunpack.c.l.b16 %v4292
        %v4442 = vunpack.c.h.b16 %v4292
        %v4443 = vunpack.c.l.b16 %v4293
        %v4444 = vunpack.c.h.b16 %v4293
        %v4445 = vunpack.c.l.b16 %v4294
        %v4446 = vunpack.c.h.b16 %v4294
        %v4447 = vunpack.c.l.b16 %v4295
        %v4448 = vunpack.c.h.b16 %v4295
        %v4449 = vunpack.c.l.b16 %v4296
        %v4450 = vunpack.c.h.b16 %v4296
        %v4451 = vunpack.c.l.b16 %v4297
        %v4452 = vunpack.c.h.b16 %v4297
        %v4453 = vunpack.c.l.b16 %v4298
        %v4454 = vunpack.c.h.b16 %v4298
        %v4455 = vunpack.c.l.b16 %v4299
        %v4456 = vunpack.c.h.b16 %v4299
        %v4457 = vunpack.c.l.b16 %v4300
        %v4458 = vunpack.c.h.b16 %v4300
        %v4459 = vunpack.c.l.b16 %v4301
        %v4460 = vunpack.c.h.b16 %v4301
        %v4461 = vunpack.c.l.b16 %v4302
        %v4462 = vunpack.c.h.b16 %v4302
        %v4463 = vunpack.c.l.b16 %v4303
        %v4464 = vunpack.c.h.b16 %v4303
        %v4465 = vunpack.c.l.b16 %v4304
        %v4466 = vunpack.c.h.b16 %v4304
        %v4467 = vunpack.c.l.b16 %v4305
        %v4468 = vunpack.c.h.b16 %v4305
        %v4469 = vunpack.c.l.b16 %v4306
        %v4470 = vunpack.c.h.b16 %v4306
        %v4471 = vunpack.c.l.b16 %v4307
        %v4472 = vunpack.c.h.b16 %v4307
        %v4473 = vunpack.c.l.b16 %v4308
        %v4474 = vunpack.c.h.b16 %v4308
        %v4475 = vunpack.c.l.b16 %v4309
        %v4476 = vunpack.c.h.b16 %v4309
        %v4477 = vunpack.c.l.b16 %v4310
        %v4478 = vunpack.c.h.b16 %v4310
        %v4479 = vunpack.c.l.b16 %v4311
        %v4480 = vunpack.c.h.b16 %v4311
        %v4481 = vunpack.c.l.b16 %v4312
        %v4482 = vunpack.c.h.b16 %v4312
        %v4483 = vunpack.c.l.b16 %v4313
        %v4484 = vunpack.c.h.b16 %v4313
        %v4485 = vunpack.c.l.b16 %v4314
        %v4486 = vunpack.c.h.b16 %v4314
        %v4487 = vunpack.c.l.b16 %v4315
        %v4488 = vunpack.c.h.b16 %v4315
        %v4489 = vunpack.c.l.b16 %v4316
        %v4490 = vunpack.c.h.b16 %v4316
        %v4491 = vunpack.c.l.b16 %v4317
        %v4492 = vunpack.c.h.b16 %v4317
        %v4493 = vunpack.c.l.b16 %v4318
        %v4494 = vunpack.c.h.b16 %v4318
        %v4495 = vunpack.c.l.b16 %v4319
        %v4496 = vunpack.c.h.b16 %v4319
        %v4497 = vunpack.c.l.b16 %v4320
        %v4498 = vunpack.c.h.b16 %v4320
        %v4499 = vunpack.c.l.b16 %v4321
        %v4500 = vunpack.c.h.b16 %v4321
        %v4501 = vunpack.c.l.b16 %v4322
        %v4502 = vunpack.c.h.b16 %v4322
        %v4503 = vunpack.c.l.b16 %v4323
        %v4504 = vunpack.c.h.b16 %v4323
        %v4505 = vunpack.c.l.b16 %v4324
        %v4506 = vunpack.c.h.b16 %v4324
        %v4507 = vunpack.c.l.b16 %v4325
        %v4508 = vunpack.c.h.b16 %v4325
        %v4509 = vunpack.c.l.b16 %v4326
        %v4510 = vunpack.c.h.b16 %v4326
        %v4511 = vunpack.c.l.b16 %v4327
        %v4512 = vunpack.c.h.b16 %v4327
        %v4513 = vunpack.c.l.b16 %v4328
        %v4514 = vunpack.c.h.b16 %v4328
        %v4515 = vunpack.c.l.b16 %v4329
        %v4516 = vunpack.c.h.b16 %v4329
        %v4517 = vunpack.c.l.b16 %v4330
        %v4518 = vunpack.c.h.b16 %v4330
        %v4519 = vunpack.c.l.b16 %v4331
        %v4520 = vunpack.c.h.b16 %v4331
        %v4521 = vunpack.c.l.b16 %v4332
        %v4522 = vunpack.c.h.b16 %v4332
        %v4523 = vunpack.c.l.b16 %v4333
        %v4524 = vunpack.c.h.b16 %v4333
        %v4525 = vunpack.c.l.b16 %v4334
        %v4526 = vunpack.c.h.b16 %v4334
        %v4527 = vunpack.c.l.b16 %v4335
        %v4528 = vunpack.c.h.b16 %v4335
        %v4529 = vunpack.c.l.b16 %v4336
        %v4530 = vunpack.c.h.b16 %v4336
        %v4531 = vunpack.c.l.b16 %v4337
        %v4532 = vunpack.c.h.b16 %v4337
        %v4533 = vunpack.c.l.b16 %v4338
        %v4534 = vunpack.c.h.b16 %v4338
        %v4535 = vunpack.c.l.b16 %v4339
        %v4536 = vunpack.c.h.b16 %v4339
        %v4537 = vunpack.c.l.b16 %v4340
        %v4538 = vunpack.c.h.b16 %v4340
        %v4539 = vpack.c.b16 %v4413, %v4411
        %v4540 = vpack.c.b16 %v4414, %v4412
        %v4541 = vpack.c.b16 %v4417, %v4415
        %v4542 = vpack.c.b16 %v4418, %v4416
        %v4543 = vpack.c.b16 %v4421, %v4419
        %v4544 = vpack.c.b16 %v4422, %v4420
        %v4545 = vpack.c.b16 %v4425, %v4423
        %v4546 = vpack.c.b16 %v4426, %v4424
        %v4547 = vpack.c.b16 %v4429, %v4427
        %v4548 = vpack.c.b16 %v4430, %v4428
        %v4549 = vpack.c.b16 %v4433, %v4431
        %v4550 = vpack.c.b16 %v4434, %v4432
        %v4551 = vpack.c.b16 %v4437, %v4435
        %v4552 = vpack.c.b16 %v4438, %v4436
        %v4553 = vpack.c.b16 %v4441, %v4439
        %v4554 = vpack.c.b16 %v4442, %v4440
        %v4555 = vpack.c.b16 %v4445, %v4443
        %v4556 = vpack.c.b16 %v4446, %v4444
        %v4557 = vpack.c.b16 %v4449, %v4447
        %v4558 = vpack.c.b16 %v4450, %v4448
        %v4559 = vpack.c.b16 %v4453, %v4451
        %v4560 = vpack.c.b16 %v4454, %v4452
        %v4561 = vpack.c.b16 %v4457, %v4455
        %v4562 = vpack.c.b16 %v4458, %v4456
        %v4563 = vpack.c.b16 %v4461, %v4459
        %v4564 = vpack.c.b16 %v4462, %v4460
        %v4565 = vpack.c.b16 %v4465, %v4463
        %v4566 = vpack.c.b16 %v4466, %v4464
        %v4567 = vpack.c.b16 %v4469, %v4467
        %v4568 = vpack.c.b16 %v4470, %v4468
        %v4569 = vpack.c.b16 %v4473, %v4471
        %v4570 = vpack.c.b16 %v4474, %v4472
        %v4571 = vpack.c.b16 %v4477, %v4475
        %v4572 = vpack.c.b16 %v4478, %v4476
        %v4573 = vpack.c.b16 %v4481, %v4479
        %v4574 = vpack.c.b16 %v4482, %v4480
        %v4575 = vpack.c.b16 %v4485, %v4483
        %v4576 = vpack.c.b16 %v4486, %v4484
        %v4577 = vpack.c.b16 %v4489, %v4487
        %v4578 = vpack.c.b16 %v4490, %v4488
        %v4579 = vpack.c.b16 %v4493, %v4491
        %v4580 = vpack.c.b16 %v4494, %v4492
        %v4581 = vpack.c.b16 %v4497, %v4495
        %v4582 = vpack.c.b16 %v4498, %v4496
        %v4583 = vpack.c.b16 %v4501, %v4499
        %v4584 = vpack.c.b16 %v4502, %v4500
        %v4585 = vpack.c.b16 %v4505, %v4503
        %v4586 = vpack.c.b16 %v4506, %v4504
        %v4587 = vpack.c.b16 %v4509, %v4507
        %v4588 = vpack.c.b16 %v4510, %v4508
        %v4589 = vpack.c.b16 %v4513, %v4511
        %v4590 = vpack.c.b16 %v4514, %v4512
        %v4591 = vpack.c.b16 %v4517, %v4515
        %v4592 = vpack.c.b16 %v4518, %v4516
        %v4593 = vpack.c.b16 %v4521, %v4519
        %v4594 = vpack.c.b16 %v4522, %v4520
        %v4595 = vpack.c.b16 %v4525, %v4523
        %v4596 = vpack.c.b16 %v4526, %v4524
        %v4597 = vpack.c.b16 %v4529, %v4527
        %v4598 = vpack.c.b16 %v4530, %v4528
        %v4599 = vpack.c.b16 %v4533, %v4531
        %v4600 = vpack.c.b16 %v4534, %v4532
        %v4601 = vpack.c.b16 %v4537, %v4535
        %v4602 = vpack.c.b16 %v4538, %v4536
        %4667 = vmatpush.bf16.msra.mxu0 %v4553
        %4668 = vmatpush.bf16.msra.mxu0 %v4551
        %4669 = vmatpush.bf16.msra.mxu0 %v4549
        %4670 = vmatpush.bf16.msra.mxu0 %v4547
        %4671 = vmatpush.bf16.msra.mxu0 %v4545
        %4672 = vmatpush.bf16.msra.mxu0 %v4543
        %4673 = vmatpush.bf16.msra.mxu0 %v4541
        %4674 = vmatpush.bf16.msra.mxu0 %v4539
        %4675 = vmatmul.bf16.gmra.mxu0 %v4245
        %v4676 = vpop.f32.mrf.mxu0
        %v4677 = vadd.f32 %v4343, %v4676
        %v4678 = vpop.f32.mrf.mxu0
        %v4679 = vadd.f32 %v4343, %v4678
        %4680 = vmatmul.bf16.gmra.mxu0 %v4249
        %v4681 = vpop.f32.mrf.mxu0
        %v4682 = vadd.f32 %v4343, %v4681
        %v4683 = vpop.f32.mrf.mxu0
        %v4684 = vadd.f32 %v4343, %v4683
        %4685 = vmatmul.bf16.gmra.mxu0 %v4253
        %v4686 = vpop.f32.mrf.mxu0
        %v4687 = vadd.f32 %v4343, %v4686
        %v4688 = vpop.f32.mrf.mxu0
        %v4689 = vadd.f32 %v4343, %v4688
        %4690 = vmatmul.bf16.gmra.mxu0 %v4257
        %v4691 = vpop.f32.mrf.mxu0
        %v4692 = vadd.f32 %v4343, %v4691
        %v4693 = vpop.f32.mrf.mxu0
        %v4694 = vadd.f32 %v4343, %v4693
        %4695 = vmatmul.bf16.gmra.mxu0 %v4261
        %v4696 = vpop.f32.mrf.mxu0
        %v4697 = vadd.f32 %v4343, %v4696
        %v4698 = vpop.f32.mrf.mxu0
        %v4699 = vadd.f32 %v4343, %v4698
        %4700 = vmatmul.bf16.gmra.mxu0 %v4265
        %v4701 = vpop.f32.mrf.mxu0
        %v4702 = vadd.f32 %v4343, %v4701
        %v4703 = vpop.f32.mrf.mxu0
        %v4704 = vadd.f32 %v4343, %v4703
        %4705 = vmatmul.bf16.gmra.mxu0 %v4269
        %v4706 = vpop.f32.mrf.mxu0
        %v4707 = vadd.f32 %v4343, %v4706
        %v4708 = vpop.f32.mrf.mxu0
        %v4709 = vadd.f32 %v4343, %v4708
        %4710 = vmatmul.bf16.gmra.mxu0 %v4273
        %v4711 = vpop.f32.mrf.mxu0
        %v4712 = vadd.f32 %v4343, %v4711
        %v4713 = vpop.f32.mrf.mxu0
        %v4714 = vadd.f32 %v4343, %v4713
        %4715 = vdwg.mxu0
        %4716 = vmatpush.bf16.msra.mxu0 %v4569
        %4717 = vmatpush.bf16.msra.mxu0 %v4567
        %4718 = vmatpush.bf16.msra.mxu0 %v4565
        %4719 = vmatpush.bf16.msra.mxu0 %v4563
        %4720 = vmatpush.bf16.msra.mxu0 %v4561
        %4721 = vmatpush.bf16.msra.mxu0 %v4559
        %4722 = vmatpush.bf16.msra.mxu0 %v4557
        %4723 = vmatpush.bf16.msra.mxu0 %v4555
        %4724 = vmatmul.bf16.gmra.mxu0 %v4246
        %v4725 = vpop.f32.mrf.mxu0
        %v4726 = vadd.f32 %v4677, %v4725
        %v4727 = vpop.f32.mrf.mxu0
        %v4728 = vadd.f32 %v4679, %v4727
        %4729 = vmatmul.bf16.gmra.mxu0 %v4250
        %v4730 = vpop.f32.mrf.mxu0
        %v4731 = vadd.f32 %v4682, %v4730
        %v4732 = vpop.f32.mrf.mxu0
        %v4733 = vadd.f32 %v4684, %v4732
        %4734 = vmatmul.bf16.gmra.mxu0 %v4254
        %v4735 = vpop.f32.mrf.mxu0
        %v4736 = vadd.f32 %v4687, %v4735
        %v4737 = vpop.f32.mrf.mxu0
        %v4738 = vadd.f32 %v4689, %v4737
        %4739 = vmatmul.bf16.gmra.mxu0 %v4258
        %v4740 = vpop.f32.mrf.mxu0
        %v4741 = vadd.f32 %v4692, %v4740
        %v4742 = vpop.f32.mrf.mxu0
        %v4743 = vadd.f32 %v4694, %v4742
        %4744 = vmatmul.bf16.gmra.mxu0 %v4262
        %v4745 = vpop.f32.mrf.mxu0
        %v4746 = vadd.f32 %v4697, %v4745
        %v4747 = vpop.f32.mrf.mxu0
        %v4748 = vadd.f32 %v4699, %v4747
        %4749 = vmatmul.bf16.gmra.mxu0 %v4266
        %v4750 = vpop.f32.mrf.mxu0
        %v4751 = vadd.f32 %v4702, %v4750
        %v4752 = vpop.f32.mrf.mxu0
        %v4753 = vadd.f32 %v4704, %v4752
        %4754 = vmatmul.bf16.gmra.mxu0 %v4270
        %v4755 = vpop.f32.mrf.mxu0
        %v4756 = vadd.f32 %v4707, %v4755
        %v4757 = vpop.f32.mrf.mxu0
        %v4758 = vadd.f32 %v4709, %v4757
        %4759 = vmatmul.bf16.gmra.mxu0 %v4274
        %v4760 = vpop.f32.mrf.mxu0
        %v4761 = vadd.f32 %v4712, %v4760
        %v4762 = vpop.f32.mrf.mxu0
        %v4763 = vadd.f32 %v4714, %v4762
        %4764 = vdwg.mxu0
        %4765 = vmatpush.bf16.msra.mxu0 %v4585
        %4766 = vmatpush.bf16.msra.mxu0 %v4583
        %4767 = vmatpush.bf16.msra.mxu0 %v4581
        %4768 = vmatpush.bf16.msra.mxu0 %v4579
        %4769 = vmatpush.bf16.msra.mxu0 %v4577
        %4770 = vmatpush.bf16.msra.mxu0 %v4575
        %4771 = vmatpush.bf16.msra.mxu0 %v4573
        %4772 = vmatpush.bf16.msra.mxu0 %v4571
        %4773 = vmatmul.bf16.gmra.mxu0 %v4247
        %v4774 = vpop.f32.mrf.mxu0
        %v4775 = vadd.f32 %v4726, %v4774
        %v4776 = vpop.f32.mrf.mxu0
        %v4777 = vadd.f32 %v4728, %v4776
        %4778 = vmatmul.bf16.gmra.mxu0 %v4251
        %v4779 = vpop.f32.mrf.mxu0
        %v4780 = vadd.f32 %v4731, %v4779
        %v4781 = vpop.f32.mrf.mxu0
        %v4782 = vadd.f32 %v4733, %v4781
        %4783 = vmatmul.bf16.gmra.mxu0 %v4255
        %v4784 = vpop.f32.mrf.mxu0
        %v4785 = vadd.f32 %v4736, %v4784
        %v4786 = vpop.f32.mrf.mxu0
        %v4787 = vadd.f32 %v4738, %v4786
        %4788 = vmatmul.bf16.gmra.mxu0 %v4259
        %v4789 = vpop.f32.mrf.mxu0
        %v4790 = vadd.f32 %v4741, %v4789
        %v4791 = vpop.f32.mrf.mxu0
        %v4792 = vadd.f32 %v4743, %v4791
        %4793 = vmatmul.bf16.gmra.mxu0 %v4263
        %v4794 = vpop.f32.mrf.mxu0
        %v4795 = vadd.f32 %v4746, %v4794
        %v4796 = vpop.f32.mrf.mxu0
        %v4797 = vadd.f32 %v4748, %v4796
        %4798 = vmatmul.bf16.gmra.mxu0 %v4267
        %v4799 = vpop.f32.mrf.mxu0
        %v4800 = vadd.f32 %v4751, %v4799
        %v4801 = vpop.f32.mrf.mxu0
        %v4802 = vadd.f32 %v4753, %v4801
        %4803 = vmatmul.bf16.gmra.mxu0 %v4271
        %v4804 = vpop.f32.mrf.mxu0
        %v4805 = vadd.f32 %v4756, %v4804
        %v4806 = vpop.f32.mrf.mxu0
        %v4807 = vadd.f32 %v4758, %v4806
        %4808 = vmatmul.bf16.gmra.mxu0 %v4275
        %v4809 = vpop.f32.mrf.mxu0
        %v4810 = vadd.f32 %v4761, %v4809
        %v4811 = vpop.f32.mrf.mxu0
        %v4812 = vadd.f32 %v4763, %v4811
        %4813 = vdwg.mxu0
        %4814 = vmatpush.bf16.msra.mxu0 %v4601
        %4815 = vmatpush.bf16.msra.mxu0 %v4599
        %4816 = vmatpush.bf16.msra.mxu0 %v4597
        %4817 = vmatpush.bf16.msra.mxu0 %v4595
        %4818 = vmatpush.bf16.msra.mxu0 %v4593
        %4819 = vmatpush.bf16.msra.mxu0 %v4591
        %4820 = vmatpush.bf16.msra.mxu0 %v4589
        %4821 = vmatpush.bf16.msra.mxu0 %v4587
        %4822 = vmatmul.bf16.gmra.mxu0 %v4248
        %v4823 = vpop.f32.mrf.mxu0
        %v4824 = vadd.f32 %v4775, %v4823
        %v4825 = vpop.f32.mrf.mxu0
        %v4826 = vadd.f32 %v4777, %v4825
        %4827 = vmatmul.bf16.gmra.mxu0 %v4252
        %v4828 = vpop.f32.mrf.mxu0
        %v4829 = vadd.f32 %v4780, %v4828
        %v4830 = vpop.f32.mrf.mxu0
        %v4831 = vadd.f32 %v4782, %v4830
        %4832 = vmatmul.bf16.gmra.mxu0 %v4256
        %v4833 = vpop.f32.mrf.mxu0
        %v4834 = vadd.f32 %v4785, %v4833
        %v4835 = vpop.f32.mrf.mxu0
        %v4836 = vadd.f32 %v4787, %v4835
        %4837 = vmatmul.bf16.gmra.mxu0 %v4260
        %v4838 = vpop.f32.mrf.mxu0
        %v4839 = vadd.f32 %v4790, %v4838
        %v4840 = vpop.f32.mrf.mxu0
        %v4841 = vadd.f32 %v4792, %v4840
        %4842 = vmatmul.bf16.gmra.mxu0 %v4264
        %v4843 = vpop.f32.mrf.mxu0
        %v4844 = vadd.f32 %v4795, %v4843
        %v4845 = vpop.f32.mrf.mxu0
        %v4846 = vadd.f32 %v4797, %v4845
        %4847 = vmatmul.bf16.gmra.mxu0 %v4268
        %v4848 = vpop.f32.mrf.mxu0
        %v4849 = vadd.f32 %v4800, %v4848
        %v4850 = vpop.f32.mrf.mxu0
        %v4851 = vadd.f32 %v4802, %v4850
        %4852 = vmatmul.bf16.gmra.mxu0 %v4272
        %v4853 = vpop.f32.mrf.mxu0
        %v4854 = vadd.f32 %v4805, %v4853
        %v4855 = vpop.f32.mrf.mxu0
        %v4856 = vadd.f32 %v4807, %v4855
        %4857 = vmatmul.bf16.gmra.mxu0 %v4276
        %v4858 = vpop.f32.mrf.mxu0
        %v4859 = vadd.f32 %v4810, %v4858
        %v4860 = vpop.f32.mrf.mxu0
        %v4861 = vadd.f32 %v4812, %v4860
        %4862 = vdwg.mxu0
        %4863 = vmatpush.bf16.msra.mxu0 %v4554
        %4864 = vmatpush.bf16.msra.mxu0 %v4552
        %4865 = vmatpush.bf16.msra.mxu0 %v4550
        %4866 = vmatpush.bf16.msra.mxu0 %v4548
        %4867 = vmatpush.bf16.msra.mxu0 %v4546
        %4868 = vmatpush.bf16.msra.mxu0 %v4544
        %4869 = vmatpush.bf16.msra.mxu0 %v4542
        %4870 = vmatpush.bf16.msra.mxu0 %v4540
        %4871 = vmatmul.bf16.gmra.mxu0 %v4245
        %v4872 = vpop.f32.mrf.mxu0
        %v4873 = vadd.f32 %v4344, %v4872
        %v4874 = vpop.f32.mrf.mxu0
        %v4875 = vadd.f32 %v4344, %v4874
        %4876 = vmatmul.bf16.gmra.mxu0 %v4249
        %v4877 = vpop.f32.mrf.mxu0
        %v4878 = vadd.f32 %v4344, %v4877
        %v4879 = vpop.f32.mrf.mxu0
        %v4880 = vadd.f32 %v4344, %v4879
        %4881 = vmatmul.bf16.gmra.mxu0 %v4253
        %v4882 = vpop.f32.mrf.mxu0
        %v4883 = vadd.f32 %v4344, %v4882
        %v4884 = vpop.f32.mrf.mxu0
        %v4885 = vadd.f32 %v4344, %v4884
        %4886 = vmatmul.bf16.gmra.mxu0 %v4257
        %v4887 = vpop.f32.mrf.mxu0
        %v4888 = vadd.f32 %v4344, %v4887
        %v4889 = vpop.f32.mrf.mxu0
        %v4890 = vadd.f32 %v4344, %v4889
        %4891 = vmatmul.bf16.gmra.mxu0 %v4261
        %v4892 = vpop.f32.mrf.mxu0
        %v4893 = vadd.f32 %v4344, %v4892
        %v4894 = vpop.f32.mrf.mxu0
        %v4895 = vadd.f32 %v4344, %v4894
        %4896 = vmatmul.bf16.gmra.mxu0 %v4265
        %v4897 = vpop.f32.mrf.mxu0
        %v4898 = vadd.f32 %v4344, %v4897
        %v4899 = vpop.f32.mrf.mxu0
        %v4900 = vadd.f32 %v4344, %v4899
        %4901 = vmatmul.bf16.gmra.mxu0 %v4269
        %v4902 = vpop.f32.mrf.mxu0
        %v4903 = vadd.f32 %v4344, %v4902
        %v4904 = vpop.f32.mrf.mxu0
        %v4905 = vadd.f32 %v4344, %v4904
        %4906 = vmatmul.bf16.gmra.mxu0 %v4273
        %v4907 = vpop.f32.mrf.mxu0
        %v4908 = vadd.f32 %v4344, %v4907
        %v4909 = vpop.f32.mrf.mxu0
        %v4910 = vadd.f32 %v4344, %v4909
        %4911 = vdwg.mxu0
        %4912 = vmatpush.bf16.msra.mxu0 %v4570
        %4913 = vmatpush.bf16.msra.mxu0 %v4568
        %4914 = vmatpush.bf16.msra.mxu0 %v4566
        %4915 = vmatpush.bf16.msra.mxu0 %v4564
        %4916 = vmatpush.bf16.msra.mxu0 %v4562
        %4917 = vmatpush.bf16.msra.mxu0 %v4560
        %4918 = vmatpush.bf16.msra.mxu0 %v4558
        %4919 = vmatpush.bf16.msra.mxu0 %v4556
        %4920 = vmatmul.bf16.gmra.mxu0 %v4246
        %v4921 = vpop.f32.mrf.mxu0
        %v4922 = vadd.f32 %v4873, %v4921
        %v4923 = vpop.f32.mrf.mxu0
        %v4924 = vadd.f32 %v4875, %v4923
        %4925 = vmatmul.bf16.gmra.mxu0 %v4250
        %v4926 = vpop.f32.mrf.mxu0
        %v4927 = vadd.f32 %v4878, %v4926
        %v4928 = vpop.f32.mrf.mxu0
        %v4929 = vadd.f32 %v4880, %v4928
        %4930 = vmatmul.bf16.gmra.mxu0 %v4254
        %v4931 = vpop.f32.mrf.mxu0
        %v4932 = vadd.f32 %v4883, %v4931
        %v4933 = vpop.f32.mrf.mxu0
        %v4934 = vadd.f32 %v4885, %v4933
        %4935 = vmatmul.bf16.gmra.mxu0 %v4258
        %v4936 = vpop.f32.mrf.mxu0
        %v4937 = vadd.f32 %v4888, %v4936
        %v4938 = vpop.f32.mrf.mxu0
        %v4939 = vadd.f32 %v4890, %v4938
        %4940 = vmatmul.bf16.gmra.mxu0 %v4262
        %v4941 = vpop.f32.mrf.mxu0
        %v4942 = vadd.f32 %v4893, %v4941
        %v4943 = vpop.f32.mrf.mxu0
        %v4944 = vadd.f32 %v4895, %v4943
        %4945 = vmatmul.bf16.gmra.mxu0 %v4266
        %v4946 = vpop.f32.mrf.mxu0
        %v4947 = vadd.f32 %v4898, %v4946
        %v4948 = vpop.f32.mrf.mxu0
        %v4949 = vadd.f32 %v4900, %v4948
        %4950 = vmatmul.bf16.gmra.mxu0 %v4270
        %v4951 = vpop.f32.mrf.mxu0
        %v4952 = vadd.f32 %v4903, %v4951
        %v4953 = vpop.f32.mrf.mxu0
        %v4954 = vadd.f32 %v4905, %v4953
        %4955 = vmatmul.bf16.gmra.mxu0 %v4274
        %v4956 = vpop.f32.mrf.mxu0
        %v4957 = vadd.f32 %v4908, %v4956
        %v4958 = vpop.f32.mrf.mxu0
        %v4959 = vadd.f32 %v4910, %v4958
        %4960 = vdwg.mxu0
        %4961 = vmatpush.bf16.msra.mxu0 %v4586
        %4962 = vmatpush.bf16.msra.mxu0 %v4584
        %4963 = vmatpush.bf16.msra.mxu0 %v4582
        %4964 = vmatpush.bf16.msra.mxu0 %v4580
        %4965 = vmatpush.bf16.msra.mxu0 %v4578
        %4966 = vmatpush.bf16.msra.mxu0 %v4576
        %4967 = vmatpush.bf16.msra.mxu0 %v4574
        %4968 = vmatpush.bf16.msra.mxu0 %v4572
        %4969 = vmatmul.bf16.gmra.mxu0 %v4247
        %v4970 = vpop.f32.mrf.mxu0
        %v4971 = vadd.f32 %v4922, %v4970
        %v4972 = vpop.f32.mrf.mxu0
        %v4973 = vadd.f32 %v4924, %v4972
        %4974 = vmatmul.bf16.gmra.mxu0 %v4251
        %v4975 = vpop.f32.mrf.mxu0
        %v4976 = vadd.f32 %v4927, %v4975
        %v4977 = vpop.f32.mrf.mxu0
        %v4978 = vadd.f32 %v4929, %v4977
        %4979 = vmatmul.bf16.gmra.mxu0 %v4255
        %v4980 = vpop.f32.mrf.mxu0
        %v4981 = vadd.f32 %v4932, %v4980
        %v4982 = vpop.f32.mrf.mxu0
        %v4983 = vadd.f32 %v4934, %v4982
        %4984 = vmatmul.bf16.gmra.mxu0 %v4259
        %v4985 = vpop.f32.mrf.mxu0
        %v4986 = vadd.f32 %v4937, %v4985
        %v4987 = vpop.f32.mrf.mxu0
        %v4988 = vadd.f32 %v4939, %v4987
        %4989 = vmatmul.bf16.gmra.mxu0 %v4263
        %v4990 = vpop.f32.mrf.mxu0
        %v4991 = vadd.f32 %v4942, %v4990
        %v4992 = vpop.f32.mrf.mxu0
        %v4993 = vadd.f32 %v4944, %v4992
        %4994 = vmatmul.bf16.gmra.mxu0 %v4267
        %v4995 = vpop.f32.mrf.mxu0
        %v4996 = vadd.f32 %v4947, %v4995
        %v4997 = vpop.f32.mrf.mxu0
        %v4998 = vadd.f32 %v4949, %v4997
        %4999 = vmatmul.bf16.gmra.mxu0 %v4271
        %v5000 = vpop.f32.mrf.mxu0
        %v5001 = vadd.f32 %v4952, %v5000
        %v5002 = vpop.f32.mrf.mxu0
        %v5003 = vadd.f32 %v4954, %v5002
        %5004 = vmatmul.bf16.gmra.mxu0 %v4275
        %v5005 = vpop.f32.mrf.mxu0
        %v5006 = vadd.f32 %v4957, %v5005
        %v5007 = vpop.f32.mrf.mxu0
        %v5008 = vadd.f32 %v4959, %v5007
        %5009 = vdwg.mxu0
        %5010 = vmatpush.bf16.msra.mxu0 %v4602
        %5011 = vmatpush.bf16.msra.mxu0 %v4600
        %5012 = vmatpush.bf16.msra.mxu0 %v4598
        %5013 = vmatpush.bf16.msra.mxu0 %v4596
        %5014 = vmatpush.bf16.msra.mxu0 %v4594
        %5015 = vmatpush.bf16.msra.mxu0 %v4592
        %5016 = vmatpush.bf16.msra.mxu0 %v4590
        %5017 = vmatpush.bf16.msra.mxu0 %v4588
        %5018 = vmatmul.bf16.gmra.mxu0 %v4248
        %v5019 = vpop.f32.mrf.mxu0
        %v5020 = vadd.f32 %v4971, %v5019
        %v5021 = vpop.f32.mrf.mxu0
        %v5022 = vadd.f32 %v4973, %v5021
        %5023 = vmatmul.bf16.gmra.mxu0 %v4252
        %v5024 = vpop.f32.mrf.mxu0
        %v5025 = vadd.f32 %v4976, %v5024
        %v5026 = vpop.f32.mrf.mxu0
        %v5027 = vadd.f32 %v4978, %v5026
        %5028 = vmatmul.bf16.gmra.mxu0 %v4256
        %v5029 = vpop.f32.mrf.mxu0
        %v5030 = vadd.f32 %v4981, %v5029
        %v5031 = vpop.f32.mrf.mxu0
        %v5032 = vadd.f32 %v4983, %v5031
        %5033 = vmatmul.bf16.gmra.mxu0 %v4260
        %v5034 = vpop.f32.mrf.mxu0
        %v5035 = vadd.f32 %v4986, %v5034
        %v5036 = vpop.f32.mrf.mxu0
        %v5037 = vadd.f32 %v4988, %v5036
        %5038 = vmatmul.bf16.gmra.mxu0 %v4264
        %v5039 = vpop.f32.mrf.mxu0
        %v5040 = vadd.f32 %v4991, %v5039
        %v5041 = vpop.f32.mrf.mxu0
        %v5042 = vadd.f32 %v4993, %v5041
        %5043 = vmatmul.bf16.gmra.mxu0 %v4268
        %v5044 = vpop.f32.mrf.mxu0
        %v5045 = vadd.f32 %v4996, %v5044
        %v5046 = vpop.f32.mrf.mxu0
        %v5047 = vadd.f32 %v4998, %v5046
        %5048 = vmatmul.bf16.gmra.mxu0 %v4272
        %v5049 = vpop.f32.mrf.mxu0
        %v5050 = vadd.f32 %v5001, %v5049
        %v5051 = vpop.f32.mrf.mxu0
        %v5052 = vadd.f32 %v5003, %v5051
        %5053 = vmatmul.bf16.gmra.mxu0 %v4276
        %v5054 = vpop.f32.mrf.mxu0
        %v5055 = vadd.f32 %v5006, %v5054
        %v5056 = vpop.f32.mrf.mxu0
        %v5057 = vadd.f32 %v5008, %v5056
        %5058 = vdwg.mxu0
        %v5059 = vadd.f32 %v3347, %v4824
        %v5060 = vadd.f32 %v3348, %v5020
        %v5061 = vadd.f32 %v3349, %v4826
        %v5062 = vadd.f32 %v3350, %v5022
        %v5063 = vadd.f32 %v3351, %v4829
        %v5064 = vadd.f32 %v3352, %v5025
        %v5065 = vadd.f32 %v3353, %v4831
        %v5066 = vadd.f32 %v3354, %v5027
        %v5067 = vadd.f32 %v3355, %v4834
        %v5068 = vadd.f32 %v3356, %v5030
        %v5069 = vadd.f32 %v3357, %v4836
        %v5070 = vadd.f32 %v3358, %v5032
        %v5071 = vadd.f32 %v3359, %v4839
        %v5072 = vadd.f32 %v3360, %v5035
        %v5073 = vadd.f32 %v3361, %v4841
        %v5074 = vadd.f32 %v3362, %v5037
        %v5075 = vadd.f32 %v3363, %v4844
        %v5076 = vadd.f32 %v3364, %v5040
        %v5077 = vadd.f32 %v3365, %v4846
        %v5078 = vadd.f32 %v3366, %v5042
        %v5079 = vadd.f32 %v3367, %v4849
        %v5080 = vadd.f32 %v3368, %v5045
        %v5081 = vadd.f32 %v3369, %v4851
        %v5082 = vadd.f32 %v3370, %v5047
        %v5083 = vadd.f32 %v3371, %v4854
        %v5084 = vadd.f32 %v3372, %v5050
        %v5085 = vadd.f32 %v3373, %v4856
        %v5086 = vadd.f32 %v3374, %v5052
        %v5087 = vadd.f32 %v3375, %v4859
        %v5088 = vadd.f32 %v3376, %v5055
        %v5089 = vadd.f32 %v3377, %v4861
        %v5090 = vadd.f32 %v3378, %v5057
        %v5091 = vld [vmem:[%s11] sm:$0x3]
        %v5092 = vld [vmem:[#allocation17] sm:$0x3]
        %v5093 = vadd.f32 %v5059, %v5060
        %5094 = vadd.xlane.f32.xlu0 %v5093
        %v5095 = vpop.xlane.xlu0 %5094
        %v5096 = vadd.f32 %v5061, %v5062
        %5097 = vadd.xlane.f32.xlu0 %v5096
        %v5098 = vpop.xlane.xlu0 %5097
        %v5099 = vadd.f32 %v5063, %v5064
        %5100 = vadd.xlane.f32.xlu0 %v5099
        %v5101 = vpop.xlane.xlu0 %5100
        %v5102 = vadd.f32 %v5065, %v5066
        %5103 = vadd.xlane.f32.xlu0 %v5102
        %v5104 = vpop.xlane.xlu0 %5103
        %v5105 = vadd.f32 %v5067, %v5068
        %5106 = vadd.xlane.f32.xlu0 %v5105
        %v5107 = vpop.xlane.xlu0 %5106
        %v5108 = vadd.f32 %v5069, %v5070
        %5109 = vadd.xlane.f32.xlu0 %v5108
        %v5110 = vpop.xlane.xlu0 %5109
        %v5111 = vadd.f32 %v5071, %v5072
        %5112 = vadd.xlane.f32.xlu0 %v5111
        %v5113 = vpop.xlane.xlu0 %5112
        %v5114 = vadd.f32 %v5073, %v5074
        %5115 = vadd.xlane.f32.xlu0 %v5114
        %v5116 = vpop.xlane.xlu0 %5115
        %v5117 = vadd.f32 %v5075, %v5076
        %5118 = vadd.xlane.f32.xlu0 %v5117
        %v5119 = vpop.xlane.xlu0 %5118
        %v5120 = vadd.f32 %v5077, %v5078
        %5121 = vadd.xlane.f32.xlu0 %v5120
        %v5122 = vpop.xlane.xlu0 %5121
        %v5123 = vadd.f32 %v5079, %v5080
        %5124 = vadd.xlane.f32.xlu0 %v5123
        %v5125 = vpop.xlane.xlu0 %5124
        %v5126 = vadd.f32 %v5081, %v5082
        %5127 = vadd.xlane.f32.xlu0 %v5126
        %v5128 = vpop.xlane.xlu0 %5127
        %v5129 = vadd.f32 %v5083, %v5084
        %5130 = vadd.xlane.f32.xlu0 %v5129
        %v5131 = vpop.xlane.xlu0 %5130
        %v5132 = vadd.f32 %v5085, %v5086
        %5133 = vadd.xlane.f32.xlu0 %v5132
        %v5134 = vpop.xlane.xlu0 %5133
        %v5135 = vadd.f32 %v5087, %v5088
        %5136 = vadd.xlane.f32.xlu0 %v5135
        %v5137 = vpop.xlane.xlu0 %5136
        %v5138 = vadd.f32 %v5089, %v5090
        %5139 = vadd.xlane.f32.xlu0 %v5138
        %v5140 = vpop.xlane.xlu0 %5139
        %v5141 = vmul.f32 %v5095, %v2904
        %v5142 = vmul.f32 %v5098, %v2904
        %v5143 = vmul.f32 %v5101, %v2904
        %v5144 = vmul.f32 %v5104, %v2904
        %v5145 = vmul.f32 %v5107, %v2904
        %v5146 = vmul.f32 %v5110, %v2904
        %v5147 = vmul.f32 %v5113, %v2904
        %v5148 = vmul.f32 %v5116, %v2904
        %v5149 = vmul.f32 %v5119, %v2904
        %v5150 = vmul.f32 %v5122, %v2904
        %v5151 = vmul.f32 %v5125, %v2904
        %v5152 = vmul.f32 %v5128, %v2904
        %v5153 = vmul.f32 %v5131, %v2904
        %v5154 = vmul.f32 %v5134, %v2904
        %v5155 = vmul.f32 %v5137, %v2904
        %v5156 = vmul.f32 %v5140, %v2904
        %v5157 = vmul.f32 %v5059, %v5059
        %v5158 = vmul.f32 %v5060, %v5060
        %v5159 = vmul.f32 %v5061, %v5061
        %v5160 = vmul.f32 %v5062, %v5062
        %v5161 = vmul.f32 %v5063, %v5063
        %v5162 = vmul.f32 %v5064, %v5064
        %v5163 = vmul.f32 %v5065, %v5065
        %v5164 = vmul.f32 %v5066, %v5066
        %v5165 = vmul.f32 %v5067, %v5067
        %v5166 = vmul.f32 %v5068, %v5068
        %v5167 = vmul.f32 %v5069, %v5069
        %v5168 = vmul.f32 %v5070, %v5070
        %v5169 = vmul.f32 %v5071, %v5071
        %v5170 = vmul.f32 %v5072, %v5072
        %v5171 = vmul.f32 %v5073, %v5073
        %v5172 = vmul.f32 %v5074, %v5074
        %v5173 = vmul.f32 %v5075, %v5075
        %v5174 = vmul.f32 %v5076, %v5076
        %v5175 = vmul.f32 %v5077, %v5077
        %v5176 = vmul.f32 %v5078, %v5078
        %v5177 = vmul.f32 %v5079, %v5079
        %v5178 = vmul.f32 %v5080, %v5080
        %v5179 = vmul.f32 %v5081, %v5081
        %v5180 = vmul.f32 %v5082, %v5082
        %v5181 = vmul.f32 %v5083, %v5083
        %v5182 = vmul.f32 %v5084, %v5084
        %v5183 = vmul.f32 %v5085, %v5085
        %v5184 = vmul.f32 %v5086, %v5086
        %v5185 = vmul.f32 %v5087, %v5087
        %v5186 = vmul.f32 %v5088, %v5088
        %v5187 = vmul.f32 %v5089, %v5089
        %v5188 = vmul.f32 %v5090, %v5090
        %v5189 = vadd.f32 %v5157, %v5158
        %5190 = vadd.xlane.f32.xlu0 %v5189
        %v5191 = vpop.xlane.xlu0 %5190
        %v5192 = vadd.f32 %v5159, %v5160
        %5193 = vadd.xlane.f32.xlu0 %v5192
        %v5194 = vpop.xlane.xlu0 %5193
        %v5195 = vadd.f32 %v5161, %v5162
        %5196 = vadd.xlane.f32.xlu0 %v5195
        %v5197 = vpop.xlane.xlu0 %5196
        %v5198 = vadd.f32 %v5163, %v5164
        %5199 = vadd.xlane.f32.xlu0 %v5198
        %v5200 = vpop.xlane.xlu0 %5199
        %v5201 = vadd.f32 %v5165, %v5166
        %5202 = vadd.xlane.f32.xlu0 %v5201
        %v5203 = vpop.xlane.xlu0 %5202
        %v5204 = vadd.f32 %v5167, %v5168
        %5205 = vadd.xlane.f32.xlu0 %v5204
        %v5206 = vpop.xlane.xlu0 %5205
        %v5207 = vadd.f32 %v5169, %v5170
        %5208 = vadd.xlane.f32.xlu0 %v5207
        %v5209 = vpop.xlane.xlu0 %5208
        %v5210 = vadd.f32 %v5171, %v5172
        %5211 = vadd.xlane.f32.xlu0 %v5210
        %v5212 = vpop.xlane.xlu0 %5211
        %v5213 = vadd.f32 %v5173, %v5174
        %5214 = vadd.xlane.f32.xlu0 %v5213
        %v5215 = vpop.xlane.xlu0 %5214
        %v5216 = vadd.f32 %v5175, %v5176
        %5217 = vadd.xlane.f32.xlu0 %v5216
        %v5218 = vpop.xlane.xlu0 %5217
        %v5219 = vadd.f32 %v5177, %v5178
        %5220 = vadd.xlane.f32.xlu0 %v5219
        %v5221 = vpop.xlane.xlu0 %5220
        %v5222 = vadd.f32 %v5179, %v5180
        %5223 = vadd.xlane.f32.xlu0 %v5222
        %v5224 = vpop.xlane.xlu0 %5223
        %v5225 = vadd.f32 %v5181, %v5182
        %5226 = vadd.xlane.f32.xlu0 %v5225
        %v5227 = vpop.xlane.xlu0 %5226
        %v5228 = vadd.f32 %v5183, %v5184
        %5229 = vadd.xlane.f32.xlu0 %v5228
        %v5230 = vpop.xlane.xlu0 %5229
        %v5231 = vadd.f32 %v5185, %v5186
        %5232 = vadd.xlane.f32.xlu0 %v5231
        %v5233 = vpop.xlane.xlu0 %5232
        %v5234 = vadd.f32 %v5187, %v5188
        %5235 = vadd.xlane.f32.xlu0 %v5234
        %v5236 = vpop.xlane.xlu0 %5235
        %v5237 = vmul.f32 %v5191, %v2904
        %v5238 = vmul.f32 %v5194, %v2904
        %v5239 = vmul.f32 %v5197, %v2904
        %v5240 = vmul.f32 %v5200, %v2904
        %v5241 = vmul.f32 %v5203, %v2904
        %v5242 = vmul.f32 %v5206, %v2904
        %v5243 = vmul.f32 %v5209, %v2904
        %v5244 = vmul.f32 %v5212, %v2904
        %v5245 = vmul.f32 %v5215, %v2904
        %v5246 = vmul.f32 %v5218, %v2904
        %v5247 = vmul.f32 %v5221, %v2904
        %v5248 = vmul.f32 %v5224, %v2904
        %v5249 = vmul.f32 %v5227, %v2904
        %v5250 = vmul.f32 %v5230, %v2904
        %v5251 = vmul.f32 %v5233, %v2904
        %v5252 = vmul.f32 %v5236, %v2904
        %v5253 = vmul.f32 %v5141, %v5141
        %v5254 = vmul.f32 %v5142, %v5142
        %v5255 = vmul.f32 %v5143, %v5143
        %v5256 = vmul.f32 %v5144, %v5144
        %v5257 = vmul.f32 %v5145, %v5145
        %v5258 = vmul.f32 %v5146, %v5146
        %v5259 = vmul.f32 %v5147, %v5147
        %v5260 = vmul.f32 %v5148, %v5148
        %v5261 = vmul.f32 %v5149, %v5149
        %v5262 = vmul.f32 %v5150, %v5150
        %v5263 = vmul.f32 %v5151, %v5151
        %v5264 = vmul.f32 %v5152, %v5152
        %v5265 = vmul.f32 %v5153, %v5153
        %v5266 = vmul.f32 %v5154, %v5154
        %v5267 = vmul.f32 %v5155, %v5155
        %v5268 = vmul.f32 %v5156, %v5156
        %v5269 = vsub.f32 %v5237, %v5253
        %v5270 = vsub.f32 %v5238, %v5254
        %v5271 = vsub.f32 %v5239, %v5255
        %v5272 = vsub.f32 %v5240, %v5256
        %v5273 = vsub.f32 %v5241, %v5257
        %v5274 = vsub.f32 %v5242, %v5258
        %v5275 = vsub.f32 %v5243, %v5259
        %v5276 = vsub.f32 %v5244, %v5260
        %v5277 = vsub.f32 %v5245, %v5261
        %v5278 = vsub.f32 %v5246, %v5262
        %v5279 = vsub.f32 %v5247, %v5263
        %v5280 = vsub.f32 %v5248, %v5264
        %v5281 = vsub.f32 %v5249, %v5265
        %v5282 = vsub.f32 %v5250, %v5266
        %v5283 = vsub.f32 %v5251, %v5267
        %v5284 = vsub.f32 %v5252, %v5268
        %v5285 = vmax.f32 %v5269, 0.0
        %v5286 = vmax.f32 %v5270, 0.0
        %v5287 = vmax.f32 %v5271, 0.0
        %v5288 = vmax.f32 %v5272, 0.0
        %v5289 = vmax.f32 %v5273, 0.0
        %v5290 = vmax.f32 %v5274, 0.0
        %v5291 = vmax.f32 %v5275, 0.0
        %v5292 = vmax.f32 %v5276, 0.0
        %v5293 = vmax.f32 %v5277, 0.0
        %v5294 = vmax.f32 %v5278, 0.0
        %v5295 = vmax.f32 %v5279, 0.0
        %v5296 = vmax.f32 %v5280, 0.0
        %v5297 = vmax.f32 %v5281, 0.0
        %v5298 = vmax.f32 %v5282, 0.0
        %v5299 = vmax.f32 %v5283, 0.0
        %v5300 = vmax.f32 %v5284, 0.0
        %v5301 = vsub.f32 %v5059, %v5141
        %v5302 = vsub.f32 %v5060, %v5141
        %v5303 = vsub.f32 %v5061, %v5142
        %v5304 = vsub.f32 %v5062, %v5142
        %v5305 = vsub.f32 %v5063, %v5143
        %v5306 = vsub.f32 %v5064, %v5143
        %v5307 = vsub.f32 %v5065, %v5144
        %v5308 = vsub.f32 %v5066, %v5144
        %v5309 = vsub.f32 %v5067, %v5145
        %v5310 = vsub.f32 %v5068, %v5145
        %v5311 = vsub.f32 %v5069, %v5146
        %v5312 = vsub.f32 %v5070, %v5146
        %v5313 = vsub.f32 %v5071, %v5147
        %v5314 = vsub.f32 %v5072, %v5147
        %v5315 = vsub.f32 %v5073, %v5148
        %v5316 = vsub.f32 %v5074, %v5148
        %v5317 = vsub.f32 %v5075, %v5149
        %v5318 = vsub.f32 %v5076, %v5149
        %v5319 = vsub.f32 %v5077, %v5150
        %v5320 = vsub.f32 %v5078, %v5150
        %v5321 = vsub.f32 %v5079, %v5151
        %v5322 = vsub.f32 %v5080, %v5151
        %v5323 = vsub.f32 %v5081, %v5152
        %v5324 = vsub.f32 %v5082, %v5152
        %v5325 = vsub.f32 %v5083, %v5153
        %v5326 = vsub.f32 %v5084, %v5153
        %v5327 = vsub.f32 %v5085, %v5154
        %v5328 = vsub.f32 %v5086, %v5154
        %v5329 = vsub.f32 %v5087, %v5155
        %v5330 = vsub.f32 %v5088, %v5155
        %v5331 = vsub.f32 %v5089, %v5156
        %v5332 = vsub.f32 %v5090, %v5156
        %v5333 = vadd.f32 %v5285, 1e-05
        %v5334 = vadd.f32 %v5286, 1e-05
        %v5335 = vadd.f32 %v5287, 1e-05
        %v5336 = vadd.f32 %v5288, 1e-05
        %v5337 = vadd.f32 %v5289, 1e-05
        %v5338 = vadd.f32 %v5290, 1e-05
        %v5339 = vadd.f32 %v5291, 1e-05
        %v5340 = vadd.f32 %v5292, 1e-05
        %v5341 = vadd.f32 %v5293, 1e-05
        %v5342 = vadd.f32 %v5294, 1e-05
        %v5343 = vadd.f32 %v5295, 1e-05
        %v5344 = vadd.f32 %v5296, 1e-05
        %v5345 = vadd.f32 %v5297, 1e-05
        %v5346 = vadd.f32 %v5298, 1e-05
        %v5347 = vadd.f32 %v5299, 1e-05
        %v5348 = vadd.f32 %v5300, 1e-05
        %v5349 = vrsqrt.pop %v5333
        %v5350 = vmul.f32 %v5349, %v5333
        %v5351 = vmul.f32 %v5350, %v5349
        %v5352 = vmul.f32 0.5, %v5351
        %v5353 = vsub.f32 1.5, %v5352
        %v5354 = vmul.f32 %v5349, %v5353
        %vm5355 = vweird.f32 %v5333
        %vm5356 = vweird.f32 %v5349
        %vm5357 = vmor %vm5355, %vm5356
        %v5358 = vsel %vm5357, %v5349, %v5354
        %v5359 = vrsqrt.pop %v5334
        %v5360 = vmul.f32 %v5359, %v5334
        %v5361 = vmul.f32 %v5360, %v5359
        %v5362 = vmul.f32 0.5, %v5361
        %v5363 = vsub.f32 1.5, %v5362
        %v5364 = vmul.f32 %v5359, %v5363
        %vm5365 = vweird.f32 %v5334
        %vm5366 = vweird.f32 %v5359
        %vm5367 = vmor %vm5365, %vm5366
        %v5368 = vsel %vm5367, %v5359, %v5364
        %v5369 = vrsqrt.pop %v5335
        %v5370 = vmul.f32 %v5369, %v5335
        %v5371 = vmul.f32 %v5370, %v5369
        %v5372 = vmul.f32 0.5, %v5371
        %v5373 = vsub.f32 1.5, %v5372
        %v5374 = vmul.f32 %v5369, %v5373
        %vm5375 = vweird.f32 %v5335
        %vm5376 = vweird.f32 %v5369
        %vm5377 = vmor %vm5375, %vm5376
        %v5378 = vsel %vm5377, %v5369, %v5374
        %v5379 = vrsqrt.pop %v5336
        %v5380 = vmul.f32 %v5379, %v5336
        %v5381 = vmul.f32 %v5380, %v5379
        %v5382 = vmul.f32 0.5, %v5381
        %v5383 = vsub.f32 1.5, %v5382
        %v5384 = vmul.f32 %v5379, %v5383
        %vm5385 = vweird.f32 %v5336
        %vm5386 = vweird.f32 %v5379
        %vm5387 = vmor %vm5385, %vm5386
        %v5388 = vsel %vm5387, %v5379, %v5384
        %v5389 = vrsqrt.pop %v5337
        %v5390 = vmul.f32 %v5389, %v5337
        %v5391 = vmul.f32 %v5390, %v5389
        %v5392 = vmul.f32 0.5, %v5391
        %v5393 = vsub.f32 1.5, %v5392
        %v5394 = vmul.f32 %v5389, %v5393
        %vm5395 = vweird.f32 %v5337
        %vm5396 = vweird.f32 %v5389
        %vm5397 = vmor %vm5395, %vm5396
        %v5398 = vsel %vm5397, %v5389, %v5394
        %v5399 = vrsqrt.pop %v5338
        %v5400 = vmul.f32 %v5399, %v5338
        %v5401 = vmul.f32 %v5400, %v5399
        %v5402 = vmul.f32 0.5, %v5401
        %v5403 = vsub.f32 1.5, %v5402
        %v5404 = vmul.f32 %v5399, %v5403
        %vm5405 = vweird.f32 %v5338
        %vm5406 = vweird.f32 %v5399
        %vm5407 = vmor %vm5405, %vm5406
        %v5408 = vsel %vm5407, %v5399, %v5404
        %v5409 = vrsqrt.pop %v5339
        %v5410 = vmul.f32 %v5409, %v5339
        %v5411 = vmul.f32 %v5410, %v5409
        %v5412 = vmul.f32 0.5, %v5411
        %v5413 = vsub.f32 1.5, %v5412
        %v5414 = vmul.f32 %v5409, %v5413
        %vm5415 = vweird.f32 %v5339
        %vm5416 = vweird.f32 %v5409
        %vm5417 = vmor %vm5415, %vm5416
        %v5418 = vsel %vm5417, %v5409, %v5414
        %v5419 = vrsqrt.pop %v5340
        %v5420 = vmul.f32 %v5419, %v5340
        %v5421 = vmul.f32 %v5420, %v5419
        %v5422 = vmul.f32 0.5, %v5421
        %v5423 = vsub.f32 1.5, %v5422
        %v5424 = vmul.f32 %v5419, %v5423
        %vm5425 = vweird.f32 %v5340
        %vm5426 = vweird.f32 %v5419
        %vm5427 = vmor %vm5425, %vm5426
        %v5428 = vsel %vm5427, %v5419, %v5424
        %v5429 = vrsqrt.pop %v5341
        %v5430 = vmul.f32 %v5429, %v5341
        %v5431 = vmul.f32 %v5430, %v5429
        %v5432 = vmul.f32 0.5, %v5431
        %v5433 = vsub.f32 1.5, %v5432
        %v5434 = vmul.f32 %v5429, %v5433
        %vm5435 = vweird.f32 %v5341
        %vm5436 = vweird.f32 %v5429
        %vm5437 = vmor %vm5435, %vm5436
        %v5438 = vsel %vm5437, %v5429, %v5434
        %v5439 = vrsqrt.pop %v5342
        %v5440 = vmul.f32 %v5439, %v5342
        %v5441 = vmul.f32 %v5440, %v5439
        %v5442 = vmul.f32 0.5, %v5441
        %v5443 = vsub.f32 1.5, %v5442
        %v5444 = vmul.f32 %v5439, %v5443
        %vm5445 = vweird.f32 %v5342
        %vm5446 = vweird.f32 %v5439
        %vm5447 = vmor %vm5445, %vm5446
        %v5448 = vsel %vm5447, %v5439, %v5444
        %v5449 = vrsqrt.pop %v5343
        %v5450 = vmul.f32 %v5449, %v5343
        %v5451 = vmul.f32 %v5450, %v5449
        %v5452 = vmul.f32 0.5, %v5451
        %v5453 = vsub.f32 1.5, %v5452
        %v5454 = vmul.f32 %v5449, %v5453
        %vm5455 = vweird.f32 %v5343
        %vm5456 = vweird.f32 %v5449
        %vm5457 = vmor %vm5455, %vm5456
        %v5458 = vsel %vm5457, %v5449, %v5454
        %v5459 = vrsqrt.pop %v5344
        %v5460 = vmul.f32 %v5459, %v5344
        %v5461 = vmul.f32 %v5460, %v5459
        %v5462 = vmul.f32 0.5, %v5461
        %v5463 = vsub.f32 1.5, %v5462
        %v5464 = vmul.f32 %v5459, %v5463
        %vm5465 = vweird.f32 %v5344
        %vm5466 = vweird.f32 %v5459
        %vm5467 = vmor %vm5465, %vm5466
        %v5468 = vsel %vm5467, %v5459, %v5464
        %v5469 = vrsqrt.pop %v5345
        %v5470 = vmul.f32 %v5469, %v5345
        %v5471 = vmul.f32 %v5470, %v5469
        %v5472 = vmul.f32 0.5, %v5471
        %v5473 = vsub.f32 1.5, %v5472
        %v5474 = vmul.f32 %v5469, %v5473
        %vm5475 = vweird.f32 %v5345
        %vm5476 = vweird.f32 %v5469
        %vm5477 = vmor %vm5475, %vm5476
        %v5478 = vsel %vm5477, %v5469, %v5474
        %v5479 = vrsqrt.pop %v5346
        %v5480 = vmul.f32 %v5479, %v5346
        %v5481 = vmul.f32 %v5480, %v5479
        %v5482 = vmul.f32 0.5, %v5481
        %v5483 = vsub.f32 1.5, %v5482
        %v5484 = vmul.f32 %v5479, %v5483
        %vm5485 = vweird.f32 %v5346
        %vm5486 = vweird.f32 %v5479
        %vm5487 = vmor %vm5485, %vm5486
        %v5488 = vsel %vm5487, %v5479, %v5484
        %v5489 = vrsqrt.pop %v5347
        %v5490 = vmul.f32 %v5489, %v5347
        %v5491 = vmul.f32 %v5490, %v5489
        %v5492 = vmul.f32 0.5, %v5491
        %v5493 = vsub.f32 1.5, %v5492
        %v5494 = vmul.f32 %v5489, %v5493
        %vm5495 = vweird.f32 %v5347
        %vm5496 = vweird.f32 %v5489
        %vm5497 = vmor %vm5495, %vm5496
        %v5498 = vsel %vm5497, %v5489, %v5494
        %v5499 = vrsqrt.pop %v5348
        %v5500 = vmul.f32 %v5499, %v5348
        %v5501 = vmul.f32 %v5500, %v5499
        %v5502 = vmul.f32 0.5, %v5501
        %v5503 = vsub.f32 1.5, %v5502
        %v5504 = vmul.f32 %v5499, %v5503
        %vm5505 = vweird.f32 %v5348
        %vm5506 = vweird.f32 %v5499
        %vm5507 = vmor %vm5505, %vm5506
        %v5508 = vsel %vm5507, %v5499, %v5504
        %v5509 = vmul.f32 %v5301, %v5358
        %v5510 = vmul.f32 %v5302, %v5358
        %v5511 = vmul.f32 %v5303, %v5368
        %v5512 = vmul.f32 %v5304, %v5368
        %v5513 = vmul.f32 %v5305, %v5378
        %v5514 = vmul.f32 %v5306, %v5378
        %v5515 = vmul.f32 %v5307, %v5388
        %v5516 = vmul.f32 %v5308, %v5388
        %v5517 = vmul.f32 %v5309, %v5398
        %v5518 = vmul.f32 %v5310, %v5398
        %v5519 = vmul.f32 %v5311, %v5408
        %v5520 = vmul.f32 %v5312, %v5408
        %v5521 = vmul.f32 %v5313, %v5418
        %v5522 = vmul.f32 %v5314, %v5418
        %v5523 = vmul.f32 %v5315, %v5428
        %v5524 = vmul.f32 %v5316, %v5428
        %v5525 = vmul.f32 %v5317, %v5438
        %v5526 = vmul.f32 %v5318, %v5438
        %v5527 = vmul.f32 %v5319, %v5448
        %v5528 = vmul.f32 %v5320, %v5448
        %v5529 = vmul.f32 %v5321, %v5458
        %v5530 = vmul.f32 %v5322, %v5458
        %v5531 = vmul.f32 %v5323, %v5468
        %v5532 = vmul.f32 %v5324, %v5468
        %v5533 = vmul.f32 %v5325, %v5478
        %v5534 = vmul.f32 %v5326, %v5478
        %v5535 = vmul.f32 %v5327, %v5488
        %v5536 = vmul.f32 %v5328, %v5488
        %v5537 = vmul.f32 %v5329, %v5498
        %v5538 = vmul.f32 %v5330, %v5498
        %v5539 = vmul.f32 %v5331, %v5508
        %v5540 = vmul.f32 %v5332, %v5508
        %v5542 = vperm.slane %v5091, 0
        %v5543 = vperm.slane %v5091, 1
        %v5546 = vmul.f32 %v5509, %v5542
        %v5547 = vmul.f32 %v5510, %v5543
        %v5548 = vmul.f32 %v5511, %v5542
        %v5549 = vmul.f32 %v5512, %v5543
        %v5550 = vmul.f32 %v5513, %v5542
        %v5551 = vmul.f32 %v5514, %v5543
        %v5552 = vmul.f32 %v5515, %v5542
        %v5553 = vmul.f32 %v5516, %v5543
        %v5554 = vmul.f32 %v5517, %v5542
        %v5555 = vmul.f32 %v5518, %v5543
        %v5556 = vmul.f32 %v5519, %v5542
        %v5557 = vmul.f32 %v5520, %v5543
        %v5558 = vmul.f32 %v5521, %v5542
        %v5559 = vmul.f32 %v5522, %v5543
        %v5560 = vmul.f32 %v5523, %v5542
        %v5561 = vmul.f32 %v5524, %v5543
        %v5562 = vmul.f32 %v5525, %v5542
        %v5563 = vmul.f32 %v5526, %v5543
        %v5564 = vmul.f32 %v5527, %v5542
        %v5565 = vmul.f32 %v5528, %v5543
        %v5566 = vmul.f32 %v5529, %v5542
        %v5567 = vmul.f32 %v5530, %v5543
        %v5568 = vmul.f32 %v5531, %v5542
        %v5569 = vmul.f32 %v5532, %v5543
        %v5570 = vmul.f32 %v5533, %v5542
        %v5571 = vmul.f32 %v5534, %v5543
        %v5572 = vmul.f32 %v5535, %v5542
        %v5573 = vmul.f32 %v5536, %v5543
        %v5574 = vmul.f32 %v5537, %v5542
        %v5575 = vmul.f32 %v5538, %v5543
        %v5576 = vmul.f32 %v5539, %v5542
        %v5577 = vmul.f32 %v5540, %v5543
        %v5579 = vperm.slane %v5092, 0
        %v5580 = vperm.slane %v5092, 1
        %v5583 = vadd.f32 %v5546, %v5579
        %v5584 = vadd.f32 %v5547, %v5580
        %v5585 = vadd.f32 %v5548, %v5579
        %v5586 = vadd.f32 %v5549, %v5580
        %v5587 = vadd.f32 %v5550, %v5579
        %v5588 = vadd.f32 %v5551, %v5580
        %v5589 = vadd.f32 %v5552, %v5579
        %v5590 = vadd.f32 %v5553, %v5580
        %v5591 = vadd.f32 %v5554, %v5579
        %v5592 = vadd.f32 %v5555, %v5580
        %v5593 = vadd.f32 %v5556, %v5579
        %v5594 = vadd.f32 %v5557, %v5580
        %v5595 = vadd.f32 %v5558, %v5579
        %v5596 = vadd.f32 %v5559, %v5580
        %v5597 = vadd.f32 %v5560, %v5579
        %v5598 = vadd.f32 %v5561, %v5580
        %v5599 = vadd.f32 %v5562, %v5579
        %v5600 = vadd.f32 %v5563, %v5580
        %v5601 = vadd.f32 %v5564, %v5579
        %v5602 = vadd.f32 %v5565, %v5580
        %v5603 = vadd.f32 %v5566, %v5579
        %v5604 = vadd.f32 %v5567, %v5580
        %v5605 = vadd.f32 %v5568, %v5579
        %v5606 = vadd.f32 %v5569, %v5580
        %v5607 = vadd.f32 %v5570, %v5579
        %v5608 = vadd.f32 %v5571, %v5580
        %v5609 = vadd.f32 %v5572, %v5579
        %v5610 = vadd.f32 %v5573, %v5580
        %v5611 = vadd.f32 %v5574, %v5579
        %v5612 = vadd.f32 %v5575, %v5580
        %v5613 = vadd.f32 %v5576, %v5579
        %v5614 = vadd.f32 %v5577, %v5580
        %5615 = vst [vmem:[%s599] sm:$0xff] %v5583
        %5616 = vst [vmem:[%s599 + $0x8] sm:$0xff] %v5584
        %5617 = vst [vmem:[%s599 + $0x10] sm:$0xff] %v5585
        %5618 = vst [vmem:[%s599 + $0x18] sm:$0xff] %v5586
        %5619 = vst [vmem:[%s599 + $0x20] sm:$0xff] %v5587
        %5620 = vst [vmem:[%s599 + $0x28] sm:$0xff] %v5588
        %5621 = vst [vmem:[%s599 + $0x30] sm:$0xff] %v5589
        %5622 = vst [vmem:[%s599 + $0x38] sm:$0xff] %v5590
        %5623 = vst [vmem:[%s599 + $0x40] sm:$0xff] %v5591
        %5624 = vst [vmem:[%s599 + $0x48] sm:$0xff] %v5592
        %5625 = vst [vmem:[%s599 + $0x50] sm:$0xff] %v5593
        %5626 = vst [vmem:[%s599 + $0x58] sm:$0xff] %v5594
        %5627 = vst [vmem:[%s599 + $0x60] sm:$0xff] %v5595
        %5628 = vst [vmem:[%s599 + $0x68] sm:$0xff] %v5596
        %5629 = vst [vmem:[%s599 + $0x70] sm:$0xff] %v5597
        %5630 = vst [vmem:[%s599 + $0x78] sm:$0xff] %v5598
        %5631 = vst [vmem:[%s599 + $0x80] sm:$0xff] %v5599
        %5632 = vst [vmem:[%s599 + $0x88] sm:$0xff] %v5600
        %5633 = vst [vmem:[%s599 + $0x90] sm:$0xff] %v5601
        %5634 = vst [vmem:[%s599 + $0x98] sm:$0xff] %v5602
        %5635 = vst [vmem:[%s599 + $0xa0] sm:$0xff] %v5603
        %5636 = vst [vmem:[%s599 + $0xa8] sm:$0xff] %v5604
        %5637 = vst [vmem:[%s599 + $0xb0] sm:$0xff] %v5605
        %5638 = vst [vmem:[%s599 + $0xb8] sm:$0xff] %v5606
        %5639 = vst [vmem:[%s599 + $0xc0] sm:$0xff] %v5607
        %5640 = vst [vmem:[%s599 + $0xc8] sm:$0xff] %v5608
        %5641 = vst [vmem:[%s599 + $0xd0] sm:$0xff] %v5609
        %5642 = vst [vmem:[%s599 + $0xd8] sm:$0xff] %v5610
        %5643 = vst [vmem:[%s599 + $0xe0] sm:$0xff] %v5611
        %5644 = vst [vmem:[%s599 + $0xe8] sm:$0xff] %v5612
        %5645 = vst [vmem:[%s599 + $0xf0] sm:$0xff] %v5613
        %5646 = vst [vmem:[%s599 + $0xf8] sm:$0xff] %v5614
        %s5647 = sand.u32 %s321, 1
        %s5648 = scalar_lea.sflag [#allocation4], %s5647
        %s5649 = sand.u32 %s321, 1
        %s5650 = smul.addr %s5649, 256
        %s5651 = scalar_lea.vmem [#allocation19], %s5650
        // Predicated region
        $region113: #{encoder_layer_pallas.1} parent=71 // pred_check
          %p5652 = pneg %p331
        $region114: #{encoder_layer_pallas.1} parent=71 // pred_check_branch
          %5654 = sbr.rel (%p5652) target = $region116
        $region115: #{encoder_layer_pallas.1} parent=71 // pred_region
          %5656 = vsyncadd %s5648, 0
          %s5657 = smul.addr %s35, 32
          %s5658 = smul.addr %s5657, 8
          %s5659 = scalar_lea.hbm %s13, %s5658
          %s5660 = sshll.u32 %s5651, 4
          %s5661 = int_to_ptr.vmem [resolvable:$true] %s5660
          %s5662 = sshll.u32 %s5659, 4
          %s5663 = int_to_ptr.hbm [resolvable:$true] %s5662
          %5668 = dma.vmem_to_hbm [thread:$0]  %s5661, 4096, %s5663, %s5648, 256, 256, 16
        $region116: #{encoder_layer_pallas.1} parent=71 // pred_fallthru
          _
      $region72: #{encoder_layer_pallas.1} parent=5 // pred_fallthru
        _
      %p5669 = scmp.le.s32.totalorder 2, %s30
      // Predicated region
      $region117: #{encoder_layer_pallas.1} parent=5 // pred_check
        %p5670 = pneg %p5669
      $region118: #{encoder_layer_pallas.1} parent=5 // pred_check_branch
        %5672 = sbr.rel (%p5670) target = $region120
      $region119: #{encoder_layer_pallas.1} parent=5 // pred_region
        %s5673 = ssub.s32 %s30, 2
        // Predicated region
        $region121: #{encoder_layer_pallas.1} parent=119 // pred_check
          %p5674 = pneg %p337
        $region122: #{encoder_layer_pallas.1} parent=119 // pred_check_branch
          %5676 = sbr.rel (%p5674) target = $region124
        $region123: #{encoder_layer_pallas.1} parent=119 // pred_region
          %s5677 = sand.u32 %s322, 1
          %s5678 = scalar_lea.sflag [#allocation4], %s5677
          %s5679 = sand.u32 %s322, 1
          %s5680 = smul.addr %s5679, 256
          %s5681 = scalar_lea.vmem [#allocation19], %s5680
          %5683 = dma.done %s5678, 4096
        $region124: #{encoder_layer_pallas.1} parent=119 // pred_fallthru
          _
      $region120: #{encoder_layer_pallas.1} parent=5 // pred_fallthru
        _
    $region6: #{encoder_layer_pallas.1} parent=1 // loop_footer
      %s34 = sadd.s32 1, %s30
    $region7: #{encoder_layer_pallas.1} parent=1 // loop_footer_branch
      %29 = sbr.rel target = $region3
    $region8: #{encoder_layer_pallas.1} parent=1 // loop_exit
      _
    %5684 = vsyncpa [#allocation3], 1
    %s5685 = scalar_lea.sflag [#allocation3], 1
    %5686 = vsyncpa %s5685, 1
    %5687 = vsyncpa [#allocation6], 1
    %5688 = vsyncpa [#allocation9], 1
    %5689 = vsyncpa [#allocation12], 1
    %5690 = vsyncpa [#allocation15], 1
    %5691 = vsyncpa [#allocation18], 1
    %5692 = vsyncpa [#allocation4], 1
    %s5693 = scalar_lea.sflag [#allocation4], 1
    %5694 = vsyncpa %s5693, 1

</llo_original>
